<compile_context>
chip_gen: v7x
topology: tpu7x:2x2x1
jax: 0.10.0
libtpu: 0.0.40
codegen_flags: <defaults>
</compile_context>

<pallas_src>
import jax
import jax.numpy as jnp
import numpy as np
from jax import lax
from jax.experimental import pallas as pl
from jax.experimental.pallas import tpu as pltpu

_LANE = 128
_LPAD = 8          # sublane-aligned left column pad inside the VMEM scratch


def _round_up(x, m):
    return (x + m - 1) // m * m


# ----------------------------------------------------------------------------
# Pallas kernel: fused (VMEM concat + 3x3 conv + BN + ReLU) x2 on one
# (batch, row-tile) block.  Each 3x3 conv = 3 im2col MXU matmuls (K = 3*C).
# ----------------------------------------------------------------------------
def _up_double_conv_kernel(
        # skip connection x2 (full res): main rows + clamped 2-row halos
        x2m_ref, x2t_ref, x2b_ref,
        # upsampled x1 (full res): main rows + clamped 2-row halos
        x1m_ref, x1t_ref, x1b_ref,
        # conv1 weights (scale-folded, concat layout), shift1, conv2 weights, shift2
        w1_ref, b1_ref, w2_ref, b2_ref,
        # output row tile (bf16, lane-dense)
        o_ref,
        # VMEM scratch: padded concat input tile, padded conv1 activations
        xpad_ref, mid_ref):
    L = _LPAD
    TH, W, Coutp = o_ref.shape[1], o_ref.shape[2], o_ref.shape[3]
    C2p = x2m_ref.shape[3]
    C1p = x1m_ref.shape[3]
    Cinp = C2p + C1p
    Cmidp = mid_ref.shape[2]
    WP = xpad_ref.shape[1]          # L + W + L
    R1 = TH + 2                     # conv1 rows computed per tile (1-row halo)

    h = pl.program_id(1)
    last = pl.num_programs(1) - 1

    # ---- assemble concat([x2, up(x1)]) with its 3x3 halo in one VMEM tile ----
    # xpad row i <-> image row (h*TH - 2 + i); column (L + w) <-> image column w.
    # Only columns [L-1, L+W] are ever read; zero the two padding columns.
    zcol = jnp.zeros((TH + 4, 1, Cinp), xpad_ref.dtype)
    xpad_ref[:, L - 1:L, :] = zcol
    xpad_ref[:, L + W:L + W + 1, :] = zcol

    # main rows (lane-aligned channel slabs: C2p, C1p are multiples of 128)
    xpad_ref[2:TH + 2, L:L + W, 0:C2p] = x2m_ref[0]
    xpad_ref[2:TH + 2, L:L + W, C2p:Cinp] = x1m_ref[0]

    # row halos: halo BlockSpecs are clamped at the image edges, so the
    # first/last tile zero-masks them (= the conv's zero padding).
    t2, t1 = x2t_ref[0], x1t_ref[0]
    xpad_ref[0:2, L:L + W, 0:C2p] = jnp.where(h > 0, t2, jnp.zeros_like(t2))
    xpad_ref[0:2, L:L + W, C2p:Cinp] = jnp.where(h > 0, t1, jnp.zeros_like(t1))
    e2, e1 = x2b_ref[0], x1b_ref[0]
    xpad_ref[TH + 2:TH + 4, L:L + W, 0:C2p] = jnp.where(
        h < last, e2, jnp.zeros_like(e2))
    xpad_ref[TH + 2:TH + 4, L:L + W, C2p:Cinp] = jnp.where(
        h < last, e1, jnp.zeros_like(e1))

    def conv3x3(src_ref, w_ref, rows_out, cin, cout):
        # im2col over kx: one K = 3*cin matmul per ky (3 MXU pushes total).
        src = src_ref[...]                                   # (rows_out+2, WP, cin)
        acc = jnp.zeros((rows_out * W, cout), jnp.float32)
        for ky in range(3):
            rows = src[ky:ky + rows_out]                     # (rows_out, WP, cin)
            patch = jnp.concatenate(
                [rows[:, L - 1:L - 1 + W, :],
                 rows[:, L:L + W, :],
                 rows[:, L + 1:L + 1 + W, :]], axis=-1)      # (rows_out, W, 3*cin)
            acc = acc + jnp.dot(patch.reshape(rows_out * W, 3 * cin), w_ref[ky],
                                preferred_element_type=jnp.float32)
        return acc

    # ---- conv1 (BN1 scale folded into weights) + shift + ReLU, over TH+2 rows ----
    acc1 = conv3x3(xpad_ref, w1_ref, R1, Cinp, Cmidp)
    y1 = jnp.maximum(acc1 + b1_ref[...], 0.0)

    # Stage conv1 activations for conv2: bf16, lane-dense, sublane-aligned store.
    mid_ref[:, L:L + W, :] = y1.reshape(R1, W, Cmidp).astype(mid_ref.dtype)
    zc = jnp.zeros((R1, 1, Cmidp), mid_ref.dtype)
    mid_ref[:, L - 1:L, :] = zc
    mid_ref[:, L + W:L + W + 1, :] = zc

    @pl.when(h == 0)
    def _():  # conv1 row "-1" is conv2's zero padding at the image top
        mid_ref[0:1, :, :] = jnp.zeros((1, WP, Cmidp), mid_ref.dtype)

    @pl.when(h == last)
    def _():  # conv1 row "H" is conv2's zero padding at the image bottom
        mid_ref[R1 - 1:R1, :, :] = jnp.zeros((1, WP, Cmidp), mid_ref.dtype)

    # ---- conv2 (BN2 scale folded) + shift + ReLU -> lane-dense bf16 output ----
    acc2 = conv3x3(mid_ref, w2_ref, TH, Cmidp, Coutp)
    y2 = jnp.maximum(acc2 + b2_ref[...], 0.0)
    o_ref[0] = y2.reshape(TH, W, Coutp).astype(o_ref.dtype)


# ----------------------------------------------------------------------------
# Generation-aware VMEM budgeting and row-tile selection.
# ----------------------------------------------------------------------------
def _vmem_budget_bytes():
    cap = None
    try:
        cap = int(pltpu.get_tpu_info().vmem_capacity_bytes)
    except Exception:
        cap = None
    if not cap or cap <= 0:
        cap = 64 * 1024 * 1024            # conservative: v7x per-TC VMEM
    limit = min((cap * 3) // 4, 112 * 1024 * 1024)   # v5e/v6e ~96 MiB, v7x 48 MiB
    budget = (limit * 2) // 3                        # row-tile working-set budget
    return int(limit), int(budget)


def _vmem_estimate_bytes(th, W, c2p, c1p, cmidp, coutp):
    bf, f32 = 2, 4
    cinp = c2p + c1p
    r1 = th + 2
    wp = W + 2 * _LPAD
    io = 2 * ((th + 8) * W * cinp * bf + th * W * coutp * bf)    # dbl-buffered blocks
    wgt = 2 * (9 * cinp * cmidp + 9 * cmidp * coutp) * bf
    scratch = (th + 4) * wp * cinp * bf + r1 * wp * cmidp * bf
    temps = (r1 * wp * cinp * bf + r1 * W * 3 * cinp * bf + r1 * W * cmidp * f32
             + r1 * wp * cmidp * bf + th * W * 3 * cmidp * bf + th * W * coutp * f32)
    return io + wgt + scratch + temps


def _pick_row_tile(N, H, W, c2p, c1p, cmidp, coutp, budget_bytes):
    divisors = [t for t in range(2, H + 1, 2) if H % t == 0]
    if not divisors:
        return H
    fitting = [t for t in divisors
               if _vmem_estimate_bytes(t, W, c2p, c1p, cmidp, coutp) <= budget_bytes]
    if not fitting:
        fitting = [min(divisors)]
    # Keep enough grid steps for pipelining and for both v7x TensorCores.
    for min_steps in (4, 2, 1):
        good = [t for t in fitting if N * (H // t) >= min_steps]
        if good:
            return max(good)
    return max(fitting)


# ----------------------------------------------------------------------------
# pallas_call wrapper.
# ----------------------------------------------------------------------------
def fused_up_double_conv(x2p, x1p, w1k, b1, w2k, b2, *, row_tile=None):
    """x2p, x1p: (N, H, W, Cpad) bf16, same spatial size, channel-padded to 128
    multiples.  Returns (N, H, W, Coutp) bf16."""
    N, H, W, C2p = x2p.shape
    C1p = x1p.shape[3]
    Cmidp = w1k.shape[2]
    Coutp = w2k.shape[2]
    assert x1p.shape[:3] == (N, H, W)
    assert H % 2 == 0
    assert C2p % _LANE == 0 and C1p % _LANE == 0
    assert Cmidp % _LANE == 0 and Coutp % _LANE == 0

    vmem_limit, budget = _vmem_budget_bytes()
    if row_tile is None:
        row_tile = _pick_row_tile(N, H, W, C2p, C1p, Cmidp, Coutp, budget)
    TH = int(row_tile)
    assert TH % 2 == 0 and H % TH == 0, (H, TH)
    nH = H // TH
    hh = TH // 2        # halo blocks are 2 rows -> H//2 halo-blocks in the array

    main_map = lambda n, h: (n, h, 0, 0)
    # clamped halo block indices; clamping happens exactly when the tile is at
    # the image edge, where the kernel zero-masks the halo anyway.
    top_map = lambda n, h: (n, jnp.maximum(h * hh - 1, 0), 0, 0)
    bot_map = lambda n, h: (n, jnp.minimum(h * hh + hh, H // 2 - 1), 0, 0)
    wmap3 = lambda n, h: (0, 0, 0)
    wmap2 = lambda n, h: (0, 0)

    return pl.pallas_call(
        _up_double_conv_kernel,
        out_shape=jax.ShapeDtypeStruct((N, H, W, Coutp), jnp.bfloat16),
        grid=(N, nH),
        in_specs=[
            pl.BlockSpec((1, TH, W, C2p), main_map),
            pl.BlockSpec((1, 2, W, C2p), top_map),
            pl.BlockSpec((1, 2, W, C2p), bot_map),
            pl.BlockSpec((1, TH, W, C1p), main_map),
            pl.BlockSpec((1, 2, W, C1p), top_map),
            pl.BlockSpec((1, 2, W, C1p), bot_map),
            # weights / folded BN: constant index map -> fetched once
            pl.BlockSpec(w1k.shape, wmap3),
            pl.BlockSpec(b1.shape, wmap2),
            pl.BlockSpec(w2k.shape, wmap3),
            pl.BlockSpec(b2.shape, wmap2),
        ],
        out_specs=pl.BlockSpec((1, TH, W, Coutp), main_map),
        scratch_shapes=[
            pltpu.VMEM((TH + 4, W + 2 * _LPAD, C2p + C1p), jnp.bfloat16),
            pltpu.VMEM((TH + 2, W + 2 * _LPAD, Cmidp), jnp.bfloat16),
        ],
        compiler_params=pltpu.CompilerParams(
            dimension_semantics=("parallel", "parallel"),
            vmem_limit_bytes=int(vmem_limit)),
    )(x2p, x2p, x2p, x1p, x1p, x1p, w1k, b1, w2k, b2)


# ----------------------------------------------------------------------------
# Glue (plain JAX): bilinear 2x upsample matching F.interpolate(align_corners=
# False) in NHWC, x2 pad, weight prep, NCHW<->NHWC boundary transposes.
# ----------------------------------------------------------------------------
def upsample2x_bilinear_nhwc(x, out_dtype=None):
    N, H, W, C = x.shape

    def src(Lx):
        i = jnp.arange(2 * Lx, dtype=jnp.float32)
        s = jnp.maximum((i + 0.5) * 0.5 - 0.5, 0.0)
        i0 = jnp.floor(s).astype(jnp.int32)
        i1 = jnp.minimum(i0 + 1, Lx - 1)
        lam = s - i0.astype(jnp.float32)
        return i0, i1, lam

    h0, h1, lh = src(H)
    w0, w1, lw = src(W)
    xf = x.astype(jnp.float32)
    xh = (xf[:, h0, :, :] * (1.0 - lh)[None, :, None, None]
          + xf[:, h1, :, :] * lh[None, :, None, None])
    xw = (xh[:, :, w0, :] * (1.0 - lw)[None, None, :, None]
          + xh[:, :, w1, :] * lw[None, None, :, None])
    return xw if out_dtype is None else xw.astype(out_dtype)


def _pad_x2_like_module(x2_nhwc, H, W):
    # F.pad(x2, (diffX//2, int(diffX/2), diffY//2, int(diffY/2))) — faithfully
    # reproduces the module's swapped naming: diffX (H diff) pads W, diffY pads H.
    diffX = H - x2_nhwc.shape[1]
    diffY = W - x2_nhwc.shape[2]
    if diffX == 0 and diffY == 0:
        return x2_nhwc
    # TODO(synk): negative diffs (cropping) not handled; sizes match in UNet use.
    pad_w = (diffX // 2, int(diffX / 2))
    pad_h = (diffY // 2, int(diffY / 2))
    return jnp.pad(x2_nhwc, ((0, 0), pad_h, pad_w, (0, 0)))


def _pad_channels(x, cp):
    c = x.shape[-1]
    if c == cp:
        return x
    return jnp.pad(x, ((0, 0), (0, 0), (0, 0), (0, cp - c)))


def _prep_conv_params(params, c2, c1, dtype=jnp.bfloat16):
    w1 = params["w1_hwio"]            # (3, 3, Cin, Cmid) f32, Cin = C2 + C1
    w2 = params["w2_hwio"]            # (3, 3, Cmid, Cout) f32
    cin, cmid = w1.shape[2], w1.shape[3]
    cout = w2.shape[3]
    assert cin == c1 + c2, (cin, c1, c2)
    c2p, c1p = _round_up(c2, _LANE), _round_up(c1, _LANE)
    cmidp, coutp = _round_up(cmid, _LANE), _round_up(cout, _LANE)

    # Fold eval-mode BN scale into the conv weights (epilogue = relu(acc+shift)).
    w1 = w1 * params["s1"].reshape(1, 1, 1, cmid)
    w2 = w2 * params["s2"].reshape(1, 1, 1, cout)

    # Split conv1 input channels into the (x2, x1) slabs of the VMEM concat,
    # pad each slab to a 128-lane multiple, pad output channels, then lay out
    # as (ky, kx*Cin_pad + cin, cmid) so w_ref[ky] matches the im2col patch.
    w1a = jnp.pad(w1[:, :, :c2, :], ((0, 0), (0, 0), (0, c2p - c2), (0, cmidp - cmid)))
    w1b = jnp.pad(w1[:, :, c2:, :], ((0, 0), (0, 0), (0, c1p - c1), (0, cmidp - cmid)))
    w1cat = jnp.concatenate([w1a, w1b], axis=2)          # (3, 3, c2p+c1p, cmidp)
    w1k = w1cat.reshape(3, 3 * (c2p + c1p), cmidp).astype(dtype)

    w2p = jnp.pad(w2, ((0, 0), (0, 0), (0, cmidp - cmid), (0, coutp - cout)))
    w2k = w2p.reshape(3, 3 * cmidp, coutp).astype(dtype)

    b1 = jnp.pad(params["b1"], ((0, 0), (0, cmidp - cmid))).astype(jnp.float32)
    b2 = jnp.pad(params["b2"], ((0, 0), (0, coutp - cout))).astype(jnp.float32)
    return w1k, b1, w2k, b2, c2p, c1p


def up_forward(x1, x2, params, row_tile=None):
    """Equivalent of up.forward(x1, x2) (bilinear path). x1, x2, output: NCHW f32."""
    x1_nhwc = jnp.transpose(x1, (0, 2, 3, 1))
    x2_nhwc = jnp.transpose(x2, (0, 2, 3, 1))
    x1u = upsample2x_bilinear_nhwc(x1_nhwc, out_dtype=jnp.bfloat16)   # (N,H,W,C1)
    H, W = x1u.shape[1], x1u.shape[2]

    x2_nhwc = _pad_x2_like_module(x2_nhwc, H, W)
    assert x2_nhwc.shape[1] == H and x2_nhwc.shape[2] == W

    c2, c1 = x2_nhwc.shape[3], x1u.shape[3]
    cout = params["w2_hwio"].shape[3]
    w1k, b1, w2k, b2, c2p, c1p = _prep_conv_params(params, c2, c1)

    x2p = _pad_channels(x2_nhwc.astype(jnp.bfloat16), c2p)
    x1p = _pad_channels(x1u, c1p)

    y = fused_up_double_conv(x2p, x1p, w1k, b1, w2k, b2, row_tile=row_tile)
    y = y[..., :cout]
    return jnp.transpose(y, (0, 3, 1, 2)).astype(jnp.float32)   # back to NCHW


# ----------------------------------------------------------------------------
# Deterministic parameter construction (shapes from double_conv(in_ch, out_ch)).
# ----------------------------------------------------------------------------
def init_params(key, in_ch, out_ch):
    ks = jax.random.split(key, 12)
    eps = 1e-5

    def fold(gamma, beta, mean, var, bias):
        scale = gamma / jnp.sqrt(var + eps)
        shift = beta + scale * (bias - mean)
        return scale.reshape(1, -1), shift.reshape(1, -1)

    w1 = 0.1 * jax.random.normal(ks[0], (out_ch, in_ch, 3, 3), jnp.float32)
    bias1 = 0.05 * jax.random.normal(ks[1], (out_ch,), jnp.float32)
    g1 = 1.0 + 0.1 * jax.random.normal(ks[2], (out_ch,), jnp.float32)
    be1 = 0.05 * jax.random.normal(ks[3], (out_ch,), jnp.float32)
    m1 = 0.02 * jax.random.normal(ks[4], (out_ch,), jnp.float32)
    v1 = 1.0 + 0.1 * jnp.abs(jax.random.normal(ks[5], (out_ch,), jnp.float32))

    w2 = 0.1 * jax.random.normal(ks[6], (out_ch, out_ch, 3, 3), jnp.float32)
    bias2 = 0.05 * jax.random.normal(ks[7], (out_ch,), jnp.float32)
    g2 = 1.0 + 0.1 * jax.random.normal(ks[8], (out_ch,), jnp.float32)
    be2 = 0.05 * jax.random.normal(ks[9], (out_ch,), jnp.float32)
    m2 = 0.02 * jax.random.normal(ks[10], (out_ch,), jnp.float32)
    v2 = 1.0 + 0.1 * jnp.abs(jax.random.normal(ks[11], (out_ch,), jnp.float32))

    s1, b1 = fold(g1, be1, m1, v1, bias1)
    s2, b2 = fold(g2, be2, m2, v2, bias2)
    return dict(
        w1_hwio=jnp.transpose(w1, (2, 3, 1, 0)),   # (3,3,in_ch,out_ch)
        w2_hwio=jnp.transpose(w2, (2, 3, 1, 0)),   # (3,3,out_ch,out_ch)
        s1=s1, b1=b1, s2=s2, b2=b2,
    )


# ----------------------------------------------------------------------------
# Pure-JAX reference (lax.conv) for the correctness check (matches the kernel's
# bf16 rounding of inputs/weights/intermediate/output; accumulation in f32).
# ----------------------------------------------------------------------------
def _bf16_round(x):
    return x.astype(jnp.bfloat16).astype(jnp.float32)


def ref_forward(x1, x2, params):
    x1_nhwc = jnp.transpose(x1, (0, 2, 3, 1))
    x2_nhwc = jnp.transpose(x2, (0, 2, 3, 1))
    x1u = upsample2x_bilinear_nhwc(x1_nhwc)
    H, W = x1u.shape[1], x1u.shape[2]
    x2_nhwc = _pad_x2_like_module(x2_nhwc, H, W)
    x = jnp.concatenate([x2_nhwc, x1u], axis=-1)
    dn = ("NHWC", "HWIO", "NHWC")
    w1 = params["w1_hwio"] * params["s1"].reshape(1, 1, 1, -1)
    w2 = params["w2_hwio"] * params["s2"].reshape(1, 1, 1, -1)
    y = lax.conv_general_dilated(_bf16_round(x), _bf16_round(w1),
                                 (1, 1), "SAME", dimension_numbers=dn,
                                 precision=lax.Precision.HIGHEST)
    y = jnp.maximum(y + params["b1"], 0.0)
    y = lax.conv_general_dilated(_bf16_round(y), _bf16_round(w2),
                                 (1, 1), "SAME", dimension_numbers=dn,
                                 precision=lax.Precision.HIGHEST)
    y = jnp.maximum(y + params["b2"], 0.0)
    y = _bf16_round(y)
    return jnp.transpose(y, (0, 3, 1, 2))


if __name__ == "__main__":
    fwd = jax.jit(up_forward, static_argnames=("row_tile",))

    # Config 1: standard UNet up-stage at toy size; row_tile=4 -> 4 row tiles
    # per image, exercising the top-edge / interior / bottom-edge halo paths.
    key = jax.random.PRNGKey(0)
    N, in_ch, out_ch = 2, 8, 4
    k1, k2, kp = jax.random.split(key, 3)
    x1 = jax.random.normal(k1, (N, in_ch // 2, 8, 8), jnp.float32)
    x2 = jax.random.normal(k2, (N, in_ch // 2, 16, 16), jnp.float32)
    params = init_params(kp, in_ch, out_ch)

    y = jax.block_until_ready(fwd(x1, x2, params, row_tile=4))
    assert y.shape == (N, out_ch, 16, 16), y.shape
    y_ref = jax.block_until_ready(ref_forward(x1, x2, params))
    np.testing.assert_allclose(np.asarray(y), np.asarray(y_ref),
                               rtol=2e-2, atol=2e-2)

    # Config 2: odd channel counts; auto row-tile and the single-tile edge path.
    N2, in_ch2, out_ch2 = 1, 6, 5
    k3, k4, kq = jax.random.split(jax.random.PRNGKey(1), 3)
    x1b = jax.random.normal(k3, (N2, in_ch2 // 2, 8, 8), jnp.float32)
    x2b = jax.random.normal(k4, (N2, in_ch2 // 2, 16, 16), jnp.float32)
    params2 = init_params(kq, in_ch2, out_ch2)
    yb_ref = jax.block_until_ready(ref_forward(x1b, x2b, params2))

    yb = jax.block_until_ready(fwd(x1b, x2b, params2, row_tile=None))   # auto
    np.testing.assert_allclose(np.asarray(yb), np.asarray(yb_ref),
                               rtol=2e-2, atol=2e-2)
    yc = jax.block_until_ready(fwd(x1b, x2b, params2, row_tile=16))     # 1 tile
    np.testing.assert_allclose(np.asarray(yc), np.asarray(yb_ref),
                               rtol=2e-2, atol=2e-2)

    print("KERNEL_OK")
</pallas_src>

<mosaic_0001>
module attributes {stable_mosaic.version = 11 : i64} {
  func.func @_up_double_conv_kernel(%arg0: i32, %arg1: i32, %arg2: memref<1x4x16x128xbf16, #tpu.memory_space<vmem>>, %arg3: memref<1x2x16x128xbf16, #tpu.memory_space<vmem>>, %arg4: memref<1x2x16x128xbf16, #tpu.memory_space<vmem>>, %arg5: memref<1x4x16x128xbf16, #tpu.memory_space<vmem>>, %arg6: memref<1x2x16x128xbf16, #tpu.memory_space<vmem>>, %arg7: memref<1x2x16x128xbf16, #tpu.memory_space<vmem>>, %arg8: memref<3x768x128xbf16, #tpu.memory_space<vmem>>, %arg9: memref<1x128xf32, #tpu.memory_space<vmem>>, %arg10: memref<3x384x128xbf16, #tpu.memory_space<vmem>>, %arg11: memref<1x128xf32, #tpu.memory_space<vmem>>, %arg12: memref<1x4x16x128xbf16, #tpu.memory_space<vmem>>, %arg13: memref<8x32x256xbf16, #tpu.memory_space<vmem>>, %arg14: memref<6x32x128xbf16, #tpu.memory_space<vmem>>) attributes {dimension_semantics = [#tpu.dimension_semantics<parallel>, #tpu.dimension_semantics<parallel>], iteration_bounds = array<i64: 2, 4>, scalar_prefetch = 0 : i64, scratch_operands = 2 : i64, tpu.core_type = #tpu.core_type<tc>, window_params = [{transform_indices = @transform_0, window_bounds = array<i64: 1, 4, 16, 128>}, {transform_indices = @transform_1, window_bounds = array<i64: 1, 2, 16, 128>}, {transform_indices = @transform_2, window_bounds = array<i64: 1, 2, 16, 128>}, {transform_indices = @transform_3, window_bounds = array<i64: 1, 4, 16, 128>}, {transform_indices = @transform_4, window_bounds = array<i64: 1, 2, 16, 128>}, {transform_indices = @transform_5, window_bounds = array<i64: 1, 2, 16, 128>}, {pipeline_mode = #tpu.pipeline_mode<synchronous>, transform_indices = @transform_6, window_bounds = array<i64: 3, 768, 128>}, {pipeline_mode = #tpu.pipeline_mode<synchronous>, transform_indices = @transform_7, window_bounds = array<i64: 1, 128>}, {pipeline_mode = #tpu.pipeline_mode<synchronous>, transform_indices = @transform_8, window_bounds = array<i64: 3, 384, 128>}, {pipeline_mode = #tpu.pipeline_mode<synchronous>, transform_indices = @transform_9, window_bounds = array<i64: 1, 128>}, {transform_indices = @transform_10, window_bounds = array<i64: 1, 4, 16, 128>}]} {
    %cst = arith.constant 0.000000e+00 : bf16
    %0 = vector.broadcast %cst : bf16 to vector<8x1x256xbf16>
    %c0 = arith.constant 0 : index
    %c7 = arith.constant 7 : index
    %c0_0 = arith.constant 0 : index
    %1 = vector.load %arg13[%c0, %c7, %c0_0] : memref<8x32x256xbf16, #tpu.memory_space<vmem>>, vector<8x1x256xbf16>
    tpu.vector_store %arg13[%c0, %c7, %c0_0], %0 {strides = array<i32>} : memref<8x32x256xbf16, #tpu.memory_space<vmem>>, vector<8x1x256xbf16>,
    %c0_1 = arith.constant 0 : index
    %c24 = arith.constant 24 : index
    %c0_2 = arith.constant 0 : index
    %2 = vector.load %arg13[%c0_1, %c24, %c0_2] : memref<8x32x256xbf16, #tpu.memory_space<vmem>>, vector<8x1x256xbf16>
    tpu.vector_store %arg13[%c0_1, %c24, %c0_2], %0 {strides = array<i32>} : memref<8x32x256xbf16, #tpu.memory_space<vmem>>, vector<8x1x256xbf16>,
    %c0_3 = arith.constant 0 : index
    %c0_4 = arith.constant 0 : index
    %c0_5 = arith.constant 0 : index
    %c0_6 = arith.constant 0 : index
    %3 = vector.load %arg2[%c0_3, %c0_4, %c0_5, %c0_6] : memref<1x4x16x128xbf16, #tpu.memory_space<vmem>>, vector<1x4x16x128xbf16>
    %4 = vector.shape_cast %3 : vector<1x4x16x128xbf16> to vector<4x16x128xbf16>
    %c2 = arith.constant 2 : index
    %c8 = arith.constant 8 : index
    %c0_7 = arith.constant 0 : index
    %5 = vector.load %arg13[%c2, %c8, %c0_7] : memref<8x32x256xbf16, #tpu.memory_space<vmem>>, vector<4x16x128xbf16>
    tpu.vector_store %arg13[%c2, %c8, %c0_7], %4 {strides = array<i32>} : memref<8x32x256xbf16, #tpu.memory_space<vmem>>, vector<4x16x128xbf16>,
    %c0_8 = arith.constant 0 : index
    %c0_9 = arith.constant 0 : index
    %c0_10 = arith.constant 0 : index
    %c0_11 = arith.constant 0 : index
    %6 = vector.load %arg5[%c0_8, %c0_9, %c0_10, %c0_11] : memref<1x4x16x128xbf16, #tpu.memory_space<vmem>>, vector<1x4x16x128xbf16>
    %7 = vector.shape_cast %6 : vector<1x4x16x128xbf16> to vector<4x16x128xbf16>
    %c2_12 = arith.constant 2 : index
    %c8_13 = arith.constant 8 : index
    %c128 = arith.constant 128 : index
    %8 = vector.load %arg13[%c2_12, %c8_13, %c128] : memref<8x32x256xbf16, #tpu.memory_space<vmem>>, vector<4x16x128xbf16>
    tpu.vector_store %arg13[%c2_12, %c8_13, %c128], %7 {strides = array<i32>} : memref<8x32x256xbf16, #tpu.memory_space<vmem>>, vector<4x16x128xbf16>,
    %c0_14 = arith.constant 0 : index
    %c0_15 = arith.constant 0 : index
    %c0_16 = arith.constant 0 : index
    %c0_17 = arith.constant 0 : index
    %9 = vector.load %arg3[%c0_14, %c0_15, %c0_16, %c0_17] : memref<1x2x16x128xbf16, #tpu.memory_space<vmem>>, vector<1x2x16x128xbf16>
    %10 = vector.shape_cast %9 : vector<1x2x16x128xbf16> to vector<2x16x128xbf16>
    %c0_18 = arith.constant 0 : index
    %c0_19 = arith.constant 0 : index
    %c0_20 = arith.constant 0 : index
    %c0_21 = arith.constant 0 : index
    %11 = vector.load %arg6[%c0_18, %c0_19, %c0_20, %c0_21] : memref<1x2x16x128xbf16, #tpu.memory_space<vmem>>, vector<1x2x16x128xbf16>
    %12 = vector.shape_cast %11 : vector<1x2x16x128xbf16> to vector<2x16x128xbf16>
    %c0_i32 = arith.constant 0 : i32
    %13 = arith.cmpi sgt, %arg1, %c0_i32 : i32
    %cst_22 = arith.constant 0.000000e+00 : bf16
    %14 = vector.broadcast %cst_22 : bf16 to vector<2x16x128xbf16>
    %15 = arith.select %13, %10, %14 : vector<2x16x128xbf16>
    %c0_23 = arith.constant 0 : index
    %c8_24 = arith.constant 8 : index
    %c0_25 = arith.constant 0 : index
    %16 = vector.load %arg13[%c0_23, %c8_24, %c0_25] : memref<8x32x256xbf16, #tpu.memory_space<vmem>>, vector<2x16x128xbf16>
    tpu.vector_store %arg13[%c0_23, %c8_24, %c0_25], %15 {strides = array<i32>} : memref<8x32x256xbf16, #tpu.memory_space<vmem>>, vector<2x16x128xbf16>,
    %c0_i32_26 = arith.constant 0 : i32
    %17 = arith.cmpi sgt, %arg1, %c0_i32_26 : i32
    %cst_27 = arith.constant 0.000000e+00 : bf16
    %18 = vector.broadcast %cst_27 : bf16 to vector<2x16x128xbf16>
    %19 = arith.select %17, %12, %18 : vector<2x16x128xbf16>
    %c0_28 = arith.constant 0 : index
    %c8_29 = arith.constant 8 : index
    %c128_30 = arith.constant 128 : index
    %20 = vector.load %arg13[%c0_28, %c8_29, %c128_30] : memref<8x32x256xbf16, #tpu.memory_space<vmem>>, vector<2x16x128xbf16>
    tpu.vector_store %arg13[%c0_28, %c8_29, %c128_30], %19 {strides = array<i32>} : memref<8x32x256xbf16, #tpu.memory_space<vmem>>, vector<2x16x128xbf16>,
    %c0_31 = arith.constant 0 : index
    %c0_32 = arith.constant 0 : index
    %c0_33 = arith.constant 0 : index
    %c0_34 = arith.constant 0 : index
    %21 = vector.load %arg4[%c0_31, %c0_32, %c0_33, %c0_34] : memref<1x2x16x128xbf16, #tpu.memory_space<vmem>>, vector<1x2x16x128xbf16>
    %22 = vector.shape_cast %21 : vector<1x2x16x128xbf16> to vector<2x16x128xbf16>
    %c0_35 = arith.constant 0 : index
    %c0_36 = arith.constant 0 : index
    %c0_37 = arith.constant 0 : index
    %c0_38 = arith.constant 0 : index
    %23 = vector.load %arg7[%c0_35, %c0_36, %c0_37, %c0_38] : memref<1x2x16x128xbf16, #tpu.memory_space<vmem>>, vector<1x2x16x128xbf16>
    %24 = vector.shape_cast %23 : vector<1x2x16x128xbf16> to vector<2x16x128xbf16>
    %c3_i32 = arith.constant 3 : i32
    %25 = arith.cmpi slt, %arg1, %c3_i32 : i32
    %cst_39 = arith.constant 0.000000e+00 : bf16
    %26 = vector.broadcast %cst_39 : bf16 to vector<2x16x128xbf16>
    %27 = arith.select %25, %22, %26 : vector<2x16x128xbf16>
    %c6 = arith.constant 6 : index
    %c8_40 = arith.constant 8 : index
    %c0_41 = arith.constant 0 : index
    %28 = vector.load %arg13[%c6, %c8_40, %c0_41] : memref<8x32x256xbf16, #tpu.memory_space<vmem>>, vector<2x16x128xbf16>
    tpu.vector_store %arg13[%c6, %c8_40, %c0_41], %27 {strides = array<i32>} : memref<8x32x256xbf16, #tpu.memory_space<vmem>>, vector<2x16x128xbf16>,
    %c3_i32_42 = arith.constant 3 : i32
    %29 = arith.cmpi slt, %arg1, %c3_i32_42 : i32
    %cst_43 = arith.constant 0.000000e+00 : bf16
    %30 = vector.broadcast %cst_43 : bf16 to vector<2x16x128xbf16>
    %31 = arith.select %29, %24, %30 : vector<2x16x128xbf16>
    %c6_44 = arith.constant 6 : index
    %c8_45 = arith.constant 8 : index
    %c128_46 = arith.constant 128 : index
    %32 = vector.load %arg13[%c6_44, %c8_45, %c128_46] : memref<8x32x256xbf16, #tpu.memory_space<vmem>>, vector<2x16x128xbf16>
    tpu.vector_store %arg13[%c6_44, %c8_45, %c128_46], %31 {strides = array<i32>} : memref<8x32x256xbf16, #tpu.memory_space<vmem>>, vector<2x16x128xbf16>,
    %c0_47 = arith.constant 0 : index
    %c0_48 = arith.constant 0 : index
    %c0_49 = arith.constant 0 : index
    %33 = vector.load %arg13[%c0_47, %c0_48, %c0_49] : memref<8x32x256xbf16, #tpu.memory_space<vmem>>, vector<8x32x256xbf16>
    %cst_50 = arith.constant 0.000000e+00 : f32
    %34 = vector.broadcast %cst_50 : f32 to vector<96x128xf32>
    %35 = vector.extract_strided_slice %33 {offsets = [0, 0, 0], sizes = [6, 32, 256], strides = [1, 1, 1]} : vector<8x32x256xbf16> to vector<6x32x256xbf16>
    %36 = vector.extract_strided_slice %35 {offsets = [0, 7, 0], sizes = [6, 16, 256], strides = [1, 1, 1]} : vector<6x32x256xbf16> to vector<6x16x256xbf16>
    %37 = vector.extract_strided_slice %35 {offsets = [0, 8, 0], sizes = [6, 16, 256], strides = [1, 1, 1]} : vector<6x32x256xbf16> to vector<6x16x256xbf16>
    %38 = vector.extract_strided_slice %35 {offsets = [0, 9, 0], sizes = [6, 16, 256], strides = [1, 1, 1]} : vector<6x32x256xbf16> to vector<6x16x256xbf16>
    %39 = tpu.concatenate %36, %37, %38 in 2 : vector<6x16x256xbf16>, vector<6x16x256xbf16>, vector<6x16x256xbf16> -> vector<6x16x768xbf16>
    %40 = vector.shape_cast %39 : vector<6x16x768xbf16> to vector<96x768xbf16>
    %c0_51 = arith.constant 0 : index
    %c0_52 = arith.constant 0 : index
    %c0_53 = arith.constant 0 : index
    %41 = vector.load %arg8[%c0_51, %c0_52, %c0_53] : memref<3x768x128xbf16, #tpu.memory_space<vmem>>, vector<1x768x128xbf16>
    %42 = vector.shape_cast %41 : vector<1x768x128xbf16> to vector<768x128xbf16>
    %cst_54 = arith.constant dense<0.000000e+00> : vector<96x128xf32>
    %43 = tpu.matmul %40, %42, %cst_54 {dimension_numbers = #tpu.dot_dimension_numbers<[1], [0], [0], [1], [0, 0, 1, 1], [], []>} : vector<96x768xbf16>, vector<768x128xbf16>, vector<96x128xf32> -> vector<96x128xf32>
    %44 = arith.addf %34, %43 : vector<96x128xf32>
    %45 = vector.extract_strided_slice %33 {offsets = [1, 0, 0], sizes = [6, 32, 256], strides = [1, 1, 1]} : vector<8x32x256xbf16> to vector<6x32x256xbf16>
    %46 = vector.extract_strided_slice %45 {offsets = [0, 7, 0], sizes = [6, 16, 256], strides = [1, 1, 1]} : vector<6x32x256xbf16> to vector<6x16x256xbf16>
    %47 = vector.extract_strided_slice %45 {offsets = [0, 8, 0], sizes = [6, 16, 256], strides = [1, 1, 1]} : vector<6x32x256xbf16> to vector<6x16x256xbf16>
    %48 = vector.extract_strided_slice %45 {offsets = [0, 9, 0], sizes = [6, 16, 256], strides = [1, 1, 1]} : vector<6x32x256xbf16> to vector<6x16x256xbf16>
    %49 = tpu.concatenate %46, %47, %48 in 2 : vector<6x16x256xbf16>, vector<6x16x256xbf16>, vector<6x16x256xbf16> -> vector<6x16x768xbf16>
    %50 = vector.shape_cast %49 : vector<6x16x768xbf16> to vector<96x768xbf16>
    %c1 = arith.constant 1 : index
    %c0_55 = arith.constant 0 : index
    %c0_56 = arith.constant 0 : index
    %51 = vector.load %arg8[%c1, %c0_55, %c0_56] : memref<3x768x128xbf16, #tpu.memory_space<vmem>>, vector<1x768x128xbf16>
    %52 = vector.shape_cast %51 : vector<1x768x128xbf16> to vector<768x128xbf16>
    %cst_57 = arith.constant dense<0.000000e+00> : vector<96x128xf32>
    %53 = tpu.matmul %50, %52, %cst_57 {dimension_numbers = #tpu.dot_dimension_numbers<[1], [0], [0], [1], [0, 0, 1, 1], [], []>} : vector<96x768xbf16>, vector<768x128xbf16>, vector<96x128xf32> -> vector<96x128xf32>
    %54 = arith.addf %44, %53 : vector<96x128xf32>
    %55 = vector.extract_strided_slice %33 {offsets = [2, 0, 0], sizes = [6, 32, 256], strides = [1, 1, 1]} : vector<8x32x256xbf16> to vector<6x32x256xbf16>
    %56 = vector.extract_strided_slice %55 {offsets = [0, 7, 0], sizes = [6, 16, 256], strides = [1, 1, 1]} : vector<6x32x256xbf16> to vector<6x16x256xbf16>
    %57 = vector.extract_strided_slice %55 {offsets = [0, 8, 0], sizes = [6, 16, 256], strides = [1, 1, 1]} : vector<6x32x256xbf16> to vector<6x16x256xbf16>
    %58 = vector.extract_strided_slice %55 {offsets = [0, 9, 0], sizes = [6, 16, 256], strides = [1, 1, 1]} : vector<6x32x256xbf16> to vector<6x16x256xbf16>
    %59 = tpu.concatenate %56, %57, %58 in 2 : vector<6x16x256xbf16>, vector<6x16x256xbf16>, vector<6x16x256xbf16> -> vector<6x16x768xbf16>
    %60 = vector.shape_cast %59 : vector<6x16x768xbf16> to vector<96x768xbf16>
    %c2_58 = arith.constant 2 : index
    %c0_59 = arith.constant 0 : index
    %c0_60 = arith.constant 0 : index
    %61 = vector.load %arg8[%c2_58, %c0_59, %c0_60] : memref<3x768x128xbf16, #tpu.memory_space<vmem>>, vector<1x768x128xbf16>
    %62 = vector.shape_cast %61 : vector<1x768x128xbf16> to vector<768x128xbf16>
    %cst_61 = arith.constant dense<0.000000e+00> : vector<96x128xf32>
    %63 = tpu.matmul %60, %62, %cst_61 {dimension_numbers = #tpu.dot_dimension_numbers<[1], [0], [0], [1], [0, 0, 1, 1], [], []>} : vector<96x768xbf16>, vector<768x128xbf16>, vector<96x128xf32> -> vector<96x128xf32>
    %64 = arith.addf %54, %63 : vector<96x128xf32>
    %c0_62 = arith.constant 0 : index
    %c0_63 = arith.constant 0 : index
    %65 = vector.load %arg9[%c0_62, %c0_63] : memref<1x128xf32, #tpu.memory_space<vmem>>, vector<1x128xf32>
    %66 = vector.broadcast %65 : vector<1x128xf32> to vector<96x128xf32>
    %67 = arith.addf %64, %66 : vector<96x128xf32>
    %cst_64 = arith.constant 0.000000e+00 : f32
    %68 = vector.broadcast %cst_64 : f32 to vector<96x128xf32>
    %69 = arith.maximumf %67, %68 : vector<96x128xf32>
    %70 = vector.shape_cast %69 : vector<96x128xf32> to vector<6x16x128xf32>
    %71 = arith.truncf %70 : vector<6x16x128xf32> to vector<6x16x128xbf16>
    %c0_65 = arith.constant 0 : index
    %c8_66 = arith.constant 8 : index
    %c0_67 = arith.constant 0 : index
    %72 = vector.load %arg14[%c0_65, %c8_66, %c0_67] : memref<6x32x128xbf16, #tpu.memory_space<vmem>>, vector<6x16x128xbf16>
    tpu.vector_store %arg14[%c0_65, %c8_66, %c0_67], %71 {strides = array<i32>} : memref<6x32x128xbf16, #tpu.memory_space<vmem>>, vector<6x16x128xbf16>,
    %cst_68 = arith.constant 0.000000e+00 : bf16
    %73 = vector.broadcast %cst_68 : bf16 to vector<6x1x128xbf16>
    %c0_69 = arith.constant 0 : index
    %c7_70 = arith.constant 7 : index
    %c0_71 = arith.constant 0 : index
    %74 = vector.load %arg14[%c0_69, %c7_70, %c0_71] : memref<6x32x128xbf16, #tpu.memory_space<vmem>>, vector<6x1x128xbf16>
    tpu.vector_store %arg14[%c0_69, %c7_70, %c0_71], %73 {strides = array<i32>} : memref<6x32x128xbf16, #tpu.memory_space<vmem>>, vector<6x1x128xbf16>,
    %c0_72 = arith.constant 0 : index
    %c24_73 = arith.constant 24 : index
    %c0_74 = arith.constant 0 : index
    %75 = vector.load %arg14[%c0_72, %c24_73, %c0_74] : memref<6x32x128xbf16, #tpu.memory_space<vmem>>, vector<6x1x128xbf16>
    tpu.vector_store %arg14[%c0_72, %c24_73, %c0_74], %73 {strides = array<i32>} : memref<6x32x128xbf16, #tpu.memory_space<vmem>>, vector<6x1x128xbf16>,
    %c0_i32_75 = arith.constant 0 : i32
    %76 = arith.cmpi eq, %arg1, %c0_i32_75 : i32
    %77 = arith.extui %76 : i1 to i32
    %c0_i32_76 = arith.constant 0 : i32
    %78 = arith.cmpi ne, %77, %c0_i32_76 : i32
    scf.if %78 {
      %cst_102 = arith.constant 0.000000e+00 : bf16
      %124 = vector.broadcast %cst_102 : bf16 to vector<1x32x128xbf16>
      %c0_103 = arith.constant 0 : index
      %c0_104 = arith.constant 0 : index
      %c0_105 = arith.constant 0 : index
      %125 = vector.load %arg14[%c0_103, %c0_104, %c0_105] : memref<6x32x128xbf16, #tpu.memory_space<vmem>>, vector<1x32x128xbf16>
      tpu.vector_store %arg14[%c0_103, %c0_104, %c0_105], %124 {strides = array<i32>} : memref<6x32x128xbf16, #tpu.memory_space<vmem>>, vector<1x32x128xbf16>,
    } else {
    }
    %c3_i32_77 = arith.constant 3 : i32
    %79 = arith.cmpi eq, %arg1, %c3_i32_77 : i32
    %80 = arith.extui %79 : i1 to i32
    %c0_i32_78 = arith.constant 0 : i32
    %81 = arith.cmpi ne, %80, %c0_i32_78 : i32
    scf.if %81 {
      %cst_102 = arith.constant 0.000000e+00 : bf16
      %124 = vector.broadcast %cst_102 : bf16 to vector<1x32x128xbf16>
      %c5 = arith.constant 5 : index
      %c0_103 = arith.constant 0 : index
      %c0_104 = arith.constant 0 : index
      %125 = vector.load %arg14[%c5, %c0_103, %c0_104] : memref<6x32x128xbf16, #tpu.memory_space<vmem>>, vector<1x32x128xbf16>
      tpu.vector_store %arg14[%c5, %c0_103, %c0_104], %124 {strides = array<i32>} : memref<6x32x128xbf16, #tpu.memory_space<vmem>>, vector<1x32x128xbf16>,
    } else {
    }
    %c0_79 = arith.constant 0 : index
    %c0_80 = arith.constant 0 : index
    %c0_81 = arith.constant 0 : index
    %82 = vector.load %arg14[%c0_79, %c0_80, %c0_81] : memref<6x32x128xbf16, #tpu.memory_space<vmem>>, vector<6x32x128xbf16>
    %cst_82 = arith.constant 0.000000e+00 : f32
    %83 = vector.broadcast %cst_82 : f32 to vector<64x128xf32>
    %84 = vector.extract_strided_slice %82 {offsets = [0, 0, 0], sizes = [4, 32, 128], strides = [1, 1, 1]} : vector<6x32x128xbf16> to vector<4x32x128xbf16>
    %85 = vector.extract_strided_slice %84 {offsets = [0, 7, 0], sizes = [4, 16, 128], strides = [1, 1, 1]} : vector<4x32x128xbf16> to vector<4x16x128xbf16>
    %86 = vector.extract_strided_slice %84 {offsets = [0, 8, 0], sizes = [4, 16, 128], strides = [1, 1, 1]} : vector<4x32x128xbf16> to vector<4x16x128xbf16>
    %87 = vector.extract_strided_slice %84 {offsets = [0, 9, 0], sizes = [4, 16, 128], strides = [1, 1, 1]} : vector<4x32x128xbf16> to vector<4x16x128xbf16>
    %88 = tpu.concatenate %85, %86, %87 in 2 : vector<4x16x128xbf16>, vector<4x16x128xbf16>, vector<4x16x128xbf16> -> vector<4x16x384xbf16>
    %89 = vector.shape_cast %88 : vector<4x16x384xbf16> to vector<64x384xbf16>
    %c0_83 = arith.constant 0 : index
    %c0_84 = arith.constant 0 : index
    %c0_85 = arith.constant 0 : index
    %90 = vector.load %arg10[%c0_83, %c0_84, %c0_85] : memref<3x384x128xbf16, #tpu.memory_space<vmem>>, vector<1x384x128xbf16>
    %91 = vector.shape_cast %90 : vector<1x384x128xbf16> to vector<384x128xbf16>
    %cst_86 = arith.constant dense<0.000000e+00> : vector<64x128xf32>
    %92 = tpu.matmul %89, %91, %cst_86 {dimension_numbers = #tpu.dot_dimension_numbers<[1], [0], [0], [1], [0, 0, 1, 1], [], []>} : vector<64x384xbf16>, vector<384x128xbf16>, vector<64x128xf32> -> vector<64x128xf32>
    %93 = arith.addf %83, %92 : vector<64x128xf32>
    %94 = vector.extract_strided_slice %82 {offsets = [1, 0, 0], sizes = [4, 32, 128], strides = [1, 1, 1]} : vector<6x32x128xbf16> to vector<4x32x128xbf16>
    %95 = vector.extract_strided_slice %94 {offsets = [0, 7, 0], sizes = [4, 16, 128], strides = [1, 1, 1]} : vector<4x32x128xbf16> to vector<4x16x128xbf16>
    %96 = vector.extract_strided_slice %94 {offsets = [0, 8, 0], sizes = [4, 16, 128], strides = [1, 1, 1]} : vector<4x32x128xbf16> to vector<4x16x128xbf16>
    %97 = vector.extract_strided_slice %94 {offsets = [0, 9, 0], sizes = [4, 16, 128], strides = [1, 1, 1]} : vector<4x32x128xbf16> to vector<4x16x128xbf16>
    %98 = tpu.concatenate %95, %96, %97 in 2 : vector<4x16x128xbf16>, vector<4x16x128xbf16>, vector<4x16x128xbf16> -> vector<4x16x384xbf16>
    %99 = vector.shape_cast %98 : vector<4x16x384xbf16> to vector<64x384xbf16>
    %c1_87 = arith.constant 1 : index
    %c0_88 = arith.constant 0 : index
    %c0_89 = arith.constant 0 : index
    %100 = vector.load %arg10[%c1_87, %c0_88, %c0_89] : memref<3x384x128xbf16, #tpu.memory_space<vmem>>, vector<1x384x128xbf16>
    %101 = vector.shape_cast %100 : vector<1x384x128xbf16> to vector<384x128xbf16>
    %cst_90 = arith.constant dense<0.000000e+00> : vector<64x128xf32>
    %102 = tpu.matmul %99, %101, %cst_90 {dimension_numbers = #tpu.dot_dimension_numbers<[1], [0], [0], [1], [0, 0, 1, 1], [], []>} : vector<64x384xbf16>, vector<384x128xbf16>, vector<64x128xf32> -> vector<64x128xf32>
    %103 = arith.addf %93, %102 : vector<64x128xf32>
    %104 = vector.extract_strided_slice %82 {offsets = [2, 0, 0], sizes = [4, 32, 128], strides = [1, 1, 1]} : vector<6x32x128xbf16> to vector<4x32x128xbf16>
    %105 = vector.extract_strided_slice %104 {offsets = [0, 7, 0], sizes = [4, 16, 128], strides = [1, 1, 1]} : vector<4x32x128xbf16> to vector<4x16x128xbf16>
    %106 = vector.extract_strided_slice %104 {offsets = [0, 8, 0], sizes = [4, 16, 128], strides = [1, 1, 1]} : vector<4x32x128xbf16> to vector<4x16x128xbf16>
    %107 = vector.extract_strided_slice %104 {offsets = [0, 9, 0], sizes = [4, 16, 128], strides = [1, 1, 1]} : vector<4x32x128xbf16> to vector<4x16x128xbf16>
    %108 = tpu.concatenate %105, %106, %107 in 2 : vector<4x16x128xbf16>, vector<4x16x128xbf16>, vector<4x16x128xbf16> -> vector<4x16x384xbf16>
    %109 = vector.shape_cast %108 : vector<4x16x384xbf16> to vector<64x384xbf16>
    %c2_91 = arith.constant 2 : index
    %c0_92 = arith.constant 0 : index
    %c0_93 = arith.constant 0 : index
    %110 = vector.load %arg10[%c2_91, %c0_92, %c0_93] : memref<3x384x128xbf16, #tpu.memory_space<vmem>>, vector<1x384x128xbf16>
    %111 = vector.shape_cast %110 : vector<1x384x128xbf16> to vector<384x128xbf16>
    %cst_94 = arith.constant dense<0.000000e+00> : vector<64x128xf32>
    %112 = tpu.matmul %109, %111, %cst_94 {dimension_numbers = #tpu.dot_dimension_numbers<[1], [0], [0], [1], [0, 0, 1, 1], [], []>} : vector<64x384xbf16>, vector<384x128xbf16>, vector<64x128xf32> -> vector<64x128xf32>
    %113 = arith.addf %103, %112 : vector<64x128xf32>
    %c0_95 = arith.constant 0 : index
    %c0_96 = arith.constant 0 : index
    %114 = vector.load %arg11[%c0_95, %c0_96] : memref<1x128xf32, #tpu.memory_space<vmem>>, vector<1x128xf32>
    %115 = vector.broadcast %114 : vector<1x128xf32> to vector<64x128xf32>
    %116 = arith.addf %113, %115 : vector<64x128xf32>
    %cst_97 = arith.constant 0.000000e+00 : f32
    %117 = vector.broadcast %cst_97 : f32 to vector<64x128xf32>
    %118 = arith.maximumf %116, %117 : vector<64x128xf32>
    %119 = vector.shape_cast %118 : vector<64x128xf32> to vector<4x16x128xf32>
    %120 = arith.truncf %119 : vector<4x16x128xf32> to vector<4x16x128xbf16>
    %c0_98 = arith.constant 0 : index
    %c0_99 = arith.constant 0 : index
    %c0_100 = arith.constant 0 : index
    %c0_101 = arith.constant 0 : index
    %121 = vector.load %arg12[%c0_98, %c0_99, %c0_100, %c0_101] : memref<1x4x16x128xbf16, #tpu.memory_space<vmem>>, vector<1x4x16x128xbf16>
    %122 = vector.shape_cast %121 : vector<1x4x16x128xbf16> to vector<4x16x128xbf16>
    %123 = vector.shape_cast %120 : vector<4x16x128xbf16> to vector<1x4x16x128xbf16>
    tpu.vector_store %arg12[%c0_98, %c0_99, %c0_100, %c0_101], %123 {strides = array<i32>} : memref<1x4x16x128xbf16, #tpu.memory_space<vmem>>, vector<1x4x16x128xbf16>,
    return
  }
  func.func @transform_0(%arg0: i32, %arg1: i32) -> (i32, i32, i32, i32) {
    %c0_i32 = arith.constant 0 : i32
    %c0_i32_0 = arith.constant 0 : i32
    %c0_i32_1 = arith.constant 0 : i32
    return %arg0, %arg1, %c0_i32, %c0_i32_0 : i32, i32, i32, i32
  }
  func.func @transform_1(%arg0: i32, %arg1: i32) -> (i32, i32, i32, i32) {
    %c2_i32 = arith.constant 2 : i32
    %0 = arith.muli %arg1, %c2_i32 : i32
    %c1_i32 = arith.constant 1 : i32
    %1 = arith.subi %0, %c1_i32 : i32
    %c0_i32 = arith.constant 0 : i32
    %2 = arith.maxsi %1, %c0_i32 : i32
    %c0_i32_0 = arith.constant 0 : i32
    %c0_i32_1 = arith.constant 0 : i32
    %c0_i32_2 = arith.constant 0 : i32
    return %arg0, %2, %c0_i32_0, %c0_i32_1 : i32, i32, i32, i32
  }
  func.func @transform_2(%arg0: i32, %arg1: i32) -> (i32, i32, i32, i32) {
    %c2_i32 = arith.constant 2 : i32
    %0 = arith.muli %arg1, %c2_i32 : i32
    %c2_i32_0 = arith.constant 2 : i32
    %1 = arith.addi %0, %c2_i32_0 : i32
    %c7_i32 = arith.constant 7 : i32
    %2 = arith.minsi %1, %c7_i32 : i32
    %c0_i32 = arith.constant 0 : i32
    %c0_i32_1 = arith.constant 0 : i32
    %c0_i32_2 = arith.constant 0 : i32
    return %arg0, %2, %c0_i32, %c0_i32_1 : i32, i32, i32, i32
  }
  func.func @transform_3(%arg0: i32, %arg1: i32) -> (i32, i32, i32, i32) {
    %c0_i32 = arith.constant 0 : i32
    %c0_i32_0 = arith.constant 0 : i32
    %c0_i32_1 = arith.constant 0 : i32
    return %arg0, %arg1, %c0_i32, %c0_i32_0 : i32, i32, i32, i32
  }
  func.func @transform_4(%arg0: i32, %arg1: i32) -> (i32, i32, i32, i32) {
    %c2_i32 = arith.constant 2 : i32
    %0 = arith.muli %arg1, %c2_i32 : i32
    %c1_i32 = arith.constant 1 : i32
    %1 = arith.subi %0, %c1_i32 : i32
    %c0_i32 = arith.constant 0 : i32
    %2 = arith.maxsi %1, %c0_i32 : i32
    %c0_i32_0 = arith.constant 0 : i32
    %c0_i32_1 = arith.constant 0 : i32
    %c0_i32_2 = arith.constant 0 : i32
    return %arg0, %2, %c0_i32_0, %c0_i32_1 : i32, i32, i32, i32
  }
  func.func @transform_5(%arg0: i32, %arg1: i32) -> (i32, i32, i32, i32) {
    %c2_i32 = arith.constant 2 : i32
    %0 = arith.muli %arg1, %c2_i32 : i32
    %c2_i32_0 = arith.constant 2 : i32
    %1 = arith.addi %0, %c2_i32_0 : i32
    %c7_i32 = arith.constant 7 : i32
    %2 = arith.minsi %1, %c7_i32 : i32
    %c0_i32 = arith.constant 0 : i32
    %c0_i32_1 = arith.constant 0 : i32
    %c0_i32_2 = arith.constant 0 : i32
    return %arg0, %2, %c0_i32, %c0_i32_1 : i32, i32, i32, i32
  }
  func.func @transform_6(%arg0: i32, %arg1: i32) -> (i32, i32, i32) {
    %c0_i32 = arith.constant 0 : i32
    %c0_i32_0 = arith.constant 0 : i32
    %c0_i32_1 = arith.constant 0 : i32
    %c0_i32_2 = arith.constant 0 : i32
    return %c0_i32, %c0_i32_0, %c0_i32_1 : i32, i32, i32
  }
  func.func @transform_7(%arg0: i32, %arg1: i32) -> (i32, i32) {
    %c0_i32 = arith.constant 0 : i32
    %c0_i32_0 = arith.constant 0 : i32
    %c0_i32_1 = arith.constant 0 : i32
    return %c0_i32, %c0_i32_0 : i32, i32
  }
  func.func @transform_8(%arg0: i32, %arg1: i32) -> (i32, i32, i32) {
    %c0_i32 = arith.constant 0 : i32
    %c0_i32_0 = arith.constant 0 : i32
    %c0_i32_1 = arith.constant 0 : i32
    %c0_i32_2 = arith.constant 0 : i32
    return %c0_i32, %c0_i32_0, %c0_i32_1 : i32, i32, i32
  }
  func.func @transform_9(%arg0: i32, %arg1: i32) -> (i32, i32) {
    %c0_i32 = arith.constant 0 : i32
    %c0_i32_0 = arith.constant 0 : i32
    %c0_i32_1 = arith.constant 0 : i32
    return %c0_i32, %c0_i32_0 : i32, i32
  }
  func.func @transform_10(%arg0: i32, %arg1: i32) -> (i32, i32, i32, i32) {
    %c0_i32 = arith.constant 0 : i32
    %c0_i32_0 = arith.constant 0 : i32
    %c0_i32_1 = arith.constant 0 : i32
    return %arg0, %arg1, %c0_i32, %c0_i32_0 : i32, i32, i32, i32
  }
}

</mosaic_0001>

<llo_original>
// kernel: up_forward.1
$region0: #{up_forward.1}
  #allocation0 [shape = 'u32[]', space=smem, size = 0x4, offset = 0x4, fixed_abs, tag = 'smem constant byte address 0x4 - core index']
  #allocation1 [shape = 'u32[144,128]{1,0:T(1,128)}', space=vmem, size = 0x12000, scoped, tag = 'internal scratch']
  #allocation2 [shape = 'bf16[8,32,256]{2,1,0:T(16,128)(2,1)}', space=vmem, size = 0x20000, scoped, tag = 'scratch operand']
  #allocation3 [shape = 'bf16[6,32,128]{2,1,0:T(16,128)(2,1)}', space=vmem, size = 0xc000, scoped, tag = 'scratch operand']
  %s0 = inlined_call_operand.vmem [shape: bf16[2,16,16,128], index: 0, kind: input, shape index: {}, may-alias: {0,1,2}]
  %s1 = inlined_call_operand.vmem [shape: bf16[2,16,16,128], index: 1, kind: input, shape index: {}, may-alias: {0,1,2}]
  %s2 = inlined_call_operand.vmem [shape: bf16[2,16,16,128], index: 2, kind: input, shape index: {}, may-alias: {0,1,2}]
  %s3 = inlined_call_operand.vmem [shape: bf16[2,16,16,128], index: 3, kind: input, shape index: {}, may-alias: {3,4,5}]
  %s4 = inlined_call_operand.vmem [shape: bf16[2,16,16,128], index: 4, kind: input, shape index: {}, may-alias: {3,4,5}]
  %s5 = inlined_call_operand.vmem [shape: bf16[2,16,16,128], index: 5, kind: input, shape index: {}, may-alias: {3,4,5}]
  %s6 = inlined_call_operand.vmem [shape: bf16[3,768,128], index: 6, kind: input, shape index: {}]
  %s7 = inlined_call_operand.vmem [shape: f32[1,128], index: 7, kind: input, shape index: {}]
  %s8 = inlined_call_operand.vmem [shape: bf16[3,384,128], index: 8, kind: input, shape index: {}]
  %s9 = inlined_call_operand.vmem [shape: f32[1,128], index: 9, kind: input, shape index: {}]
  %s10 = inlined_call_operand.vmem [shape: bf16[2,16,16,128], index: 10, kind: output, shape index: {}]
  %s11 = sld [smem:[#allocation0]]
  $region81: #{up_forward.1} parent=0
    _
  %s13 = ssub.s32 1, %s11
  %s14 = scalar_select 0, %s13, %s11
  loop: start=0, step=1, limit=10
  $region2: #{up_forward.1} parent=0 // loop_pre_header
    _
  $region3: #{up_forward.1} parent=0 // loop_header
    %s16 = sphi 0, %s20
    %p17 = scmp.ge.s32.totalorder %s16, 10
    %s23 = sphi 0, %s35
    %s24 = sphi 0, %s31
    %s25 = sphi 0, %s23
    %s26 = sphi 0, %s24
    %s27 = sphi 0, %s25
    %s28 = sphi 0, %s26
    %s40 = sphi 0, %s42
    %s43 = sphi 0, %s40
    %s44 = sphi 0, %s43
    %s60 = sphi 0, %s44
    %s76 = sphi 0, %s78
    %s79 = sphi 0, %s76
    %s80 = sphi 0, %s79
    %s96 = sphi 0, %s80
    %s112 = sphi 0, %s114
    %s115 = sphi 0, %s112
    %s116 = sphi 0, %s115
    %s132 = sphi 0, %s116
    %s140 = sphi 0, %s142
    %s143 = sphi 0, %s140
    %s144 = sphi 0, %s143
    %s160 = sphi 0, %s144
    %s176 = sphi 0, %s178
    %s179 = sphi 0, %s176
    %s180 = sphi 0, %s179
    %s196 = sphi 0, %s180
    %s212 = sphi 0, %s214
    %s215 = sphi 0, %s212
    %s216 = sphi 0, %s215
    %s232 = sphi 0, %s216
    %s236 = sphi 0, %s236
    %s238 = sphi 0, %s236
    %s239 = sphi 0, %s238
    %s253 = sphi 0, %s239
    %s257 = sphi 0, %s257
    %s259 = sphi 0, %s257
    %s260 = sphi 0, %s259
    %s274 = sphi 0, %s260
    %s278 = sphi 0, %s278
    %s280 = sphi 0, %s278
    %s281 = sphi 0, %s280
    %s295 = sphi 0, %s281
    %s299 = sphi 0, %s299
    %s301 = sphi 0, %s299
    %s302 = sphi 0, %s301
    %s316 = sphi 0, %s302
    %s324 = sphi 0, %s326
    %s327 = sphi 0, %s324
    %s328 = sphi 0, %s327
    %s344 = sphi 0, %s328
  $region4: #{up_forward.1} parent=0 // loop_header_branch
    %19 = sbr.rel (%p17) target = $region8
  $region5: #{up_forward.1} parent=0 // loop_body
    %s21 = ssub.s32 %s16, 1
    %s22 = ssub.s32 %s16, 2
    %s29 = sadd.s32 1, %s24
    %p30 = scmp.ge.s32.totalorder %s29, 4
    %s31 = scalar_select %p30, 0, %s29
    %s32 = sadd.s32 1, %s23
    %s33 = scalar_select %p30, %s32, %s23
    %p34 = scmp.ge.s32.totalorder %s33, 2
    %s35 = scalar_select %p34, 0, %s33
    %s36 = ssub.s32 %s23, %s35
    %s37 = ssub.s32 %s24, %s31
    %s38 = sor.u32 %s36, %s37
    %p39 = scmp.eq.s32.totalorder %s38, 0
    %s41 = sadd.s32 %s40, 1
    %s42 = scalar_select %p39, %s40, %s41
    %p45 = pneg %p39
    %p46 = scmp.eq.s32.totalorder %s16, 7
    %p47 = por %p45, %p46
    %p48 = scmp.ne.s32.totalorder %s40, %s43
    %p49 = scmp.eq.s32.totalorder %s16, 0
    %p50 = por %p48, %p49
    %p51 = scmp.ne.s32.totalorder %s40, %s43
    %p52 = scmp.eq.s32.totalorder %s21, 7
    %p53 = por %p51, %p52
    %p54 = scmp.ne.s32.totalorder %s43, %s44
    %p55 = scmp.eq.s32.totalorder %s21, 0
    %p56 = por %p54, %p55
    %p57 = scmp.ne.s32.totalorder %s43, %s44
    %p58 = scmp.eq.s32.totalorder %s22, 7
    %p59 = por %p57, %p58
    %p61 = scmp.ne.s32.totalorder %s44, %s60
    %p62 = scmp.eq.s32.totalorder %s22, 0
    %p63 = por %p61, %p62
    %s64 = smul.u32 %s24, 2
    %s65 = ssub.s32 %s64, 1
    %p66 = scmp.gt.s32.totalorder %s65, 0
    %s67 = scalar_select %p66, %s65, 0
    %s68 = smul.u32 %s31, 2
    %s69 = ssub.s32 %s68, 1
    %p70 = scmp.gt.s32.totalorder %s69, 0
    %s71 = scalar_select %p70, %s69, 0
    %s72 = ssub.s32 %s23, %s35
    %s73 = ssub.s32 %s67, %s71
    %s74 = sor.u32 %s72, %s73
    %p75 = scmp.eq.s32.totalorder %s74, 0
    %s77 = sadd.s32 %s76, 1
    %s78 = scalar_select %p75, %s76, %s77
    %p81 = pneg %p75
    %p82 = scmp.eq.s32.totalorder %s16, 7
    %p83 = por %p81, %p82
    %p84 = scmp.ne.s32.totalorder %s76, %s79
    %p85 = scmp.eq.s32.totalorder %s16, 0
    %p86 = por %p84, %p85
    %p87 = scmp.ne.s32.totalorder %s76, %s79
    %p88 = scmp.eq.s32.totalorder %s21, 7
    %p89 = por %p87, %p88
    %p90 = scmp.ne.s32.totalorder %s79, %s80
    %p91 = scmp.eq.s32.totalorder %s21, 0
    %p92 = por %p90, %p91
    %p93 = scmp.ne.s32.totalorder %s79, %s80
    %p94 = scmp.eq.s32.totalorder %s22, 7
    %p95 = por %p93, %p94
    %p97 = scmp.ne.s32.totalorder %s80, %s96
    %p98 = scmp.eq.s32.totalorder %s22, 0
    %p99 = por %p97, %p98
    %s100 = smul.u32 %s24, 2
    %s101 = sadd.s32 %s100, 2
    %p102 = scmp.lt.s32.totalorder %s101, 7
    %s103 = scalar_select %p102, %s101, 7
    %s104 = smul.u32 %s31, 2
    %s105 = sadd.s32 %s104, 2
    %p106 = scmp.lt.s32.totalorder %s105, 7
    %s107 = scalar_select %p106, %s105, 7
    %s108 = ssub.s32 %s23, %s35
    %s109 = ssub.s32 %s103, %s107
    %s110 = sor.u32 %s108, %s109
    %p111 = scmp.eq.s32.totalorder %s110, 0
    %s113 = sadd.s32 %s112, 1
    %s114 = scalar_select %p111, %s112, %s113
    %p117 = pneg %p111
    %p118 = scmp.eq.s32.totalorder %s16, 7
    %p119 = por %p117, %p118
    %p120 = scmp.ne.s32.totalorder %s112, %s115
    %p121 = scmp.eq.s32.totalorder %s16, 0
    %p122 = por %p120, %p121
    %p123 = scmp.ne.s32.totalorder %s112, %s115
    %p124 = scmp.eq.s32.totalorder %s21, 7
    %p125 = por %p123, %p124
    %p126 = scmp.ne.s32.totalorder %s115, %s116
    %p127 = scmp.eq.s32.totalorder %s21, 0
    %p128 = por %p126, %p127
    %p129 = scmp.ne.s32.totalorder %s115, %s116
    %p130 = scmp.eq.s32.totalorder %s22, 7
    %p131 = por %p129, %p130
    %p133 = scmp.ne.s32.totalorder %s116, %s132
    %p134 = scmp.eq.s32.totalorder %s22, 0
    %p135 = por %p133, %p134
    %s136 = ssub.s32 %s23, %s35
    %s137 = ssub.s32 %s24, %s31
    %s138 = sor.u32 %s136, %s137
    %p139 = scmp.eq.s32.totalorder %s138, 0
    %s141 = sadd.s32 %s140, 1
    %s142 = scalar_select %p139, %s140, %s141
    %p145 = pneg %p139
    %p146 = scmp.eq.s32.totalorder %s16, 7
    %p147 = por %p145, %p146
    %p148 = scmp.ne.s32.totalorder %s140, %s143
    %p149 = scmp.eq.s32.totalorder %s16, 0
    %p150 = por %p148, %p149
    %p151 = scmp.ne.s32.totalorder %s140, %s143
    %p152 = scmp.eq.s32.totalorder %s21, 7
    %p153 = por %p151, %p152
    %p154 = scmp.ne.s32.totalorder %s143, %s144
    %p155 = scmp.eq.s32.totalorder %s21, 0
    %p156 = por %p154, %p155
    %p157 = scmp.ne.s32.totalorder %s143, %s144
    %p158 = scmp.eq.s32.totalorder %s22, 7
    %p159 = por %p157, %p158
    %p161 = scmp.ne.s32.totalorder %s144, %s160
    %p162 = scmp.eq.s32.totalorder %s22, 0
    %p163 = por %p161, %p162
    %s164 = smul.u32 %s24, 2
    %s165 = ssub.s32 %s164, 1
    %p166 = scmp.gt.s32.totalorder %s165, 0
    %s167 = scalar_select %p166, %s165, 0
    %s168 = smul.u32 %s31, 2
    %s169 = ssub.s32 %s168, 1
    %p170 = scmp.gt.s32.totalorder %s169, 0
    %s171 = scalar_select %p170, %s169, 0
    %s172 = ssub.s32 %s23, %s35
    %s173 = ssub.s32 %s167, %s171
    %s174 = sor.u32 %s172, %s173
    %p175 = scmp.eq.s32.totalorder %s174, 0
    %s177 = sadd.s32 %s176, 1
    %s178 = scalar_select %p175, %s176, %s177
    %p181 = pneg %p175
    %p182 = scmp.eq.s32.totalorder %s16, 7
    %p183 = por %p181, %p182
    %p184 = scmp.ne.s32.totalorder %s176, %s179
    %p185 = scmp.eq.s32.totalorder %s16, 0
    %p186 = por %p184, %p185
    %p187 = scmp.ne.s32.totalorder %s176, %s179
    %p188 = scmp.eq.s32.totalorder %s21, 7
    %p189 = por %p187, %p188
    %p190 = scmp.ne.s32.totalorder %s179, %s180
    %p191 = scmp.eq.s32.totalorder %s21, 0
    %p192 = por %p190, %p191
    %p193 = scmp.ne.s32.totalorder %s179, %s180
    %p194 = scmp.eq.s32.totalorder %s22, 7
    %p195 = por %p193, %p194
    %p197 = scmp.ne.s32.totalorder %s180, %s196
    %p198 = scmp.eq.s32.totalorder %s22, 0
    %p199 = por %p197, %p198
    %s200 = smul.u32 %s24, 2
    %s201 = sadd.s32 %s200, 2
    %p202 = scmp.lt.s32.totalorder %s201, 7
    %s203 = scalar_select %p202, %s201, 7
    %s204 = smul.u32 %s31, 2
    %s205 = sadd.s32 %s204, 2
    %p206 = scmp.lt.s32.totalorder %s205, 7
    %s207 = scalar_select %p206, %s205, 7
    %s208 = ssub.s32 %s23, %s35
    %s209 = ssub.s32 %s203, %s207
    %s210 = sor.u32 %s208, %s209
    %p211 = scmp.eq.s32.totalorder %s210, 0
    %s213 = sadd.s32 %s212, 1
    %s214 = scalar_select %p211, %s212, %s213
    %p217 = pneg %p211
    %p218 = scmp.eq.s32.totalorder %s16, 7
    %p219 = por %p217, %p218
    %p220 = scmp.ne.s32.totalorder %s212, %s215
    %p221 = scmp.eq.s32.totalorder %s16, 0
    %p222 = por %p220, %p221
    %p223 = scmp.ne.s32.totalorder %s212, %s215
    %p224 = scmp.eq.s32.totalorder %s21, 7
    %p225 = por %p223, %p224
    %p226 = scmp.ne.s32.totalorder %s215, %s216
    %p227 = scmp.eq.s32.totalorder %s21, 0
    %p228 = por %p226, %p227
    %p229 = scmp.ne.s32.totalorder %s215, %s216
    %p230 = scmp.eq.s32.totalorder %s22, 7
    %p231 = por %p229, %p230
    %p233 = scmp.ne.s32.totalorder %s216, %s232
    %p234 = scmp.eq.s32.totalorder %s22, 0
    %p235 = por %p233, %p234
    %s237 = sadd.s32 %s236, 1
    %p240 = scmp.eq.s32.totalorder %s16, 7
    %p241 = scmp.ne.s32.totalorder %s236, %s238
    %p242 = scmp.eq.s32.totalorder %s16, 0
    %p243 = por %p241, %p242
    %p244 = scmp.ne.s32.totalorder %s236, %s238
    %p245 = scmp.eq.s32.totalorder %s21, 7
    %p246 = por %p244, %p245
    %p247 = scmp.ne.s32.totalorder %s238, %s239
    %p248 = scmp.eq.s32.totalorder %s21, 0
    %p249 = por %p247, %p248
    %p250 = scmp.ne.s32.totalorder %s238, %s239
    %p251 = scmp.eq.s32.totalorder %s22, 7
    %p252 = por %p250, %p251
    %p254 = scmp.ne.s32.totalorder %s239, %s253
    %p255 = scmp.eq.s32.totalorder %s22, 0
    %p256 = por %p254, %p255
    %s258 = sadd.s32 %s257, 1
    %p261 = scmp.eq.s32.totalorder %s16, 7
    %p262 = scmp.ne.s32.totalorder %s257, %s259
    %p263 = scmp.eq.s32.totalorder %s16, 0
    %p264 = por %p262, %p263
    %p265 = scmp.ne.s32.totalorder %s257, %s259
    %p266 = scmp.eq.s32.totalorder %s21, 7
    %p267 = por %p265, %p266
    %p268 = scmp.ne.s32.totalorder %s259, %s260
    %p269 = scmp.eq.s32.totalorder %s21, 0
    %p270 = por %p268, %p269
    %p271 = scmp.ne.s32.totalorder %s259, %s260
    %p272 = scmp.eq.s32.totalorder %s22, 7
    %p273 = por %p271, %p272
    %p275 = scmp.ne.s32.totalorder %s260, %s274
    %p276 = scmp.eq.s32.totalorder %s22, 0
    %p277 = por %p275, %p276
    %s279 = sadd.s32 %s278, 1
    %p282 = scmp.eq.s32.totalorder %s16, 7
    %p283 = scmp.ne.s32.totalorder %s278, %s280
    %p284 = scmp.eq.s32.totalorder %s16, 0
    %p285 = por %p283, %p284
    %p286 = scmp.ne.s32.totalorder %s278, %s280
    %p287 = scmp.eq.s32.totalorder %s21, 7
    %p288 = por %p286, %p287
    %p289 = scmp.ne.s32.totalorder %s280, %s281
    %p290 = scmp.eq.s32.totalorder %s21, 0
    %p291 = por %p289, %p290
    %p292 = scmp.ne.s32.totalorder %s280, %s281
    %p293 = scmp.eq.s32.totalorder %s22, 7
    %p294 = por %p292, %p293
    %p296 = scmp.ne.s32.totalorder %s281, %s295
    %p297 = scmp.eq.s32.totalorder %s22, 0
    %p298 = por %p296, %p297
    %s300 = sadd.s32 %s299, 1
    %p303 = scmp.eq.s32.totalorder %s16, 7
    %p304 = scmp.ne.s32.totalorder %s299, %s301
    %p305 = scmp.eq.s32.totalorder %s16, 0
    %p306 = por %p304, %p305
    %p307 = scmp.ne.s32.totalorder %s299, %s301
    %p308 = scmp.eq.s32.totalorder %s21, 7
    %p309 = por %p307, %p308
    %p310 = scmp.ne.s32.totalorder %s301, %s302
    %p311 = scmp.eq.s32.totalorder %s21, 0
    %p312 = por %p310, %p311
    %p313 = scmp.ne.s32.totalorder %s301, %s302
    %p314 = scmp.eq.s32.totalorder %s22, 7
    %p315 = por %p313, %p314
    %p317 = scmp.ne.s32.totalorder %s302, %s316
    %p318 = scmp.eq.s32.totalorder %s22, 0
    %p319 = por %p317, %p318
    %s320 = ssub.s32 %s23, %s35
    %s321 = ssub.s32 %s24, %s31
    %s322 = sor.u32 %s320, %s321
    %p323 = scmp.eq.s32.totalorder %s322, 0
    %s325 = sadd.s32 %s324, 1
    %s326 = scalar_select %p323, %s324, %s325
    %p329 = pneg %p323
    %p330 = scmp.eq.s32.totalorder %s16, 7
    %p331 = por %p329, %p330
    %p332 = scmp.ne.s32.totalorder %s324, %s327
    %p333 = scmp.eq.s32.totalorder %s16, 0
    %p334 = por %p332, %p333
    %p335 = scmp.ne.s32.totalorder %s324, %s327
    %p336 = scmp.eq.s32.totalorder %s21, 7
    %p337 = por %p335, %p336
    %p338 = scmp.ne.s32.totalorder %s327, %s328
    %p339 = scmp.eq.s32.totalorder %s21, 0
    %p340 = por %p338, %p339
    %p341 = scmp.ne.s32.totalorder %s327, %s328
    %p342 = scmp.eq.s32.totalorder %s22, 7
    %p343 = por %p341, %p342
    %p345 = scmp.ne.s32.totalorder %s328, %s344
    %p346 = scmp.eq.s32.totalorder %s22, 0
    %p347 = por %p345, %p346
    %p348 = scmp.le.s32.totalorder 1, %s16
    %p349 = scmp.lt.s32.totalorder %s16, 9
    %p350 = pnand %p348, %p349
    %p351 = pneg %p350
    // Predicated region
    $region9: #{up_forward.1} parent=5 // pred_check
      _
    $region10: #{up_forward.1} parent=5 // pred_check_branch
      %353 = sbr.rel (%p350) target = $region12
    $region11: #{up_forward.1} parent=5 // pred_region
      %s354 = ssub.s32 %s16, 1
      // Predicated region
      $region13: #{up_forward.1} parent=11 // pred_check
        %p355 = pneg %p249
      $region14: #{up_forward.1} parent=11 // pred_check_branch
        %357 = sbr.rel (%p355) target = $region16
      $region15: #{up_forward.1} parent=11 // pred_region
        _
      $region16: #{up_forward.1} parent=11 // pred_fallthru
        _
      // Predicated region
      $region17: #{up_forward.1} parent=11 // pred_check
        %p358 = pneg %p270
      $region18: #{up_forward.1} parent=11 // pred_check_branch
        %360 = sbr.rel (%p358) target = $region20
      $region19: #{up_forward.1} parent=11 // pred_region
        _
      $region20: #{up_forward.1} parent=11 // pred_fallthru
        _
      // Predicated region
      $region21: #{up_forward.1} parent=11 // pred_check
        %p361 = pneg %p291
      $region22: #{up_forward.1} parent=11 // pred_check_branch
        %363 = sbr.rel (%p361) target = $region24
      $region23: #{up_forward.1} parent=11 // pred_region
        _
      $region24: #{up_forward.1} parent=11 // pred_fallthru
        _
      // Predicated region
      $region25: #{up_forward.1} parent=11 // pred_check
        %p364 = pneg %p312
      $region26: #{up_forward.1} parent=11 // pred_check_branch
        %366 = sbr.rel (%p364) target = $region28
      $region27: #{up_forward.1} parent=11 // pred_region
        _
      $region28: #{up_forward.1} parent=11 // pred_fallthru
        _
    $region12: #{up_forward.1} parent=5 // pred_fallthru
      _
    %p367 = scmp.lt.s32.totalorder %s16, 8
    // Predicated region
    $region29: #{up_forward.1} parent=5 // pred_check
      %p368 = pneg %p367
    $region30: #{up_forward.1} parent=5 // pred_check_branch
      %370 = sbr.rel (%p368) target = $region32
    $region31: #{up_forward.1} parent=5 // pred_region
      // Predicated region
      $region33: #{up_forward.1} parent=31 // pred_check
        %p371 = pneg %p50
      $region34: #{up_forward.1} parent=31 // pred_check_branch
        %373 = sbr.rel (%p371) target = $region36
      $region35: #{up_forward.1} parent=31 // pred_region
        %s374 = smul.u32 4, %s24
        %p375 = scmp.lt.s32.totalorder %s23, 1
        %s376 = scalar_select %p375, %s23, 1
        %p377 = scmp.lt.s32.totalorder %s374, 15
        %s378 = scalar_select %p377, %s374, 15
        %s379 = smul.addr %s378, 2
        %s380 = smul.addr %s376, 32
        %s381 = sadd.s32 %s379, %s380
        %s382 = smul.addr %s381, 4
        %s383 = scalar_lea.vmem %s0, %s382
        %s384 = smul.u32 4, %s24
      $region36: #{up_forward.1} parent=31 // pred_fallthru
        _
      // Predicated region
      $region37: #{up_forward.1} parent=31 // pred_check
        %p385 = pneg %p86
      $region38: #{up_forward.1} parent=31 // pred_check_branch
        %387 = sbr.rel (%p385) target = $region40
      $region39: #{up_forward.1} parent=31 // pred_region
        %s388 = smul.u32 %s24, 2
        %s389 = ssub.s32 %s388, 1
        %p390 = scmp.gt.s32.totalorder %s389, 0
        %s391 = scalar_select %p390, %s389, 0
        %s392 = smul.u32 2, %s391
        %p393 = scmp.lt.s32.totalorder %s23, 1
        %s394 = scalar_select %p393, %s23, 1
        %p395 = scmp.lt.s32.totalorder %s392, 15
        %s396 = scalar_select %p395, %s392, 15
        %s397 = smul.addr %s396, 2
        %s398 = smul.addr %s394, 32
        %s399 = sadd.s32 %s397, %s398
        %s400 = smul.addr %s399, 4
        %s401 = scalar_lea.vmem %s1, %s400
        %s402 = smul.u32 %s24, 2
        %s403 = ssub.s32 %s402, 1
        %p404 = scmp.gt.s32.totalorder %s403, 0
        %s405 = scalar_select %p404, %s403, 0
        %s406 = smul.u32 2, %s405
      $region40: #{up_forward.1} parent=31 // pred_fallthru
        _
      // Predicated region
      $region41: #{up_forward.1} parent=31 // pred_check
        %p407 = pneg %p122
      $region42: #{up_forward.1} parent=31 // pred_check_branch
        %409 = sbr.rel (%p407) target = $region44
      $region43: #{up_forward.1} parent=31 // pred_region
        %s410 = smul.u32 %s24, 2
        %s411 = sadd.s32 %s410, 2
        %p412 = scmp.lt.s32.totalorder %s411, 7
        %s413 = scalar_select %p412, %s411, 7
        %s414 = smul.u32 2, %s413
        %p415 = scmp.lt.s32.totalorder %s23, 1
        %s416 = scalar_select %p415, %s23, 1
        %p417 = scmp.lt.s32.totalorder %s414, 15
        %s418 = scalar_select %p417, %s414, 15
        %s419 = smul.addr %s418, 2
        %s420 = smul.addr %s416, 32
        %s421 = sadd.s32 %s419, %s420
        %s422 = smul.addr %s421, 4
        %s423 = scalar_lea.vmem %s2, %s422
        %s424 = smul.u32 %s24, 2
        %s425 = sadd.s32 %s424, 2
        %p426 = scmp.lt.s32.totalorder %s425, 7
        %s427 = scalar_select %p426, %s425, 7
        %s428 = smul.u32 2, %s427
      $region44: #{up_forward.1} parent=31 // pred_fallthru
        _
      // Predicated region
      $region45: #{up_forward.1} parent=31 // pred_check
        %p429 = pneg %p150
      $region46: #{up_forward.1} parent=31 // pred_check_branch
        %431 = sbr.rel (%p429) target = $region48
      $region47: #{up_forward.1} parent=31 // pred_region
        %s432 = smul.u32 4, %s24
        %p433 = scmp.lt.s32.totalorder %s23, 1
        %s434 = scalar_select %p433, %s23, 1
        %p435 = scmp.lt.s32.totalorder %s432, 15
        %s436 = scalar_select %p435, %s432, 15
        %s437 = smul.addr %s436, 2
        %s438 = smul.addr %s434, 32
        %s439 = sadd.s32 %s437, %s438
        %s440 = smul.addr %s439, 4
        %s441 = scalar_lea.vmem %s3, %s440
        %s442 = smul.u32 4, %s24
      $region48: #{up_forward.1} parent=31 // pred_fallthru
        _
      // Predicated region
      $region49: #{up_forward.1} parent=31 // pred_check
        %p443 = pneg %p186
      $region50: #{up_forward.1} parent=31 // pred_check_branch
        %445 = sbr.rel (%p443) target = $region52
      $region51: #{up_forward.1} parent=31 // pred_region
        %s446 = smul.u32 %s24, 2
        %s447 = ssub.s32 %s446, 1
        %p448 = scmp.gt.s32.totalorder %s447, 0
        %s449 = scalar_select %p448, %s447, 0
        %s450 = smul.u32 2, %s449
        %p451 = scmp.lt.s32.totalorder %s23, 1
        %s452 = scalar_select %p451, %s23, 1
        %p453 = scmp.lt.s32.totalorder %s450, 15
        %s454 = scalar_select %p453, %s450, 15
        %s455 = smul.addr %s454, 2
        %s456 = smul.addr %s452, 32
        %s457 = sadd.s32 %s455, %s456
        %s458 = smul.addr %s457, 4
        %s459 = scalar_lea.vmem %s4, %s458
        %s460 = smul.u32 %s24, 2
        %s461 = ssub.s32 %s460, 1
        %p462 = scmp.gt.s32.totalorder %s461, 0
        %s463 = scalar_select %p462, %s461, 0
        %s464 = smul.u32 2, %s463
      $region52: #{up_forward.1} parent=31 // pred_fallthru
        _
      // Predicated region
      $region53: #{up_forward.1} parent=31 // pred_check
        %p465 = pneg %p222
      $region54: #{up_forward.1} parent=31 // pred_check_branch
        %467 = sbr.rel (%p465) target = $region56
      $region55: #{up_forward.1} parent=31 // pred_region
        %s468 = smul.u32 %s24, 2
        %s469 = sadd.s32 %s468, 2
        %p470 = scmp.lt.s32.totalorder %s469, 7
        %s471 = scalar_select %p470, %s469, 7
        %s472 = smul.u32 2, %s471
        %p473 = scmp.lt.s32.totalorder %s23, 1
        %s474 = scalar_select %p473, %s23, 1
        %p475 = scmp.lt.s32.totalorder %s472, 15
        %s476 = scalar_select %p475, %s472, 15
        %s477 = smul.addr %s476, 2
        %s478 = smul.addr %s474, 32
        %s479 = sadd.s32 %s477, %s478
        %s480 = smul.addr %s479, 4
        %s481 = scalar_lea.vmem %s5, %s480
        %s482 = smul.u32 %s24, 2
        %s483 = sadd.s32 %s482, 2
        %p484 = scmp.lt.s32.totalorder %s483, 7
        %s485 = scalar_select %p484, %s483, 7
        %s486 = smul.u32 2, %s485
      $region56: #{up_forward.1} parent=31 // pred_fallthru
        _
    $region32: #{up_forward.1} parent=5 // pred_fallthru
      _
    %p487 = scmp.le.s32.totalorder 1, %s16
    %p488 = scmp.lt.s32.totalorder %s16, 9
    %p489 = pnand %p487, %p488
    %p490 = pneg %p489
    // Predicated region
    $region57: #{up_forward.1} parent=5 // pred_check
      _
    $region58: #{up_forward.1} parent=5 // pred_check_branch
      %492 = sbr.rel (%p489) target = $region60
    $region59: #{up_forward.1} parent=5 // pred_region
      %s493 = ssub.s32 %s16, 1
      %s494 = smul.u32 4, %s26
      %p495 = scmp.lt.s32.totalorder %s25, 1
      %s496 = scalar_select %p495, %s25, 1
      %p497 = scmp.lt.s32.totalorder %s494, 15
      %s498 = scalar_select %p497, %s494, 15
      %s499 = smul.addr %s498, 2
      %s500 = smul.addr %s496, 32
      %s501 = sadd.s32 %s499, %s500
      %s502 = smul.addr %s501, 4
      %s503 = scalar_lea.vmem %s0, %s502
      %p504 = pneg %p56
      %p505 = pneg %p53
      %s506 = smul.u32 %s26, 2
      %s507 = ssub.s32 %s506, 1
      %p508 = scmp.gt.s32.totalorder %s507, 0
      %s509 = scalar_select %p508, %s507, 0
      %s510 = smul.u32 2, %s509
      %p511 = scmp.lt.s32.totalorder %s25, 1
      %s512 = scalar_select %p511, %s25, 1
      %p513 = scmp.lt.s32.totalorder %s510, 15
      %s514 = scalar_select %p513, %s510, 15
      %s515 = smul.addr %s514, 2
      %s516 = smul.addr %s512, 32
      %s517 = sadd.s32 %s515, %s516
      %s518 = smul.addr %s517, 4
      %s519 = scalar_lea.vmem %s1, %s518
      %p520 = pneg %p92
      %p521 = pneg %p89
      %s522 = smul.u32 %s26, 2
      %s523 = sadd.s32 %s522, 2
      %p524 = scmp.lt.s32.totalorder %s523, 7
      %s525 = scalar_select %p524, %s523, 7
      %s526 = smul.u32 2, %s525
      %p527 = scmp.lt.s32.totalorder %s25, 1
      %s528 = scalar_select %p527, %s25, 1
      %p529 = scmp.lt.s32.totalorder %s526, 15
      %s530 = scalar_select %p529, %s526, 15
      %s531 = smul.addr %s530, 2
      %s532 = smul.addr %s528, 32
      %s533 = sadd.s32 %s531, %s532
      %s534 = smul.addr %s533, 4
      %s535 = scalar_lea.vmem %s2, %s534
      %p536 = pneg %p128
      %p537 = pneg %p125
      %s538 = smul.u32 4, %s26
      %p539 = scmp.lt.s32.totalorder %s25, 1
      %s540 = scalar_select %p539, %s25, 1
      %p541 = scmp.lt.s32.totalorder %s538, 15
      %s542 = scalar_select %p541, %s538, 15
      %s543 = smul.addr %s542, 2
      %s544 = smul.addr %s540, 32
      %s545 = sadd.s32 %s543, %s544
      %s546 = smul.addr %s545, 4
      %s547 = scalar_lea.vmem %s3, %s546
      %p548 = pneg %p156
      %p549 = pneg %p153
      %s550 = smul.u32 %s26, 2
      %s551 = ssub.s32 %s550, 1
      %p552 = scmp.gt.s32.totalorder %s551, 0
      %s553 = scalar_select %p552, %s551, 0
      %s554 = smul.u32 2, %s553
      %p555 = scmp.lt.s32.totalorder %s25, 1
      %s556 = scalar_select %p555, %s25, 1
      %p557 = scmp.lt.s32.totalorder %s554, 15
      %s558 = scalar_select %p557, %s554, 15
      %s559 = smul.addr %s558, 2
      %s560 = smul.addr %s556, 32
      %s561 = sadd.s32 %s559, %s560
      %s562 = smul.addr %s561, 4
      %s563 = scalar_lea.vmem %s4, %s562
      %p564 = pneg %p192
      %p565 = pneg %p189
      %s566 = smul.u32 %s26, 2
      %s567 = sadd.s32 %s566, 2
      %p568 = scmp.lt.s32.totalorder %s567, 7
      %s569 = scalar_select %p568, %s567, 7
      %s570 = smul.u32 2, %s569
      %p571 = scmp.lt.s32.totalorder %s25, 1
      %s572 = scalar_select %p571, %s25, 1
      %p573 = scmp.lt.s32.totalorder %s570, 15
      %s574 = scalar_select %p573, %s570, 15
      %s575 = smul.addr %s574, 2
      %s576 = smul.addr %s572, 32
      %s577 = sadd.s32 %s575, %s576
      %s578 = smul.addr %s577, 4
      %s579 = scalar_lea.vmem %s5, %s578
      %p580 = pneg %p228
      %p581 = pneg %p225
      %p582 = pneg %p249
      %p583 = pneg %p246
      %p584 = pneg %p270
      %p585 = pneg %p267
      %p586 = pneg %p291
      %p587 = pneg %p288
      %p588 = pneg %p312
      %p589 = pneg %p309
      %p590 = pneg %p340
      %p591 = pneg %p337
      %s592 = smul.u32 4, %s26
      %p593 = scmp.lt.s32.totalorder %s25, 1
      %s594 = scalar_select %p593, %s25, 1
      %p595 = scmp.lt.s32.totalorder %s592, 15
      %s596 = scalar_select %p595, %s592, 15
      %s597 = smul.addr %s596, 2
      %s598 = smul.addr %s594, 32
      %s599 = sadd.s32 %s597, %s598
      %s600 = smul.addr %s599, 4
      %s601 = scalar_lea.vmem %s10, %s600
      %s602 = smul.u32 4, %s26
      %p603 = scmp.lt.s32.totalorder %s25, 1
      %s604 = scalar_select %p603, %s25, 1
      %p605 = scmp.lt.s32.totalorder %s602, 15
      %s606 = scalar_select %p605, %s602, 15
      %s607 = smul.addr %s606, 2
      %s608 = smul.addr %s604, 32
      %s609 = sadd.s32 %s607, %s608
      %s610 = smul.addr %s609, 4
      %s611 = scalar_lea.vmem %s0, %s610
      %s612 = smul.u32 4, %s26
      %s613 = smul.u32 %s26, 2
      %s614 = ssub.s32 %s613, 1
      %p615 = scmp.gt.s32.totalorder %s614, 0
      %s616 = scalar_select %p615, %s614, 0
      %s617 = smul.u32 2, %s616
      %p618 = scmp.lt.s32.totalorder %s25, 1
      %s619 = scalar_select %p618, %s25, 1
      %p620 = scmp.lt.s32.totalorder %s617, 15
      %s621 = scalar_select %p620, %s617, 15
      %s622 = smul.addr %s621, 2
      %s623 = smul.addr %s619, 32
      %s624 = sadd.s32 %s622, %s623
      %s625 = smul.addr %s624, 4
      %s626 = scalar_lea.vmem %s1, %s625
      %s627 = smul.u32 %s26, 2
      %s628 = ssub.s32 %s627, 1
      %p629 = scmp.gt.s32.totalorder %s628, 0
      %s630 = scalar_select %p629, %s628, 0
      %s631 = smul.u32 2, %s630
      %s632 = smul.u32 %s26, 2
      %s633 = sadd.s32 %s632, 2
      %p634 = scmp.lt.s32.totalorder %s633, 7
      %s635 = scalar_select %p634, %s633, 7
      %s636 = smul.u32 2, %s635
      %p637 = scmp.lt.s32.totalorder %s25, 1
      %s638 = scalar_select %p637, %s25, 1
      %p639 = scmp.lt.s32.totalorder %s636, 15
      %s640 = scalar_select %p639, %s636, 15
      %s641 = smul.addr %s640, 2
      %s642 = smul.addr %s638, 32
      %s643 = sadd.s32 %s641, %s642
      %s644 = smul.addr %s643, 4
      %s645 = scalar_lea.vmem %s2, %s644
      %s646 = smul.u32 %s26, 2
      %s647 = sadd.s32 %s646, 2
      %p648 = scmp.lt.s32.totalorder %s647, 7
      %s649 = scalar_select %p648, %s647, 7
      %s650 = smul.u32 2, %s649
      %s651 = smul.u32 4, %s26
      %p652 = scmp.lt.s32.totalorder %s25, 1
      %s653 = scalar_select %p652, %s25, 1
      %p654 = scmp.lt.s32.totalorder %s651, 15
      %s655 = scalar_select %p654, %s651, 15
      %s656 = smul.addr %s655, 2
      %s657 = smul.addr %s653, 32
      %s658 = sadd.s32 %s656, %s657
      %s659 = smul.addr %s658, 4
      %s660 = scalar_lea.vmem %s3, %s659
      %s661 = smul.u32 4, %s26
      %s662 = smul.u32 %s26, 2
      %s663 = ssub.s32 %s662, 1
      %p664 = scmp.gt.s32.totalorder %s663, 0
      %s665 = scalar_select %p664, %s663, 0
      %s666 = smul.u32 2, %s665
      %p667 = scmp.lt.s32.totalorder %s25, 1
      %s668 = scalar_select %p667, %s25, 1
      %p669 = scmp.lt.s32.totalorder %s666, 15
      %s670 = scalar_select %p669, %s666, 15
      %s671 = smul.addr %s670, 2
      %s672 = smul.addr %s668, 32
      %s673 = sadd.s32 %s671, %s672
      %s674 = smul.addr %s673, 4
      %s675 = scalar_lea.vmem %s4, %s674
      %s676 = smul.u32 %s26, 2
      %s677 = ssub.s32 %s676, 1
      %p678 = scmp.gt.s32.totalorder %s677, 0
      %s679 = scalar_select %p678, %s677, 0
      %s680 = smul.u32 2, %s679
      %s681 = smul.u32 %s26, 2
      %s682 = sadd.s32 %s681, 2
      %p683 = scmp.lt.s32.totalorder %s682, 7
      %s684 = scalar_select %p683, %s682, 7
      %s685 = smul.u32 2, %s684
      %p686 = scmp.lt.s32.totalorder %s25, 1
      %s687 = scalar_select %p686, %s25, 1
      %p688 = scmp.lt.s32.totalorder %s685, 15
      %s689 = scalar_select %p688, %s685, 15
      %s690 = smul.addr %s689, 2
      %s691 = smul.addr %s687, 32
      %s692 = sadd.s32 %s690, %s691
      %s693 = smul.addr %s692, 4
      %s694 = scalar_lea.vmem %s5, %s693
      %s695 = smul.u32 %s26, 2
      %s696 = sadd.s32 %s695, 2
      %p697 = scmp.lt.s32.totalorder %s696, 7
      %s698 = scalar_select %p697, %s696, 7
      %s699 = smul.u32 2, %s698
      %s700 = smul.u32 4, %s26
      %p701 = scmp.lt.s32.totalorder %s25, 1
      %s702 = scalar_select %p701, %s25, 1
      %p703 = scmp.lt.s32.totalorder %s700, 15
      %s704 = scalar_select %p703, %s700, 15
      %s705 = smul.addr %s704, 2
      %s706 = smul.addr %s702, 32
      %s707 = sadd.s32 %s705, %s706
      %s708 = smul.addr %s707, 4
      %s709 = scalar_lea.vmem %s10, %s708
      %s710 = smul.u32 4, %s26
      %vm712 = vcmask 1043459
      %vm713 = vsmask.f32 7950
      %vm714 = vmand %vm712, %vm713
      %v715 = vld [vmem:[#allocation2] sm:$0x8]
      %v716 = vsel %vm714, 0, %v715
      %717 = vst [vmem:[#allocation2] sm:$0x8] %v716
      %v718 = vld [vmem:[#allocation2 + $0x8] sm:$0x8]
      %v719 = vsel %vm714, 0, %v718
      %720 = vst [vmem:[#allocation2 + $0x8] sm:$0x8] %v719
      %v721 = vld [vmem:[#allocation2 + $0x20] sm:$0x8]
      %v722 = vsel %vm714, 0, %v721
      %723 = vst [vmem:[#allocation2 + $0x20] sm:$0x8] %v722
      %v724 = vld [vmem:[#allocation2 + $0x28] sm:$0x8]
      %v725 = vsel %vm714, 0, %v724
      %726 = vst [vmem:[#allocation2 + $0x28] sm:$0x8] %v725
      %v727 = vld [vmem:[#allocation2 + $0x40] sm:$0x8]
      %v728 = vsel %vm714, 0, %v727
      %729 = vst [vmem:[#allocation2 + $0x40] sm:$0x8] %v728
      %v730 = vld [vmem:[#allocation2 + $0x48] sm:$0x8]
      %v731 = vsel %vm714, 0, %v730
      %732 = vst [vmem:[#allocation2 + $0x48] sm:$0x8] %v731
      %v733 = vld [vmem:[#allocation2 + $0x60] sm:$0x8]
      %v734 = vsel %vm714, 0, %v733
      %735 = vst [vmem:[#allocation2 + $0x60] sm:$0x8] %v734
      %v736 = vld [vmem:[#allocation2 + $0x68] sm:$0x8]
      %v737 = vsel %vm714, 0, %v736
      %738 = vst [vmem:[#allocation2 + $0x68] sm:$0x8] %v737
      %v739 = vld [vmem:[#allocation2 + $0x80] sm:$0x8]
      %v740 = vsel %vm714, 0, %v739
      %741 = vst [vmem:[#allocation2 + $0x80] sm:$0x8] %v740
      %v742 = vld [vmem:[#allocation2 + $0x88] sm:$0x8]
      %v743 = vsel %vm714, 0, %v742
      %744 = vst [vmem:[#allocation2 + $0x88] sm:$0x8] %v743
      %v745 = vld [vmem:[#allocation2 + $0xa0] sm:$0x8]
      %v746 = vsel %vm714, 0, %v745
      %747 = vst [vmem:[#allocation2 + $0xa0] sm:$0x8] %v746
      %v748 = vld [vmem:[#allocation2 + $0xa8] sm:$0x8]
      %v749 = vsel %vm714, 0, %v748
      %750 = vst [vmem:[#allocation2 + $0xa8] sm:$0x8] %v749
      %v751 = vld [vmem:[#allocation2 + $0xc0] sm:$0x8]
      %v752 = vsel %vm714, 0, %v751
      %753 = vst [vmem:[#allocation2 + $0xc0] sm:$0x8] %v752
      %v754 = vld [vmem:[#allocation2 + $0xc8] sm:$0x8]
      %v755 = vsel %vm714, 0, %v754
      %756 = vst [vmem:[#allocation2 + $0xc8] sm:$0x8] %v755
      %v757 = vld [vmem:[#allocation2 + $0xe0] sm:$0x8]
      %v758 = vsel %vm714, 0, %v757
      %759 = vst [vmem:[#allocation2 + $0xe0] sm:$0x8] %v758
      %v760 = vld [vmem:[#allocation2 + $0xe8] sm:$0x8]
      %v761 = vsel %vm714, 0, %v760
      %762 = vst [vmem:[#allocation2 + $0xe8] sm:$0x8] %v761
      %vm763 = vcmask 1044484
      %vm764 = vsmask.f32 4352
      %vm765 = vmand %vm763, %vm764
      %v766 = vld [vmem:[#allocation2 + $0x10] sm:$0x10]
      %v767 = vsel %vm765, 0, %v766
      %768 = vst [vmem:[#allocation2 + $0x10] sm:$0x10] %v767
      %v769 = vld [vmem:[#allocation2 + $0x18] sm:$0x10]
      %v770 = vsel %vm765, 0, %v769
      %771 = vst [vmem:[#allocation2 + $0x18] sm:$0x10] %v770
      %v772 = vld [vmem:[#allocation2 + $0x30] sm:$0x10]
      %v773 = vsel %vm765, 0, %v772
      %774 = vst [vmem:[#allocation2 + $0x30] sm:$0x10] %v773
      %v775 = vld [vmem:[#allocation2 + $0x38] sm:$0x10]
      %v776 = vsel %vm765, 0, %v775
      %777 = vst [vmem:[#allocation2 + $0x38] sm:$0x10] %v776
      %v778 = vld [vmem:[#allocation2 + $0x50] sm:$0x10]
      %v779 = vsel %vm765, 0, %v778
      %780 = vst [vmem:[#allocation2 + $0x50] sm:$0x10] %v779
      %v781 = vld [vmem:[#allocation2 + $0x58] sm:$0x10]
      %v782 = vsel %vm765, 0, %v781
      %783 = vst [vmem:[#allocation2 + $0x58] sm:$0x10] %v782
      %v784 = vld [vmem:[#allocation2 + $0x70] sm:$0x10]
      %v785 = vsel %vm765, 0, %v784
      %786 = vst [vmem:[#allocation2 + $0x70] sm:$0x10] %v785
      %v787 = vld [vmem:[#allocation2 + $0x78] sm:$0x10]
      %v788 = vsel %vm765, 0, %v787
      %789 = vst [vmem:[#allocation2 + $0x78] sm:$0x10] %v788
      %v790 = vld [vmem:[#allocation2 + $0x90] sm:$0x10]
      %v791 = vsel %vm765, 0, %v790
      %792 = vst [vmem:[#allocation2 + $0x90] sm:$0x10] %v791
      %v793 = vld [vmem:[#allocation2 + $0x98] sm:$0x10]
      %v794 = vsel %vm765, 0, %v793
      %795 = vst [vmem:[#allocation2 + $0x98] sm:$0x10] %v794
      %v796 = vld [vmem:[#allocation2 + $0xb0] sm:$0x10]
      %v797 = vsel %vm765, 0, %v796
      %798 = vst [vmem:[#allocation2 + $0xb0] sm:$0x10] %v797
      %v799 = vld [vmem:[#allocation2 + $0xb8] sm:$0x10]
      %v800 = vsel %vm765, 0, %v799
      %801 = vst [vmem:[#allocation2 + $0xb8] sm:$0x10] %v800
      %v802 = vld [vmem:[#allocation2 + $0xd0] sm:$0x10]
      %v803 = vsel %vm765, 0, %v802
      %804 = vst [vmem:[#allocation2 + $0xd0] sm:$0x10] %v803
      %v805 = vld [vmem:[#allocation2 + $0xd8] sm:$0x10]
      %v806 = vsel %vm765, 0, %v805
      %807 = vst [vmem:[#allocation2 + $0xd8] sm:$0x10] %v806
      %v808 = vld [vmem:[#allocation2 + $0xf0] sm:$0x10]
      %v809 = vsel %vm765, 0, %v808
      %810 = vst [vmem:[#allocation2 + $0xf0] sm:$0x10] %v809
      %v811 = vld [vmem:[#allocation2 + $0xf8] sm:$0x10]
      %v812 = vsel %vm765, 0, %v811
      %813 = vst [vmem:[#allocation2 + $0xf8] sm:$0x10] %v812
      %v814 = vld [vmem:[%s611] sm:$0xf]
      %v815 = vld [vmem:[%s611 + $0x4] sm:$0xf]
      %v816 = vld [vmem:[%s611 + $0x8] sm:$0xf]
      %v817 = vld [vmem:[%s611 + $0xc] sm:$0xf]
      %v818 = vld [vmem:[%s611 + $0x10] sm:$0xf]
      %v819 = vld [vmem:[%s611 + $0x14] sm:$0xf]
      %v820 = vld [vmem:[%s611 + $0x18] sm:$0xf]
      %v821 = vld [vmem:[%s611 + $0x1c] sm:$0xf]
      %v830 = vunpack.c.l.b16 %v814
      %v831 = vunpack.c.l.b16 %v815
      %v832 = vunpack.c.l.b16 %v816
      %v833 = vunpack.c.l.b16 %v817
      %v834 = vunpack.c.l.b16 %v818
      %v835 = vunpack.c.l.b16 %v819
      %v836 = vunpack.c.l.b16 %v820
      %v837 = vunpack.c.l.b16 %v821
      %v838 = vpack.c.b16 %v830, %v830
      %v839 = vpack.c.b16 %v831, %v831
      %v840 = vpack.c.b16 %v832, %v832
      %v841 = vpack.c.b16 %v833, %v833
      %v842 = vpack.c.b16 %v834, %v834
      %v843 = vpack.c.b16 %v835, %v835
      %v844 = vpack.c.b16 %v836, %v836
      %v845 = vpack.c.b16 %v837, %v837
      %s854 = scalar_lea.vmem [#allocation2], 64
      %855 = vst [vmem:[%s854] sm:$0xf0] %v838
      %856 = vst [vmem:[%s854 + $0x10] sm:$0xf] %v839
      %857 = vst [vmem:[%s854 + $0x20] sm:$0xf0] %v840
      %858 = vst [vmem:[%s854 + $0x30] sm:$0xf] %v841
      %859 = vst [vmem:[%s854 + $0x40] sm:$0xf0] %v842
      %860 = vst [vmem:[%s854 + $0x50] sm:$0xf] %v843
      %861 = vst [vmem:[%s854 + $0x60] sm:$0xf0] %v844
      %862 = vst [vmem:[%s854 + $0x70] sm:$0xf] %v845
      %v863 = vld [vmem:[%s660] sm:$0xf]
      %v864 = vld [vmem:[%s660 + $0x4] sm:$0xf]
      %v865 = vld [vmem:[%s660 + $0x8] sm:$0xf]
      %v866 = vld [vmem:[%s660 + $0xc] sm:$0xf]
      %v867 = vld [vmem:[%s660 + $0x10] sm:$0xf]
      %v868 = vld [vmem:[%s660 + $0x14] sm:$0xf]
      %v869 = vld [vmem:[%s660 + $0x18] sm:$0xf]
      %v870 = vld [vmem:[%s660 + $0x1c] sm:$0xf]
      %v879 = vunpack.c.l.b16 %v863
      %v880 = vunpack.c.l.b16 %v864
      %v881 = vunpack.c.l.b16 %v865
      %v882 = vunpack.c.l.b16 %v866
      %v883 = vunpack.c.l.b16 %v867
      %v884 = vunpack.c.l.b16 %v868
      %v885 = vunpack.c.l.b16 %v869
      %v886 = vunpack.c.l.b16 %v870
      %v887 = vpack.c.b16 %v879, %v879
      %v888 = vpack.c.b16 %v880, %v880
      %v889 = vpack.c.b16 %v881, %v881
      %v890 = vpack.c.b16 %v882, %v882
      %v891 = vpack.c.b16 %v883, %v883
      %v892 = vpack.c.b16 %v884, %v884
      %v893 = vpack.c.b16 %v885, %v885
      %v894 = vpack.c.b16 %v886, %v886
      %903 = vst [vmem:[%s854 + $0x8] sm:$0xf0] %v887
      %904 = vst [vmem:[%s854 + $0x18] sm:$0xf] %v888
      %905 = vst [vmem:[%s854 + $0x28] sm:$0xf0] %v889
      %906 = vst [vmem:[%s854 + $0x38] sm:$0xf] %v890
      %907 = vst [vmem:[%s854 + $0x48] sm:$0xf0] %v891
      %908 = vst [vmem:[%s854 + $0x58] sm:$0xf] %v892
      %909 = vst [vmem:[%s854 + $0x68] sm:$0xf0] %v893
      %910 = vst [vmem:[%s854 + $0x78] sm:$0xf] %v894
      %v911 = vld [vmem:[%s626] sm:$0xf]
      %v912 = vld [vmem:[%s626 + $0x4] sm:$0xf]
      %v913 = vld [vmem:[%s626 + $0x8] sm:$0xf]
      %v914 = vld [vmem:[%s626 + $0xc] sm:$0xf]
      %v915 = vld [vmem:[%s675] sm:$0xf]
      %v916 = vld [vmem:[%s675 + $0x4] sm:$0xf]
      %v917 = vld [vmem:[%s675 + $0x8] sm:$0xf]
      %v918 = vld [vmem:[%s675 + $0xc] sm:$0xf]
      %p919 = scmp.gt.s32.totalorder %s26, 0
      %s920 = scalar_select %p919, 1, 0
      %v921 = vstv %s920
      %vm922 = vcmp.eq.s32.totalorder %v921, 1
      %v923 = vsel %vm922, %v911, 0
      %v924 = vsel %vm922, %v912, 0
      %v925 = vsel %vm922, %v913, 0
      %v926 = vsel %vm922, %v914, 0
      %v931 = vunpack.c.l.b16 %v923
      %v932 = vunpack.c.l.b16 %v924
      %v933 = vunpack.c.l.b16 %v925
      %v934 = vunpack.c.l.b16 %v926
      %v935 = vpack.c.b16 %v931, %v931
      %v936 = vpack.c.b16 %v932, %v932
      %v937 = vpack.c.b16 %v933, %v933
      %v938 = vpack.c.b16 %v934, %v934
      %943 = vst [vmem:[#allocation2] sm:$0xf0] %v935
      %944 = vst [vmem:[#allocation2 + $0x10] sm:$0xf] %v936
      %945 = vst [vmem:[#allocation2 + $0x20] sm:$0xf0] %v937
      %946 = vst [vmem:[#allocation2 + $0x30] sm:$0xf] %v938
      %v947 = vsel %vm922, %v915, 0
      %v948 = vsel %vm922, %v916, 0
      %v949 = vsel %vm922, %v917, 0
      %v950 = vsel %vm922, %v918, 0
      %v955 = vunpack.c.l.b16 %v947
      %v956 = vunpack.c.l.b16 %v948
      %v957 = vunpack.c.l.b16 %v949
      %v958 = vunpack.c.l.b16 %v950
      %v959 = vpack.c.b16 %v955, %v955
      %v960 = vpack.c.b16 %v956, %v956
      %v961 = vpack.c.b16 %v957, %v957
      %v962 = vpack.c.b16 %v958, %v958
      %967 = vst [vmem:[#allocation2 + $0x8] sm:$0xf0] %v959
      %968 = vst [vmem:[#allocation2 + $0x18] sm:$0xf] %v960
      %969 = vst [vmem:[#allocation2 + $0x28] sm:$0xf0] %v961
      %970 = vst [vmem:[#allocation2 + $0x38] sm:$0xf] %v962
      %v971 = vld [vmem:[%s645] sm:$0xf]
      %v972 = vld [vmem:[%s645 + $0x4] sm:$0xf]
      %v973 = vld [vmem:[%s645 + $0x8] sm:$0xf]
      %v974 = vld [vmem:[%s645 + $0xc] sm:$0xf]
      %v975 = vld [vmem:[%s694] sm:$0xf]
      %v976 = vld [vmem:[%s694 + $0x4] sm:$0xf]
      %v977 = vld [vmem:[%s694 + $0x8] sm:$0xf]
      %v978 = vld [vmem:[%s694 + $0xc] sm:$0xf]
      %p979 = scmp.lt.s32.totalorder %s26, 3
      %s980 = scalar_select %p979, 1, 0
      %v981 = vstv %s980
      %vm982 = vcmp.eq.s32.totalorder %v981, 1
      %v983 = vsel %vm982, %v971, 0
      %v984 = vsel %vm982, %v972, 0
      %v985 = vsel %vm982, %v973, 0
      %v986 = vsel %vm982, %v974, 0
      %v991 = vunpack.c.l.b16 %v983
      %v992 = vunpack.c.l.b16 %v984
      %v993 = vunpack.c.l.b16 %v985
      %v994 = vunpack.c.l.b16 %v986
      %v995 = vpack.c.b16 %v991, %v991
      %v996 = vpack.c.b16 %v992, %v992
      %v997 = vpack.c.b16 %v993, %v993
      %v998 = vpack.c.b16 %v994, %v994
      %s1003 = scalar_lea.vmem [#allocation2], 192
      %1004 = vst [vmem:[%s1003] sm:$0xf0] %v995
      %1005 = vst [vmem:[%s1003 + $0x10] sm:$0xf] %v996
      %1006 = vst [vmem:[%s1003 + $0x20] sm:$0xf0] %v997
      %1007 = vst [vmem:[%s1003 + $0x30] sm:$0xf] %v998
      %v1008 = vsel %vm982, %v975, 0
      %v1009 = vsel %vm982, %v976, 0
      %v1010 = vsel %vm982, %v977, 0
      %v1011 = vsel %vm982, %v978, 0
      %v1016 = vunpack.c.l.b16 %v1008
      %v1017 = vunpack.c.l.b16 %v1009
      %v1018 = vunpack.c.l.b16 %v1010
      %v1019 = vunpack.c.l.b16 %v1011
      %v1020 = vpack.c.b16 %v1016, %v1016
      %v1021 = vpack.c.b16 %v1017, %v1017
      %v1022 = vpack.c.b16 %v1018, %v1018
      %v1023 = vpack.c.b16 %v1019, %v1019
      %1028 = vst [vmem:[%s1003 + $0x8] sm:$0xf0] %v1020
      %1029 = vst [vmem:[%s1003 + $0x18] sm:$0xf] %v1021
      %1030 = vst [vmem:[%s1003 + $0x28] sm:$0xf0] %v1022
      %1031 = vst [vmem:[%s1003 + $0x38] sm:$0xf] %v1023
      %v1032 = vld [vmem:[#allocation2] sm:$0xff]
      %v1033 = vld [vmem:[#allocation2 + $0x8] sm:$0xff]
      %v1034 = vld [vmem:[#allocation2 + $0x10] sm:$0xff]
      %v1035 = vld [vmem:[#allocation2 + $0x18] sm:$0xff]
      %v1036 = vld [vmem:[#allocation2 + $0x20] sm:$0xff]
      %v1037 = vld [vmem:[#allocation2 + $0x28] sm:$0xff]
      %v1038 = vld [vmem:[#allocation2 + $0x30] sm:$0xff]
      %v1039 = vld [vmem:[#allocation2 + $0x38] sm:$0xff]
      %v1040 = vld [vmem:[#allocation2 + $0x40] sm:$0xff]
      %v1041 = vld [vmem:[#allocation2 + $0x48] sm:$0xff]
      %v1042 = vld [vmem:[#allocation2 + $0x50] sm:$0xff]
      %v1043 = vld [vmem:[#allocation2 + $0x58] sm:$0xff]
      %v1044 = vld [vmem:[#allocation2 + $0x60] sm:$0xff]
      %v1045 = vld [vmem:[#allocation2 + $0x68] sm:$0xff]
      %v1046 = vld [vmem:[#allocation2 + $0x70] sm:$0xff]
      %v1047 = vld [vmem:[#allocation2 + $0x78] sm:$0xff]
      %v1048 = vld [vmem:[#allocation2 + $0x80] sm:$0xff]
      %v1049 = vld [vmem:[#allocation2 + $0x88] sm:$0xff]
      %v1050 = vld [vmem:[#allocation2 + $0x90] sm:$0xff]
      %v1051 = vld [vmem:[#allocation2 + $0x98] sm:$0xff]
      %v1052 = vld [vmem:[#allocation2 + $0xa0] sm:$0xff]
      %v1053 = vld [vmem:[#allocation2 + $0xa8] sm:$0xff]
      %v1054 = vld [vmem:[#allocation2 + $0xb0] sm:$0xff]
      %v1055 = vld [vmem:[#allocation2 + $0xb8] sm:$0xff]
      %v1056 = vld [vmem:[#allocation2 + $0xc0] sm:$0xff]
      %v1057 = vld [vmem:[#allocation2 + $0xc8] sm:$0xff]
      %v1058 = vld [vmem:[#allocation2 + $0xd0] sm:$0xff]
      %v1059 = vld [vmem:[#allocation2 + $0xd8] sm:$0xff]
      %v1060 = vld [vmem:[#allocation2 + $0xe0] sm:$0xff]
      %v1061 = vld [vmem:[#allocation2 + $0xe8] sm:$0xff]
      %v1062 = vld [vmem:[#allocation2 + $0xf0] sm:$0xff]
      %v1063 = vld [vmem:[#allocation2 + $0xf8] sm:$0xff]
      %vm1064 = vsmask.f32 7424
      %v1066 = vshrl.u32 %v1032, 16
      %v1068 = vshll.u32 %v1032, 16
      %v1070 = vrot.slane %v1068, 1
      %v1071 = vor.u32 %v1066, %v1070
      %v1073 = vshll.u32 %v1034, 16
      %v1075 = vrot.slane %v1073, 1
      %v1076 = vsel %vm1064, %v1071, %v1075
      %v1078 = vshrl.u32 %v1033, 16
      %v1080 = vshll.u32 %v1033, 16
      %v1082 = vrot.slane %v1080, 1
      %v1083 = vor.u32 %v1078, %v1082
      %v1085 = vshll.u32 %v1035, 16
      %v1087 = vrot.slane %v1085, 1
      %v1088 = vsel %vm1064, %v1083, %v1087
      %v1089 = vshrl.u32 %v1034, 16
      %v1091 = vor.u32 %v1089, %v1075
      %v1092 = vshrl.u32 %v1035, 16
      %v1094 = vor.u32 %v1092, %v1087
      %v1096 = vshrl.u32 %v1036, 16
      %v1098 = vshll.u32 %v1036, 16
      %v1100 = vrot.slane %v1098, 1
      %v1101 = vor.u32 %v1096, %v1100
      %v1103 = vshll.u32 %v1038, 16
      %v1105 = vrot.slane %v1103, 1
      %v1106 = vsel %vm1064, %v1101, %v1105
      %v1108 = vshrl.u32 %v1037, 16
      %v1110 = vshll.u32 %v1037, 16
      %v1112 = vrot.slane %v1110, 1
      %v1113 = vor.u32 %v1108, %v1112
      %v1115 = vshll.u32 %v1039, 16
      %v1117 = vrot.slane %v1115, 1
      %v1118 = vsel %vm1064, %v1113, %v1117
      %v1119 = vshrl.u32 %v1038, 16
      %v1121 = vor.u32 %v1119, %v1105
      %v1122 = vshrl.u32 %v1039, 16
      %v1124 = vor.u32 %v1122, %v1117
      %v1126 = vshrl.u32 %v1040, 16
      %v1128 = vshll.u32 %v1040, 16
      %v1130 = vrot.slane %v1128, 1
      %v1131 = vor.u32 %v1126, %v1130
      %v1133 = vshll.u32 %v1042, 16
      %v1135 = vrot.slane %v1133, 1
      %v1136 = vsel %vm1064, %v1131, %v1135
      %v1138 = vshrl.u32 %v1041, 16
      %v1140 = vshll.u32 %v1041, 16
      %v1142 = vrot.slane %v1140, 1
      %v1143 = vor.u32 %v1138, %v1142
      %v1145 = vshll.u32 %v1043, 16
      %v1147 = vrot.slane %v1145, 1
      %v1148 = vsel %vm1064, %v1143, %v1147
      %v1149 = vshrl.u32 %v1042, 16
      %v1151 = vor.u32 %v1149, %v1135
      %v1152 = vshrl.u32 %v1043, 16
      %v1154 = vor.u32 %v1152, %v1147
      %v1156 = vshrl.u32 %v1044, 16
      %v1158 = vshll.u32 %v1044, 16
      %v1160 = vrot.slane %v1158, 1
      %v1161 = vor.u32 %v1156, %v1160
      %v1163 = vshll.u32 %v1046, 16
      %v1165 = vrot.slane %v1163, 1
      %v1166 = vsel %vm1064, %v1161, %v1165
      %v1168 = vshrl.u32 %v1045, 16
      %v1170 = vshll.u32 %v1045, 16
      %v1172 = vrot.slane %v1170, 1
      %v1173 = vor.u32 %v1168, %v1172
      %v1175 = vshll.u32 %v1047, 16
      %v1177 = vrot.slane %v1175, 1
      %v1178 = vsel %vm1064, %v1173, %v1177
      %v1179 = vshrl.u32 %v1046, 16
      %v1181 = vor.u32 %v1179, %v1165
      %v1182 = vshrl.u32 %v1047, 16
      %v1184 = vor.u32 %v1182, %v1177
      %v1186 = vshrl.u32 %v1048, 16
      %v1188 = vshll.u32 %v1048, 16
      %v1190 = vrot.slane %v1188, 1
      %v1191 = vor.u32 %v1186, %v1190
      %v1193 = vshll.u32 %v1050, 16
      %v1195 = vrot.slane %v1193, 1
      %v1196 = vsel %vm1064, %v1191, %v1195
      %v1198 = vshrl.u32 %v1049, 16
      %v1200 = vshll.u32 %v1049, 16
      %v1202 = vrot.slane %v1200, 1
      %v1203 = vor.u32 %v1198, %v1202
      %v1205 = vshll.u32 %v1051, 16
      %v1207 = vrot.slane %v1205, 1
      %v1208 = vsel %vm1064, %v1203, %v1207
      %v1209 = vshrl.u32 %v1050, 16
      %v1211 = vor.u32 %v1209, %v1195
      %v1212 = vshrl.u32 %v1051, 16
      %v1214 = vor.u32 %v1212, %v1207
      %v1216 = vshrl.u32 %v1052, 16
      %v1218 = vshll.u32 %v1052, 16
      %v1220 = vrot.slane %v1218, 1
      %v1221 = vor.u32 %v1216, %v1220
      %v1223 = vshll.u32 %v1054, 16
      %v1225 = vrot.slane %v1223, 1
      %v1226 = vsel %vm1064, %v1221, %v1225
      %v1228 = vshrl.u32 %v1053, 16
      %v1230 = vshll.u32 %v1053, 16
      %v1232 = vrot.slane %v1230, 1
      %v1233 = vor.u32 %v1228, %v1232
      %v1235 = vshll.u32 %v1055, 16
      %v1237 = vrot.slane %v1235, 1
      %v1238 = vsel %vm1064, %v1233, %v1237
      %v1239 = vshrl.u32 %v1054, 16
      %v1241 = vor.u32 %v1239, %v1225
      %v1242 = vshrl.u32 %v1055, 16
      %v1244 = vor.u32 %v1242, %v1237
      %vm1269 = vcmask 1046528
      %v1270 = vrot.slane %v1032, 1
      %v1271 = vrot.slane %v1034, 1
      %v1272 = vsel %vm1269, %v1270, %v1271
      %v1273 = vrot.slane %v1033, 1
      %v1274 = vrot.slane %v1035, 1
      %v1275 = vsel %vm1269, %v1273, %v1274
      %v1276 = vrot.slane %v1036, 1
      %v1277 = vrot.slane %v1038, 1
      %v1278 = vsel %vm1269, %v1276, %v1277
      %v1279 = vrot.slane %v1037, 1
      %v1280 = vrot.slane %v1039, 1
      %v1281 = vsel %vm1269, %v1279, %v1280
      %v1282 = vrot.slane %v1040, 1
      %v1283 = vrot.slane %v1042, 1
      %v1284 = vsel %vm1269, %v1282, %v1283
      %v1285 = vrot.slane %v1041, 1
      %v1286 = vrot.slane %v1043, 1
      %v1287 = vsel %vm1269, %v1285, %v1286
      %v1288 = vrot.slane %v1044, 1
      %v1289 = vrot.slane %v1046, 1
      %v1290 = vsel %vm1269, %v1288, %v1289
      %v1291 = vrot.slane %v1045, 1
      %v1292 = vrot.slane %v1047, 1
      %v1293 = vsel %vm1269, %v1291, %v1292
      %v1294 = vrot.slane %v1048, 1
      %v1295 = vrot.slane %v1050, 1
      %v1296 = vsel %vm1269, %v1294, %v1295
      %v1297 = vrot.slane %v1049, 1
      %v1298 = vrot.slane %v1051, 1
      %v1299 = vsel %vm1269, %v1297, %v1298
      %v1300 = vrot.slane %v1052, 1
      %v1301 = vrot.slane %v1054, 1
      %v1302 = vsel %vm1269, %v1300, %v1301
      %v1303 = vrot.slane %v1053, 1
      %v1304 = vrot.slane %v1055, 1
      %v1305 = vsel %vm1269, %v1303, %v1304
      %v1306 = vrot.slane %v1066, 3
      %v1307 = vrot.slane %v1068, 4
      %v1308 = vor.u32 %v1306, %v1307
      %v1309 = vrot.slane %v1089, 3
      %v1310 = vrot.slane %v1073, 4
      %v1311 = vor.u32 %v1309, %v1310
      %v1312 = vsel %vm764, %v1308, %v1311
      %v1313 = vrot.slane %v1078, 3
      %v1314 = vrot.slane %v1080, 4
      %v1315 = vor.u32 %v1313, %v1314
      %v1316 = vrot.slane %v1092, 3
      %v1317 = vrot.slane %v1085, 4
      %v1318 = vor.u32 %v1316, %v1317
      %v1319 = vsel %vm764, %v1315, %v1318
      %v1321 = vshrl.u32 %v1076, 16
      %v1323 = vrot.slane %v1321, 3
      %v1324 = vshll.u32 %v1076, 16
      %v1326 = vrot.slane %v1324, 4
      %v1327 = vor.u32 %v1323, %v1326
      %v1329 = vshrl.u32 %v1091, 16
      %v1331 = vrot.slane %v1329, 3
      %v1332 = vshll.u32 %v1091, 16
      %v1334 = vrot.slane %v1332, 4
      %v1335 = vor.u32 %v1331, %v1334
      %v1336 = vsel %vm764, %v1327, %v1335
      %v1338 = vshrl.u32 %v1088, 16
      %v1340 = vrot.slane %v1338, 3
      %v1341 = vshll.u32 %v1088, 16
      %v1343 = vrot.slane %v1341, 4
      %v1344 = vor.u32 %v1340, %v1343
      %v1346 = vshrl.u32 %v1094, 16
      %v1348 = vrot.slane %v1346, 3
      %v1349 = vshll.u32 %v1094, 16
      %v1351 = vrot.slane %v1349, 4
      %v1352 = vor.u32 %v1348, %v1351
      %v1353 = vsel %vm764, %v1344, %v1352
      %v1355 = vshrl.u32 %v1272, 16
      %v1357 = vrot.slane %v1355, 3
      %v1358 = vshll.u32 %v1272, 16
      %v1360 = vrot.slane %v1358, 4
      %v1361 = vor.u32 %v1357, %v1360
      %v1363 = vshrl.u32 %v1271, 16
      %v1365 = vrot.slane %v1363, 3
      %v1366 = vshll.u32 %v1271, 16
      %v1368 = vrot.slane %v1366, 4
      %v1369 = vor.u32 %v1365, %v1368
      %v1370 = vsel %vm764, %v1361, %v1369
      %v1372 = vshrl.u32 %v1275, 16
      %v1374 = vrot.slane %v1372, 3
      %v1375 = vshll.u32 %v1275, 16
      %v1377 = vrot.slane %v1375, 4
      %v1378 = vor.u32 %v1374, %v1377
      %v1380 = vshrl.u32 %v1274, 16
      %v1382 = vrot.slane %v1380, 3
      %v1383 = vshll.u32 %v1274, 16
      %v1385 = vrot.slane %v1383, 4
      %v1386 = vor.u32 %v1382, %v1385
      %v1387 = vsel %vm764, %v1378, %v1386
      %v1388 = vrot.slane %v1096, 3
      %v1389 = vrot.slane %v1098, 4
      %v1390 = vor.u32 %v1388, %v1389
      %v1391 = vrot.slane %v1119, 3
      %v1392 = vrot.slane %v1103, 4
      %v1393 = vor.u32 %v1391, %v1392
      %v1394 = vsel %vm764, %v1390, %v1393
      %v1395 = vrot.slane %v1108, 3
      %v1396 = vrot.slane %v1110, 4
      %v1397 = vor.u32 %v1395, %v1396
      %v1398 = vrot.slane %v1122, 3
      %v1399 = vrot.slane %v1115, 4
      %v1400 = vor.u32 %v1398, %v1399
      %v1401 = vsel %vm764, %v1397, %v1400
      %v1403 = vshrl.u32 %v1106, 16
      %v1405 = vrot.slane %v1403, 3
      %v1406 = vshll.u32 %v1106, 16
      %v1408 = vrot.slane %v1406, 4
      %v1409 = vor.u32 %v1405, %v1408
      %v1411 = vshrl.u32 %v1121, 16
      %v1413 = vrot.slane %v1411, 3
      %v1414 = vshll.u32 %v1121, 16
      %v1416 = vrot.slane %v1414, 4
      %v1417 = vor.u32 %v1413, %v1416
      %v1418 = vsel %vm764, %v1409, %v1417
      %v1420 = vshrl.u32 %v1118, 16
      %v1422 = vrot.slane %v1420, 3
      %v1423 = vshll.u32 %v1118, 16
      %v1425 = vrot.slane %v1423, 4
      %v1426 = vor.u32 %v1422, %v1425
      %v1428 = vshrl.u32 %v1124, 16
      %v1430 = vrot.slane %v1428, 3
      %v1431 = vshll.u32 %v1124, 16
      %v1433 = vrot.slane %v1431, 4
      %v1434 = vor.u32 %v1430, %v1433
      %v1435 = vsel %vm764, %v1426, %v1434
      %v1437 = vshrl.u32 %v1278, 16
      %v1439 = vrot.slane %v1437, 3
      %v1440 = vshll.u32 %v1278, 16
      %v1442 = vrot.slane %v1440, 4
      %v1443 = vor.u32 %v1439, %v1442
      %v1445 = vshrl.u32 %v1277, 16
      %v1447 = vrot.slane %v1445, 3
      %v1448 = vshll.u32 %v1277, 16
      %v1450 = vrot.slane %v1448, 4
      %v1451 = vor.u32 %v1447, %v1450
      %v1452 = vsel %vm764, %v1443, %v1451
      %v1454 = vshrl.u32 %v1281, 16
      %v1456 = vrot.slane %v1454, 3
      %v1457 = vshll.u32 %v1281, 16
      %v1459 = vrot.slane %v1457, 4
      %v1460 = vor.u32 %v1456, %v1459
      %v1462 = vshrl.u32 %v1280, 16
      %v1464 = vrot.slane %v1462, 3
      %v1465 = vshll.u32 %v1280, 16
      %v1467 = vrot.slane %v1465, 4
      %v1468 = vor.u32 %v1464, %v1467
      %v1469 = vsel %vm764, %v1460, %v1468
      %v1470 = vrot.slane %v1126, 3
      %v1471 = vrot.slane %v1128, 4
      %v1472 = vor.u32 %v1470, %v1471
      %v1473 = vrot.slane %v1149, 3
      %v1474 = vrot.slane %v1133, 4
      %v1475 = vor.u32 %v1473, %v1474
      %v1476 = vsel %vm764, %v1472, %v1475
      %v1477 = vrot.slane %v1138, 3
      %v1478 = vrot.slane %v1140, 4
      %v1479 = vor.u32 %v1477, %v1478
      %v1480 = vrot.slane %v1152, 3
      %v1481 = vrot.slane %v1145, 4
      %v1482 = vor.u32 %v1480, %v1481
      %v1483 = vsel %vm764, %v1479, %v1482
      %v1485 = vshrl.u32 %v1136, 16
      %v1487 = vrot.slane %v1485, 3
      %v1488 = vshll.u32 %v1136, 16
      %v1490 = vrot.slane %v1488, 4
      %v1491 = vor.u32 %v1487, %v1490
      %v1493 = vshrl.u32 %v1151, 16
      %v1495 = vrot.slane %v1493, 3
      %v1496 = vshll.u32 %v1151, 16
      %v1498 = vrot.slane %v1496, 4
      %v1499 = vor.u32 %v1495, %v1498
      %v1500 = vsel %vm764, %v1491, %v1499
      %v1502 = vshrl.u32 %v1148, 16
      %v1504 = vrot.slane %v1502, 3
      %v1505 = vshll.u32 %v1148, 16
      %v1507 = vrot.slane %v1505, 4
      %v1508 = vor.u32 %v1504, %v1507
      %v1510 = vshrl.u32 %v1154, 16
      %v1512 = vrot.slane %v1510, 3
      %v1513 = vshll.u32 %v1154, 16
      %v1515 = vrot.slane %v1513, 4
      %v1516 = vor.u32 %v1512, %v1515
      %v1517 = vsel %vm764, %v1508, %v1516
      %v1519 = vshrl.u32 %v1284, 16
      %v1521 = vrot.slane %v1519, 3
      %v1522 = vshll.u32 %v1284, 16
      %v1524 = vrot.slane %v1522, 4
      %v1525 = vor.u32 %v1521, %v1524
      %v1527 = vshrl.u32 %v1283, 16
      %v1529 = vrot.slane %v1527, 3
      %v1530 = vshll.u32 %v1283, 16
      %v1532 = vrot.slane %v1530, 4
      %v1533 = vor.u32 %v1529, %v1532
      %v1534 = vsel %vm764, %v1525, %v1533
      %v1536 = vshrl.u32 %v1287, 16
      %v1538 = vrot.slane %v1536, 3
      %v1539 = vshll.u32 %v1287, 16
      %v1541 = vrot.slane %v1539, 4
      %v1542 = vor.u32 %v1538, %v1541
      %v1544 = vshrl.u32 %v1286, 16
      %v1546 = vrot.slane %v1544, 3
      %v1547 = vshll.u32 %v1286, 16
      %v1549 = vrot.slane %v1547, 4
      %v1550 = vor.u32 %v1546, %v1549
      %v1551 = vsel %vm764, %v1542, %v1550
      %v1552 = vrot.slane %v1156, 3
      %v1553 = vrot.slane %v1158, 4
      %v1554 = vor.u32 %v1552, %v1553
      %v1555 = vrot.slane %v1179, 3
      %v1556 = vrot.slane %v1163, 4
      %v1557 = vor.u32 %v1555, %v1556
      %v1558 = vsel %vm764, %v1554, %v1557
      %v1559 = vrot.slane %v1168, 3
      %v1560 = vrot.slane %v1170, 4
      %v1561 = vor.u32 %v1559, %v1560
      %v1562 = vrot.slane %v1182, 3
      %v1563 = vrot.slane %v1175, 4
      %v1564 = vor.u32 %v1562, %v1563
      %v1565 = vsel %vm764, %v1561, %v1564
      %v1567 = vshrl.u32 %v1166, 16
      %v1569 = vrot.slane %v1567, 3
      %v1570 = vshll.u32 %v1166, 16
      %v1572 = vrot.slane %v1570, 4
      %v1573 = vor.u32 %v1569, %v1572
      %v1575 = vshrl.u32 %v1181, 16
      %v1577 = vrot.slane %v1575, 3
      %v1578 = vshll.u32 %v1181, 16
      %v1580 = vrot.slane %v1578, 4
      %v1581 = vor.u32 %v1577, %v1580
      %v1582 = vsel %vm764, %v1573, %v1581
      %v1584 = vshrl.u32 %v1178, 16
      %v1586 = vrot.slane %v1584, 3
      %v1587 = vshll.u32 %v1178, 16
      %v1589 = vrot.slane %v1587, 4
      %v1590 = vor.u32 %v1586, %v1589
      %v1592 = vshrl.u32 %v1184, 16
      %v1594 = vrot.slane %v1592, 3
      %v1595 = vshll.u32 %v1184, 16
      %v1597 = vrot.slane %v1595, 4
      %v1598 = vor.u32 %v1594, %v1597
      %v1599 = vsel %vm764, %v1590, %v1598
      %v1601 = vshrl.u32 %v1290, 16
      %v1603 = vrot.slane %v1601, 3
      %v1604 = vshll.u32 %v1290, 16
      %v1606 = vrot.slane %v1604, 4
      %v1607 = vor.u32 %v1603, %v1606
      %v1609 = vshrl.u32 %v1289, 16
      %v1611 = vrot.slane %v1609, 3
      %v1612 = vshll.u32 %v1289, 16
      %v1614 = vrot.slane %v1612, 4
      %v1615 = vor.u32 %v1611, %v1614
      %v1616 = vsel %vm764, %v1607, %v1615
      %v1618 = vshrl.u32 %v1293, 16
      %v1620 = vrot.slane %v1618, 3
      %v1621 = vshll.u32 %v1293, 16
      %v1623 = vrot.slane %v1621, 4
      %v1624 = vor.u32 %v1620, %v1623
      %v1626 = vshrl.u32 %v1292, 16
      %v1628 = vrot.slane %v1626, 3
      %v1629 = vshll.u32 %v1292, 16
      %v1631 = vrot.slane %v1629, 4
      %v1632 = vor.u32 %v1628, %v1631
      %v1633 = vsel %vm764, %v1624, %v1632
      %v1634 = vrot.slane %v1186, 3
      %v1635 = vrot.slane %v1188, 4
      %v1636 = vor.u32 %v1634, %v1635
      %v1637 = vrot.slane %v1209, 3
      %v1638 = vrot.slane %v1193, 4
      %v1639 = vor.u32 %v1637, %v1638
      %v1640 = vsel %vm764, %v1636, %v1639
      %v1641 = vrot.slane %v1198, 3
      %v1642 = vrot.slane %v1200, 4
      %v1643 = vor.u32 %v1641, %v1642
      %v1644 = vrot.slane %v1212, 3
      %v1645 = vrot.slane %v1205, 4
      %v1646 = vor.u32 %v1644, %v1645
      %v1647 = vsel %vm764, %v1643, %v1646
      %v1649 = vshrl.u32 %v1196, 16
      %v1651 = vrot.slane %v1649, 3
      %v1652 = vshll.u32 %v1196, 16
      %v1654 = vrot.slane %v1652, 4
      %v1655 = vor.u32 %v1651, %v1654
      %v1657 = vshrl.u32 %v1211, 16
      %v1659 = vrot.slane %v1657, 3
      %v1660 = vshll.u32 %v1211, 16
      %v1662 = vrot.slane %v1660, 4
      %v1663 = vor.u32 %v1659, %v1662
      %v1664 = vsel %vm764, %v1655, %v1663
      %v1666 = vshrl.u32 %v1208, 16
      %v1668 = vrot.slane %v1666, 3
      %v1669 = vshll.u32 %v1208, 16
      %v1671 = vrot.slane %v1669, 4
      %v1672 = vor.u32 %v1668, %v1671
      %v1674 = vshrl.u32 %v1214, 16
      %v1676 = vrot.slane %v1674, 3
      %v1677 = vshll.u32 %v1214, 16
      %v1679 = vrot.slane %v1677, 4
      %v1680 = vor.u32 %v1676, %v1679
      %v1681 = vsel %vm764, %v1672, %v1680
      %v1683 = vshrl.u32 %v1296, 16
      %v1685 = vrot.slane %v1683, 3
      %v1686 = vshll.u32 %v1296, 16
      %v1688 = vrot.slane %v1686, 4
      %v1689 = vor.u32 %v1685, %v1688
      %v1691 = vshrl.u32 %v1295, 16
      %v1693 = vrot.slane %v1691, 3
      %v1694 = vshll.u32 %v1295, 16
      %v1696 = vrot.slane %v1694, 4
      %v1697 = vor.u32 %v1693, %v1696
      %v1698 = vsel %vm764, %v1689, %v1697
      %v1700 = vshrl.u32 %v1299, 16
      %v1702 = vrot.slane %v1700, 3
      %v1703 = vshll.u32 %v1299, 16
      %v1705 = vrot.slane %v1703, 4
      %v1706 = vor.u32 %v1702, %v1705
      %v1708 = vshrl.u32 %v1298, 16
      %v1710 = vrot.slane %v1708, 3
      %v1711 = vshll.u32 %v1298, 16
      %v1713 = vrot.slane %v1711, 4
      %v1714 = vor.u32 %v1710, %v1713
      %v1715 = vsel %vm764, %v1706, %v1714
      %v1716 = vrot.slane %v1216, 3
      %v1717 = vrot.slane %v1218, 4
      %v1718 = vor.u32 %v1716, %v1717
      %v1719 = vrot.slane %v1239, 3
      %v1720 = vrot.slane %v1223, 4
      %v1721 = vor.u32 %v1719, %v1720
      %v1722 = vsel %vm764, %v1718, %v1721
      %v1723 = vrot.slane %v1228, 3
      %v1724 = vrot.slane %v1230, 4
      %v1725 = vor.u32 %v1723, %v1724
      %v1726 = vrot.slane %v1242, 3
      %v1727 = vrot.slane %v1235, 4
      %v1728 = vor.u32 %v1726, %v1727
      %v1729 = vsel %vm764, %v1725, %v1728
      %v1731 = vshrl.u32 %v1226, 16
      %v1733 = vrot.slane %v1731, 3
      %v1734 = vshll.u32 %v1226, 16
      %v1736 = vrot.slane %v1734, 4
      %v1737 = vor.u32 %v1733, %v1736
      %v1739 = vshrl.u32 %v1241, 16
      %v1741 = vrot.slane %v1739, 3
      %v1742 = vshll.u32 %v1241, 16
      %v1744 = vrot.slane %v1742, 4
      %v1745 = vor.u32 %v1741, %v1744
      %v1746 = vsel %vm764, %v1737, %v1745
      %v1748 = vshrl.u32 %v1238, 16
      %v1750 = vrot.slane %v1748, 3
      %v1751 = vshll.u32 %v1238, 16
      %v1753 = vrot.slane %v1751, 4
      %v1754 = vor.u32 %v1750, %v1753
      %v1756 = vshrl.u32 %v1244, 16
      %v1758 = vrot.slane %v1756, 3
      %v1759 = vshll.u32 %v1244, 16
      %v1761 = vrot.slane %v1759, 4
      %v1762 = vor.u32 %v1758, %v1761
      %v1763 = vsel %vm764, %v1754, %v1762
      %v1765 = vshrl.u32 %v1302, 16
      %v1767 = vrot.slane %v1765, 3
      %v1768 = vshll.u32 %v1302, 16
      %v1770 = vrot.slane %v1768, 4
      %v1771 = vor.u32 %v1767, %v1770
      %v1773 = vshrl.u32 %v1301, 16
      %v1775 = vrot.slane %v1773, 3
      %v1776 = vshll.u32 %v1301, 16
      %v1778 = vrot.slane %v1776, 4
      %v1779 = vor.u32 %v1775, %v1778
      %v1780 = vsel %vm764, %v1771, %v1779
      %v1782 = vshrl.u32 %v1305, 16
      %v1784 = vrot.slane %v1782, 3
      %v1785 = vshll.u32 %v1305, 16
      %v1787 = vrot.slane %v1785, 4
      %v1788 = vor.u32 %v1784, %v1787
      %v1790 = vshrl.u32 %v1304, 16
      %v1792 = vrot.slane %v1790, 3
      %v1793 = vshll.u32 %v1304, 16
      %v1795 = vrot.slane %v1793, 4
      %v1796 = vor.u32 %v1792, %v1795
      %v1797 = vsel %vm764, %v1788, %v1796
      %v1834 = vld [vmem:[%s6] sm:$0xf]
      %v1835 = vld [vmem:[%s6 + $0x4] sm:$0xf]
      %v1836 = vld [vmem:[%s6 + $0x8] sm:$0xf]
      %v1837 = vld [vmem:[%s6 + $0xc] sm:$0xf]
      %v1838 = vld [vmem:[%s6 + $0x10] sm:$0xf]
      %v1839 = vld [vmem:[%s6 + $0x14] sm:$0xf]
      %v1840 = vld [vmem:[%s6 + $0x18] sm:$0xf]
      %v1841 = vld [vmem:[%s6 + $0x1c] sm:$0xf]
      %v1842 = vld [vmem:[%s6 + $0x20] sm:$0xf]
      %v1843 = vld [vmem:[%s6 + $0x24] sm:$0xf]
      %v1844 = vld [vmem:[%s6 + $0x28] sm:$0xf]
      %v1845 = vld [vmem:[%s6 + $0x2c] sm:$0xf]
      %v1846 = vld [vmem:[%s6 + $0x30] sm:$0xf]
      %v1847 = vld [vmem:[%s6 + $0x34] sm:$0xf]
      %v1848 = vld [vmem:[%s6 + $0x38] sm:$0xf]
      %v1849 = vld [vmem:[%s6 + $0x3c] sm:$0xf]
      %v1850 = vld [vmem:[%s6 + $0x40] sm:$0xf]
      %v1851 = vld [vmem:[%s6 + $0x44] sm:$0xf]
      %v1852 = vld [vmem:[%s6 + $0x48] sm:$0xf]
      %v1853 = vld [vmem:[%s6 + $0x4c] sm:$0xf]
      %v1854 = vld [vmem:[%s6 + $0x50] sm:$0xf]
      %v1855 = vld [vmem:[%s6 + $0x54] sm:$0xf]
      %v1856 = vld [vmem:[%s6 + $0x58] sm:$0xf]
      %v1857 = vld [vmem:[%s6 + $0x5c] sm:$0xf]
      %v1858 = vld [vmem:[%s6 + $0x60] sm:$0xf]
      %v1859 = vld [vmem:[%s6 + $0x64] sm:$0xf]
      %v1860 = vld [vmem:[%s6 + $0x68] sm:$0xf]
      %v1861 = vld [vmem:[%s6 + $0x6c] sm:$0xf]
      %v1862 = vld [vmem:[%s6 + $0x70] sm:$0xf]
      %v1863 = vld [vmem:[%s6 + $0x74] sm:$0xf]
      %v1864 = vld [vmem:[%s6 + $0x78] sm:$0xf]
      %v1865 = vld [vmem:[%s6 + $0x7c] sm:$0xf]
      %v1866 = vld [vmem:[%s6 + $0x80] sm:$0xf]
      %v1867 = vld [vmem:[%s6 + $0x84] sm:$0xf]
      %v1868 = vld [vmem:[%s6 + $0x88] sm:$0xf]
      %v1869 = vld [vmem:[%s6 + $0x8c] sm:$0xf]
      %v1870 = vld [vmem:[%s6 + $0x90] sm:$0xf]
      %v1871 = vld [vmem:[%s6 + $0x94] sm:$0xf]
      %v1872 = vld [vmem:[%s6 + $0x98] sm:$0xf]
      %v1873 = vld [vmem:[%s6 + $0x9c] sm:$0xf]
      %v1874 = vld [vmem:[%s6 + $0xa0] sm:$0xf]
      %v1875 = vld [vmem:[%s6 + $0xa4] sm:$0xf]
      %v1876 = vld [vmem:[%s6 + $0xa8] sm:$0xf]
      %v1877 = vld [vmem:[%s6 + $0xac] sm:$0xf]
      %v1878 = vld [vmem:[%s6 + $0xb0] sm:$0xf]
      %v1879 = vld [vmem:[%s6 + $0xb4] sm:$0xf]
      %v1880 = vld [vmem:[%s6 + $0xb8] sm:$0xf]
      %v1881 = vld [vmem:[%s6 + $0xbc] sm:$0xf]
      %v1882 = vld [vmem:[%s6 + $0xc0] sm:$0xf]
      %v1883 = vld [vmem:[%s6 + $0xc4] sm:$0xf]
      %v1884 = vld [vmem:[%s6 + $0xc8] sm:$0xf]
      %v1885 = vld [vmem:[%s6 + $0xcc] sm:$0xf]
      %v1886 = vld [vmem:[%s6 + $0xd0] sm:$0xf]
      %v1887 = vld [vmem:[%s6 + $0xd4] sm:$0xf]
      %v1888 = vld [vmem:[%s6 + $0xd8] sm:$0xf]
      %v1889 = vld [vmem:[%s6 + $0xdc] sm:$0xf]
      %v1890 = vld [vmem:[%s6 + $0xe0] sm:$0xf]
      %v1891 = vld [vmem:[%s6 + $0xe4] sm:$0xf]
      %v1892 = vld [vmem:[%s6 + $0xe8] sm:$0xf]
      %v1893 = vld [vmem:[%s6 + $0xec] sm:$0xf]
      %v1894 = vld [vmem:[%s6 + $0xf0] sm:$0xf]
      %v1895 = vld [vmem:[%s6 + $0xf4] sm:$0xf]
      %v1896 = vld [vmem:[%s6 + $0xf8] sm:$0xf]
      %v1897 = vld [vmem:[%s6 + $0xfc] sm:$0xf]
      %v1898 = vld [vmem:[%s6 + $0x100] sm:$0xf]
      %v1899 = vld [vmem:[%s6 + $0x104] sm:$0xf]
      %v1900 = vld [vmem:[%s6 + $0x108] sm:$0xf]
      %v1901 = vld [vmem:[%s6 + $0x10c] sm:$0xf]
      %v1902 = vld [vmem:[%s6 + $0x110] sm:$0xf]
      %v1903 = vld [vmem:[%s6 + $0x114] sm:$0xf]
      %v1904 = vld [vmem:[%s6 + $0x118] sm:$0xf]
      %v1905 = vld [vmem:[%s6 + $0x11c] sm:$0xf]
      %v1906 = vld [vmem:[%s6 + $0x120] sm:$0xf]
      %v1907 = vld [vmem:[%s6 + $0x124] sm:$0xf]
      %v1908 = vld [vmem:[%s6 + $0x128] sm:$0xf]
      %v1909 = vld [vmem:[%s6 + $0x12c] sm:$0xf]
      %v1910 = vld [vmem:[%s6 + $0x130] sm:$0xf]
      %v1911 = vld [vmem:[%s6 + $0x134] sm:$0xf]
      %v1912 = vld [vmem:[%s6 + $0x138] sm:$0xf]
      %v1913 = vld [vmem:[%s6 + $0x13c] sm:$0xf]
      %v1914 = vld [vmem:[%s6 + $0x140] sm:$0xf]
      %v1915 = vld [vmem:[%s6 + $0x144] sm:$0xf]
      %v1916 = vld [vmem:[%s6 + $0x148] sm:$0xf]
      %v1917 = vld [vmem:[%s6 + $0x14c] sm:$0xf]
      %v1918 = vld [vmem:[%s6 + $0x150] sm:$0xf]
      %v1919 = vld [vmem:[%s6 + $0x154] sm:$0xf]
      %v1920 = vld [vmem:[%s6 + $0x158] sm:$0xf]
      %v1921 = vld [vmem:[%s6 + $0x15c] sm:$0xf]
      %v1922 = vld [vmem:[%s6 + $0x160] sm:$0xf]
      %v1923 = vld [vmem:[%s6 + $0x164] sm:$0xf]
      %v1924 = vld [vmem:[%s6 + $0x168] sm:$0xf]
      %v1925 = vld [vmem:[%s6 + $0x16c] sm:$0xf]
      %v1926 = vld [vmem:[%s6 + $0x170] sm:$0xf]
      %v1927 = vld [vmem:[%s6 + $0x174] sm:$0xf]
      %v1928 = vld [vmem:[%s6 + $0x178] sm:$0xf]
      %v1929 = vld [vmem:[%s6 + $0x17c] sm:$0xf]
      %v1931 = vshrl.u32 %v1056, 16
      %v1933 = vshll.u32 %v1056, 16
      %v1935 = vrot.slane %v1933, 1
      %v1936 = vor.u32 %v1931, %v1935
      %v1938 = vshll.u32 %v1058, 16
      %v1940 = vrot.slane %v1938, 1
      %v1941 = vsel %vm1064, %v1936, %v1940
      %v1943 = vshrl.u32 %v1057, 16
      %v1945 = vshll.u32 %v1057, 16
      %v1947 = vrot.slane %v1945, 1
      %v1948 = vor.u32 %v1943, %v1947
      %v1950 = vshll.u32 %v1059, 16
      %v1952 = vrot.slane %v1950, 1
      %v1953 = vsel %vm1064, %v1948, %v1952
      %v1954 = vshrl.u32 %v1058, 16
      %v1956 = vor.u32 %v1954, %v1940
      %v1957 = vshrl.u32 %v1059, 16
      %v1959 = vor.u32 %v1957, %v1952
      %v1964 = vrot.slane %v1056, 1
      %v1965 = vrot.slane %v1058, 1
      %v1966 = vsel %vm1269, %v1964, %v1965
      %v1967 = vrot.slane %v1057, 1
      %v1968 = vrot.slane %v1059, 1
      %v1969 = vsel %vm1269, %v1967, %v1968
      %v1970 = vrot.slane %v1931, 3
      %v1971 = vrot.slane %v1933, 4
      %v1972 = vor.u32 %v1970, %v1971
      %v1973 = vrot.slane %v1954, 3
      %v1974 = vrot.slane %v1938, 4
      %v1975 = vor.u32 %v1973, %v1974
      %v1976 = vsel %vm764, %v1972, %v1975
      %v1977 = vrot.slane %v1943, 3
      %v1978 = vrot.slane %v1945, 4
      %v1979 = vor.u32 %v1977, %v1978
      %v1980 = vrot.slane %v1957, 3
      %v1981 = vrot.slane %v1950, 4
      %v1982 = vor.u32 %v1980, %v1981
      %v1983 = vsel %vm764, %v1979, %v1982
      %v1985 = vshrl.u32 %v1941, 16
      %v1987 = vrot.slane %v1985, 3
      %v1988 = vshll.u32 %v1941, 16
      %v1990 = vrot.slane %v1988, 4
      %v1991 = vor.u32 %v1987, %v1990
      %v1993 = vshrl.u32 %v1956, 16
      %v1995 = vrot.slane %v1993, 3
      %v1996 = vshll.u32 %v1956, 16
      %v1998 = vrot.slane %v1996, 4
      %v1999 = vor.u32 %v1995, %v1998
      %v2000 = vsel %vm764, %v1991, %v1999
      %v2002 = vshrl.u32 %v1953, 16
      %v2004 = vrot.slane %v2002, 3
      %v2005 = vshll.u32 %v1953, 16
      %v2007 = vrot.slane %v2005, 4
      %v2008 = vor.u32 %v2004, %v2007
      %v2010 = vshrl.u32 %v1959, 16
      %v2012 = vrot.slane %v2010, 3
      %v2013 = vshll.u32 %v1959, 16
      %v2015 = vrot.slane %v2013, 4
      %v2016 = vor.u32 %v2012, %v2015
      %v2017 = vsel %vm764, %v2008, %v2016
      %v2019 = vshrl.u32 %v1966, 16
      %v2021 = vrot.slane %v2019, 3
      %v2022 = vshll.u32 %v1966, 16
      %v2024 = vrot.slane %v2022, 4
      %v2025 = vor.u32 %v2021, %v2024
      %v2027 = vshrl.u32 %v1965, 16
      %v2029 = vrot.slane %v2027, 3
      %v2030 = vshll.u32 %v1965, 16
      %v2032 = vrot.slane %v2030, 4
      %v2033 = vor.u32 %v2029, %v2032
      %v2034 = vsel %vm764, %v2025, %v2033
      %v2036 = vshrl.u32 %v1969, 16
      %v2038 = vrot.slane %v2036, 3
      %v2039 = vshll.u32 %v1969, 16
      %v2041 = vrot.slane %v2039, 4
      %v2042 = vor.u32 %v2038, %v2041
      %v2044 = vshrl.u32 %v1968, 16
      %v2046 = vrot.slane %v2044, 3
      %v2047 = vshll.u32 %v1968, 16
      %v2049 = vrot.slane %v2047, 4
      %v2050 = vor.u32 %v2046, %v2049
      %v2051 = vsel %vm764, %v2042, %v2050
      %s2058 = scalar_lea.vmem %s6, 384
      %v2059 = vld [vmem:[%s2058] sm:$0xf]
      %v2060 = vld [vmem:[%s2058 + $0x4] sm:$0xf]
      %v2061 = vld [vmem:[%s2058 + $0x8] sm:$0xf]
      %v2062 = vld [vmem:[%s2058 + $0xc] sm:$0xf]
      %v2063 = vld [vmem:[%s2058 + $0x10] sm:$0xf]
      %v2064 = vld [vmem:[%s2058 + $0x14] sm:$0xf]
      %v2065 = vld [vmem:[%s2058 + $0x18] sm:$0xf]
      %v2066 = vld [vmem:[%s2058 + $0x1c] sm:$0xf]
      %v2067 = vld [vmem:[%s2058 + $0x20] sm:$0xf]
      %v2068 = vld [vmem:[%s2058 + $0x24] sm:$0xf]
      %v2069 = vld [vmem:[%s2058 + $0x28] sm:$0xf]
      %v2070 = vld [vmem:[%s2058 + $0x2c] sm:$0xf]
      %v2071 = vld [vmem:[%s2058 + $0x30] sm:$0xf]
      %v2072 = vld [vmem:[%s2058 + $0x34] sm:$0xf]
      %v2073 = vld [vmem:[%s2058 + $0x38] sm:$0xf]
      %v2074 = vld [vmem:[%s2058 + $0x3c] sm:$0xf]
      %v2075 = vld [vmem:[%s2058 + $0x40] sm:$0xf]
      %v2076 = vld [vmem:[%s2058 + $0x44] sm:$0xf]
      %v2077 = vld [vmem:[%s2058 + $0x48] sm:$0xf]
      %v2078 = vld [vmem:[%s2058 + $0x4c] sm:$0xf]
      %v2079 = vld [vmem:[%s2058 + $0x50] sm:$0xf]
      %v2080 = vld [vmem:[%s2058 + $0x54] sm:$0xf]
      %v2081 = vld [vmem:[%s2058 + $0x58] sm:$0xf]
      %v2082 = vld [vmem:[%s2058 + $0x5c] sm:$0xf]
      %v2083 = vld [vmem:[%s2058 + $0x60] sm:$0xf]
      %v2084 = vld [vmem:[%s2058 + $0x64] sm:$0xf]
      %v2085 = vld [vmem:[%s2058 + $0x68] sm:$0xf]
      %v2086 = vld [vmem:[%s2058 + $0x6c] sm:$0xf]
      %v2087 = vld [vmem:[%s2058 + $0x70] sm:$0xf]
      %v2088 = vld [vmem:[%s2058 + $0x74] sm:$0xf]
      %v2089 = vld [vmem:[%s2058 + $0x78] sm:$0xf]
      %v2090 = vld [vmem:[%s2058 + $0x7c] sm:$0xf]
      %v2091 = vld [vmem:[%s2058 + $0x80] sm:$0xf]
      %v2092 = vld [vmem:[%s2058 + $0x84] sm:$0xf]
      %v2093 = vld [vmem:[%s2058 + $0x88] sm:$0xf]
      %v2094 = vld [vmem:[%s2058 + $0x8c] sm:$0xf]
      %v2095 = vld [vmem:[%s2058 + $0x90] sm:$0xf]
      %v2096 = vld [vmem:[%s2058 + $0x94] sm:$0xf]
      %v2097 = vld [vmem:[%s2058 + $0x98] sm:$0xf]
      %v2098 = vld [vmem:[%s2058 + $0x9c] sm:$0xf]
      %v2099 = vld [vmem:[%s2058 + $0xa0] sm:$0xf]
      %v2100 = vld [vmem:[%s2058 + $0xa4] sm:$0xf]
      %v2101 = vld [vmem:[%s2058 + $0xa8] sm:$0xf]
      %v2102 = vld [vmem:[%s2058 + $0xac] sm:$0xf]
      %v2103 = vld [vmem:[%s2058 + $0xb0] sm:$0xf]
      %v2104 = vld [vmem:[%s2058 + $0xb4] sm:$0xf]
      %v2105 = vld [vmem:[%s2058 + $0xb8] sm:$0xf]
      %v2106 = vld [vmem:[%s2058 + $0xbc] sm:$0xf]
      %v2107 = vld [vmem:[%s2058 + $0xc0] sm:$0xf]
      %v2108 = vld [vmem:[%s2058 + $0xc4] sm:$0xf]
      %v2109 = vld [vmem:[%s2058 + $0xc8] sm:$0xf]
      %v2110 = vld [vmem:[%s2058 + $0xcc] sm:$0xf]
      %v2111 = vld [vmem:[%s2058 + $0xd0] sm:$0xf]
      %v2112 = vld [vmem:[%s2058 + $0xd4] sm:$0xf]
      %v2113 = vld [vmem:[%s2058 + $0xd8] sm:$0xf]
      %v2114 = vld [vmem:[%s2058 + $0xdc] sm:$0xf]
      %v2115 = vld [vmem:[%s2058 + $0xe0] sm:$0xf]
      %v2116 = vld [vmem:[%s2058 + $0xe4] sm:$0xf]
      %v2117 = vld [vmem:[%s2058 + $0xe8] sm:$0xf]
      %v2118 = vld [vmem:[%s2058 + $0xec] sm:$0xf]
      %v2119 = vld [vmem:[%s2058 + $0xf0] sm:$0xf]
      %v2120 = vld [vmem:[%s2058 + $0xf4] sm:$0xf]
      %v2121 = vld [vmem:[%s2058 + $0xf8] sm:$0xf]
      %v2122 = vld [vmem:[%s2058 + $0xfc] sm:$0xf]
      %v2123 = vld [vmem:[%s2058 + $0x100] sm:$0xf]
      %v2124 = vld [vmem:[%s2058 + $0x104] sm:$0xf]
      %v2125 = vld [vmem:[%s2058 + $0x108] sm:$0xf]
      %v2126 = vld [vmem:[%s2058 + $0x10c] sm:$0xf]
      %v2127 = vld [vmem:[%s2058 + $0x110] sm:$0xf]
      %v2128 = vld [vmem:[%s2058 + $0x114] sm:$0xf]
      %v2129 = vld [vmem:[%s2058 + $0x118] sm:$0xf]
      %v2130 = vld [vmem:[%s2058 + $0x11c] sm:$0xf]
      %v2131 = vld [vmem:[%s2058 + $0x120] sm:$0xf]
      %v2132 = vld [vmem:[%s2058 + $0x124] sm:$0xf]
      %v2133 = vld [vmem:[%s2058 + $0x128] sm:$0xf]
      %v2134 = vld [vmem:[%s2058 + $0x12c] sm:$0xf]
      %v2135 = vld [vmem:[%s2058 + $0x130] sm:$0xf]
      %v2136 = vld [vmem:[%s2058 + $0x134] sm:$0xf]
      %v2137 = vld [vmem:[%s2058 + $0x138] sm:$0xf]
      %v2138 = vld [vmem:[%s2058 + $0x13c] sm:$0xf]
      %v2139 = vld [vmem:[%s2058 + $0x140] sm:$0xf]
      %v2140 = vld [vmem:[%s2058 + $0x144] sm:$0xf]
      %v2141 = vld [vmem:[%s2058 + $0x148] sm:$0xf]
      %v2142 = vld [vmem:[%s2058 + $0x14c] sm:$0xf]
      %v2143 = vld [vmem:[%s2058 + $0x150] sm:$0xf]
      %v2144 = vld [vmem:[%s2058 + $0x154] sm:$0xf]
      %v2145 = vld [vmem:[%s2058 + $0x158] sm:$0xf]
      %v2146 = vld [vmem:[%s2058 + $0x15c] sm:$0xf]
      %v2147 = vld [vmem:[%s2058 + $0x160] sm:$0xf]
      %v2148 = vld [vmem:[%s2058 + $0x164] sm:$0xf]
      %v2149 = vld [vmem:[%s2058 + $0x168] sm:$0xf]
      %v2150 = vld [vmem:[%s2058 + $0x16c] sm:$0xf]
      %v2151 = vld [vmem:[%s2058 + $0x170] sm:$0xf]
      %v2152 = vld [vmem:[%s2058 + $0x174] sm:$0xf]
      %v2153 = vld [vmem:[%s2058 + $0x178] sm:$0xf]
      %v2154 = vld [vmem:[%s2058 + $0x17c] sm:$0xf]
      %v2251 = vunpack.c.l.b16 %v2059
      %v2252 = vunpack.c.l.b16 %v2060
      %v2253 = vunpack.c.l.b16 %v2061
      %v2254 = vunpack.c.l.b16 %v2062
      %v2255 = vunpack.c.l.b16 %v2063
      %v2256 = vunpack.c.l.b16 %v2064
      %v2257 = vunpack.c.l.b16 %v2065
      %v2258 = vunpack.c.l.b16 %v2066
      %v2259 = vunpack.c.l.b16 %v2067
      %v2260 = vunpack.c.l.b16 %v2068
      %v2261 = vunpack.c.l.b16 %v2069
      %v2262 = vunpack.c.l.b16 %v2070
      %v2263 = vunpack.c.l.b16 %v2071
      %v2264 = vunpack.c.l.b16 %v2072
      %v2265 = vunpack.c.l.b16 %v2073
      %v2266 = vunpack.c.l.b16 %v2074
      %v2267 = vunpack.c.l.b16 %v2075
      %v2268 = vunpack.c.l.b16 %v2076
      %v2269 = vunpack.c.l.b16 %v2077
      %v2270 = vunpack.c.l.b16 %v2078
      %v2271 = vunpack.c.l.b16 %v2079
      %v2272 = vunpack.c.l.b16 %v2080
      %v2273 = vunpack.c.l.b16 %v2081
      %v2274 = vunpack.c.l.b16 %v2082
      %v2275 = vunpack.c.l.b16 %v2083
      %v2276 = vunpack.c.l.b16 %v2084
      %v2277 = vunpack.c.l.b16 %v2085
      %v2278 = vunpack.c.l.b16 %v2086
      %v2279 = vunpack.c.l.b16 %v2087
      %v2280 = vunpack.c.l.b16 %v2088
      %v2281 = vunpack.c.l.b16 %v2089
      %v2282 = vunpack.c.l.b16 %v2090
      %v2283 = vunpack.c.l.b16 %v2091
      %v2284 = vunpack.c.l.b16 %v2092
      %v2285 = vunpack.c.l.b16 %v2093
      %v2286 = vunpack.c.l.b16 %v2094
      %v2287 = vunpack.c.l.b16 %v2095
      %v2288 = vunpack.c.l.b16 %v2096
      %v2289 = vunpack.c.l.b16 %v2097
      %v2290 = vunpack.c.l.b16 %v2098
      %v2291 = vunpack.c.l.b16 %v2099
      %v2292 = vunpack.c.l.b16 %v2100
      %v2293 = vunpack.c.l.b16 %v2101
      %v2294 = vunpack.c.l.b16 %v2102
      %v2295 = vunpack.c.l.b16 %v2103
      %v2296 = vunpack.c.l.b16 %v2104
      %v2297 = vunpack.c.l.b16 %v2105
      %v2298 = vunpack.c.l.b16 %v2106
      %v2299 = vunpack.c.l.b16 %v2107
      %v2300 = vunpack.c.l.b16 %v2108
      %v2301 = vunpack.c.l.b16 %v2109
      %v2302 = vunpack.c.l.b16 %v2110
      %v2303 = vunpack.c.l.b16 %v2111
      %v2304 = vunpack.c.l.b16 %v2112
      %v2305 = vunpack.c.l.b16 %v2113
      %v2306 = vunpack.c.l.b16 %v2114
      %v2307 = vunpack.c.l.b16 %v2115
      %v2308 = vunpack.c.l.b16 %v2116
      %v2309 = vunpack.c.l.b16 %v2117
      %v2310 = vunpack.c.l.b16 %v2118
      %v2311 = vunpack.c.l.b16 %v2119
      %v2312 = vunpack.c.l.b16 %v2120
      %v2313 = vunpack.c.l.b16 %v2121
      %v2314 = vunpack.c.l.b16 %v2122
      %v2315 = vunpack.c.l.b16 %v2123
      %v2316 = vunpack.c.l.b16 %v2124
      %v2317 = vunpack.c.l.b16 %v2125
      %v2318 = vunpack.c.l.b16 %v2126
      %v2319 = vunpack.c.l.b16 %v2127
      %v2320 = vunpack.c.l.b16 %v2128
      %v2321 = vunpack.c.l.b16 %v2129
      %v2322 = vunpack.c.l.b16 %v2130
      %v2323 = vunpack.c.l.b16 %v2131
      %v2324 = vunpack.c.l.b16 %v2132
      %v2325 = vunpack.c.l.b16 %v2133
      %v2326 = vunpack.c.l.b16 %v2134
      %v2327 = vunpack.c.l.b16 %v2135
      %v2328 = vunpack.c.l.b16 %v2136
      %v2329 = vunpack.c.l.b16 %v2137
      %v2330 = vunpack.c.l.b16 %v2138
      %v2331 = vunpack.c.l.b16 %v2139
      %v2332 = vunpack.c.l.b16 %v2140
      %v2333 = vunpack.c.l.b16 %v2141
      %v2334 = vunpack.c.l.b16 %v2142
      %v2335 = vunpack.c.l.b16 %v2143
      %v2336 = vunpack.c.l.b16 %v2144
      %v2337 = vunpack.c.l.b16 %v2145
      %v2338 = vunpack.c.l.b16 %v2146
      %v2339 = vunpack.c.l.b16 %v2147
      %v2340 = vunpack.c.l.b16 %v2148
      %v2341 = vunpack.c.l.b16 %v2149
      %v2342 = vunpack.c.l.b16 %v2150
      %v2343 = vunpack.c.l.b16 %v2151
      %v2344 = vunpack.c.l.b16 %v2152
      %v2345 = vunpack.c.l.b16 %v2153
      %v2346 = vunpack.c.l.b16 %v2154
      %v2347 = vpack.c.b16 %v2252, %v2251
      %v2348 = vpack.c.b16 %v2254, %v2253
      %v2349 = vpack.c.b16 %v2256, %v2255
      %v2350 = vpack.c.b16 %v2258, %v2257
      %v2351 = vpack.c.b16 %v2260, %v2259
      %v2352 = vpack.c.b16 %v2262, %v2261
      %v2353 = vpack.c.b16 %v2264, %v2263
      %v2354 = vpack.c.b16 %v2266, %v2265
      %v2355 = vpack.c.b16 %v2268, %v2267
      %v2356 = vpack.c.b16 %v2270, %v2269
      %v2357 = vpack.c.b16 %v2272, %v2271
      %v2358 = vpack.c.b16 %v2274, %v2273
      %v2359 = vpack.c.b16 %v2276, %v2275
      %v2360 = vpack.c.b16 %v2278, %v2277
      %v2361 = vpack.c.b16 %v2280, %v2279
      %v2362 = vpack.c.b16 %v2282, %v2281
      %v2363 = vpack.c.b16 %v2284, %v2283
      %v2364 = vpack.c.b16 %v2286, %v2285
      %v2365 = vpack.c.b16 %v2288, %v2287
      %v2366 = vpack.c.b16 %v2290, %v2289
      %v2367 = vpack.c.b16 %v2292, %v2291
      %v2368 = vpack.c.b16 %v2294, %v2293
      %v2369 = vpack.c.b16 %v2296, %v2295
      %v2370 = vpack.c.b16 %v2298, %v2297
      %v2371 = vpack.c.b16 %v2300, %v2299
      %v2372 = vpack.c.b16 %v2302, %v2301
      %v2373 = vpack.c.b16 %v2304, %v2303
      %v2374 = vpack.c.b16 %v2306, %v2305
      %v2375 = vpack.c.b16 %v2308, %v2307
      %v2376 = vpack.c.b16 %v2310, %v2309
      %v2377 = vpack.c.b16 %v2312, %v2311
      %v2378 = vpack.c.b16 %v2314, %v2313
      %v2379 = vpack.c.b16 %v2316, %v2315
      %v2380 = vpack.c.b16 %v2318, %v2317
      %v2381 = vpack.c.b16 %v2320, %v2319
      %v2382 = vpack.c.b16 %v2322, %v2321
      %v2383 = vpack.c.b16 %v2324, %v2323
      %v2384 = vpack.c.b16 %v2326, %v2325
      %v2385 = vpack.c.b16 %v2328, %v2327
      %v2386 = vpack.c.b16 %v2330, %v2329
      %v2387 = vpack.c.b16 %v2332, %v2331
      %v2388 = vpack.c.b16 %v2334, %v2333
      %v2389 = vpack.c.b16 %v2336, %v2335
      %v2390 = vpack.c.b16 %v2338, %v2337
      %v2391 = vpack.c.b16 %v2340, %v2339
      %v2392 = vpack.c.b16 %v2342, %v2341
      %v2393 = vpack.c.b16 %v2344, %v2343
      %v2394 = vpack.c.b16 %v2346, %v2345
      %2443 = vmatprep.subr.bf16.mxu0 0
      %2444 = vmatpush1.bf16.msra.mxu0 %v2347
      %2445 = vmatprep.subr.bf16.mxu0 0
      %2446 = vmatpush1.bf16.msra.mxu0 %v2348
      %2447 = vmatprep.subr.bf16.mxu0 0
      %2448 = vmatpush1.bf16.msra.mxu0 %v2349
      %2449 = vmatprep.subr.bf16.mxu0 0
      %2450 = vmatpush1.bf16.msra.mxu0 %v2350
      %2451 = vmatprep.subr.bf16.mxu0 0
      %2452 = vmatpush1.bf16.msra.mxu0 %v2351
      %2453 = vmatprep.subr.bf16.mxu0 0
      %2454 = vmatpush1.bf16.msra.mxu0 %v2352
      %2455 = vmatprep.subr.bf16.mxu0 0
      %2456 = vmatpush1.bf16.msra.mxu0 %v2353
      %2457 = vmatprep.subr.bf16.mxu0 0
      %2458 = vmatpush1.bf16.msra.mxu0 %v2354
      %2459 = vmatprep.subr.bf16.mxu0 0
      %2460 = vmatpush1.bf16.msra.mxu0 %v2355
      %2461 = vmatprep.subr.bf16.mxu0 0
      %2462 = vmatpush1.bf16.msra.mxu0 %v2356
      %2463 = vmatprep.subr.bf16.mxu0 0
      %2464 = vmatpush1.bf16.msra.mxu0 %v2357
      %2465 = vmatprep.subr.bf16.mxu0 0
      %2466 = vmatpush1.bf16.msra.mxu0 %v2358
      %2467 = vmatprep.subr.bf16.mxu0 0
      %2468 = vmatpush1.bf16.msra.mxu0 %v2359
      %2469 = vmatprep.subr.bf16.mxu0 0
      %2470 = vmatpush1.bf16.msra.mxu0 %v2360
      %2471 = vmatprep.subr.bf16.mxu0 0
      %2472 = vmatpush1.bf16.msra.mxu0 %v2361
      %2473 = vmatprep.subr.bf16.mxu0 0
      %2474 = vmatpush1.bf16.msra.mxu0 %v2362
      %2475 = vmatprep.mubr.bf16.mxu0 %v1401
      %2476 = vmatmul.mubr.bf16.gmra.mrb[0].mxu0 %v1394
      %v2477 = vpop.f32.mrb[0].mxu0
      %v2478 = vadd.f32 0.0, %v2477
      %v2479 = vpop.f32.mrb[0].mxu0
      %v2480 = vpop.f32.mrb[0].mxu0
      %v2481 = vadd.f32 0.0, %v2480
      %v2482 = vpop.f32.mrb[0].mxu0
      %2483 = vmatprep.mubr.bf16.mxu0 %v1483
      %2484 = vmatmul.mubr.bf16.gmra.mrb[0].mxu0 %v1476
      %v2485 = vpop.f32.mrb[0].mxu0
      %v2486 = vadd.f32 0.0, %v2485
      %v2487 = vpop.f32.mrb[0].mxu0
      %v2488 = vpop.f32.mrb[0].mxu0
      %v2489 = vadd.f32 0.0, %v2488
      %v2490 = vpop.f32.mrb[0].mxu0
      %2491 = vmatprep.mubr.bf16.mxu0 %v1565
      %2492 = vmatmul.mubr.bf16.gmra.mrb[0].mxu0 %v1558
      %v2493 = vpop.f32.mrb[0].mxu0
      %v2494 = vadd.f32 0.0, %v2493
      %v2495 = vpop.f32.mrb[0].mxu0
      %v2496 = vpop.f32.mrb[0].mxu0
      %v2497 = vadd.f32 0.0, %v2496
      %v2498 = vpop.f32.mrb[0].mxu0
      %2499 = vmatprep.mubr.bf16.mxu0 %v1647
      %2500 = vmatmul.mubr.bf16.gmra.mrb[0].mxu0 %v1640
      %v2501 = vpop.f32.mrb[0].mxu0
      %v2502 = vadd.f32 0.0, %v2501
      %v2503 = vpop.f32.mrb[0].mxu0
      %v2504 = vpop.f32.mrb[0].mxu0
      %v2505 = vadd.f32 0.0, %v2504
      %v2506 = vpop.f32.mrb[0].mxu0
      %2507 = vmatprep.mubr.bf16.mxu0 %v1729
      %2508 = vmatmul.mubr.bf16.gmra.mrb[0].mxu0 %v1722
      %v2509 = vpop.f32.mrb[0].mxu0
      %v2510 = vadd.f32 0.0, %v2509
      %v2511 = vpop.f32.mrb[0].mxu0
      %v2512 = vpop.f32.mrb[0].mxu0
      %v2513 = vadd.f32 0.0, %v2512
      %v2514 = vpop.f32.mrb[0].mxu0
      %2515 = vmatprep.mubr.bf16.mxu0 %v1983
      %2516 = vmatmul.mubr.bf16.gmra.mrb[0].mxu0 %v1976
      %v2517 = vpop.f32.mrb[0].mxu0
      %v2518 = vadd.f32 0.0, %v2517
      %v2519 = vpop.f32.mrb[0].mxu0
      %v2520 = vpop.f32.mrb[0].mxu0
      %v2521 = vadd.f32 0.0, %v2520
      %v2522 = vpop.f32.mrb[0].mxu0
      %2523 = vdwg.mxu0
      %2524 = vmatprep.subr.bf16.mxu0 0
      %2525 = vmatpush1.bf16.msra.mxu0 %v2363
      %2526 = vmatprep.subr.bf16.mxu0 0
      %2527 = vmatpush1.bf16.msra.mxu0 %v2364
      %2528 = vmatprep.subr.bf16.mxu0 0
      %2529 = vmatpush1.bf16.msra.mxu0 %v2365
      %2530 = vmatprep.subr.bf16.mxu0 0
      %2531 = vmatpush1.bf16.msra.mxu0 %v2366
      %2532 = vmatprep.subr.bf16.mxu0 0
      %2533 = vmatpush1.bf16.msra.mxu0 %v2367
      %2534 = vmatprep.subr.bf16.mxu0 0
      %2535 = vmatpush1.bf16.msra.mxu0 %v2368
      %2536 = vmatprep.subr.bf16.mxu0 0
      %2537 = vmatpush1.bf16.msra.mxu0 %v2369
      %2538 = vmatprep.subr.bf16.mxu0 0
      %2539 = vmatpush1.bf16.msra.mxu0 %v2370
      %2540 = vmatprep.subr.bf16.mxu0 0
      %2541 = vmatpush1.bf16.msra.mxu0 %v2371
      %2542 = vmatprep.subr.bf16.mxu0 0
      %2543 = vmatpush1.bf16.msra.mxu0 %v2372
      %2544 = vmatprep.subr.bf16.mxu0 0
      %2545 = vmatpush1.bf16.msra.mxu0 %v2373
      %2546 = vmatprep.subr.bf16.mxu0 0
      %2547 = vmatpush1.bf16.msra.mxu0 %v2374
      %2548 = vmatprep.subr.bf16.mxu0 0
      %2549 = vmatpush1.bf16.msra.mxu0 %v2375
      %2550 = vmatprep.subr.bf16.mxu0 0
      %2551 = vmatpush1.bf16.msra.mxu0 %v2376
      %2552 = vmatprep.subr.bf16.mxu0 0
      %2553 = vmatpush1.bf16.msra.mxu0 %v2377
      %2554 = vmatprep.subr.bf16.mxu0 0
      %2555 = vmatpush1.bf16.msra.mxu0 %v2378
      %2556 = vmatprep.mubr.bf16.mxu0 %v1435
      %2557 = vmatmul.mubr.bf16.gmra.mrb[0].mxu0 %v1418
      %v2558 = vpop.f32.mrb[0].mxu0
      %v2559 = vadd.f32 %v2478, %v2558
      %v2560 = vpop.f32.mrb[0].mxu0
      %v2561 = vpop.f32.mrb[0].mxu0
      %v2562 = vadd.f32 %v2481, %v2561
      %v2563 = vpop.f32.mrb[0].mxu0
      %2564 = vmatprep.mubr.bf16.mxu0 %v1517
      %2565 = vmatmul.mubr.bf16.gmra.mrb[0].mxu0 %v1500
      %v2566 = vpop.f32.mrb[0].mxu0
      %v2567 = vadd.f32 %v2486, %v2566
      %v2568 = vpop.f32.mrb[0].mxu0
      %v2569 = vpop.f32.mrb[0].mxu0
      %v2570 = vadd.f32 %v2489, %v2569
      %v2571 = vpop.f32.mrb[0].mxu0
      %2572 = vmatprep.mubr.bf16.mxu0 %v1599
      %2573 = vmatmul.mubr.bf16.gmra.mrb[0].mxu0 %v1582
      %v2574 = vpop.f32.mrb[0].mxu0
      %v2575 = vadd.f32 %v2494, %v2574
      %v2576 = vpop.f32.mrb[0].mxu0
      %v2577 = vpop.f32.mrb[0].mxu0
      %v2578 = vadd.f32 %v2497, %v2577
      %v2579 = vpop.f32.mrb[0].mxu0
      %2580 = vmatprep.mubr.bf16.mxu0 %v1681
      %2581 = vmatmul.mubr.bf16.gmra.mrb[0].mxu0 %v1664
      %v2582 = vpop.f32.mrb[0].mxu0
      %v2583 = vadd.f32 %v2502, %v2582
      %v2584 = vpop.f32.mrb[0].mxu0
      %v2585 = vpop.f32.mrb[0].mxu0
      %v2586 = vadd.f32 %v2505, %v2585
      %v2587 = vpop.f32.mrb[0].mxu0
      %2588 = vmatprep.mubr.bf16.mxu0 %v1763
      %2589 = vmatmul.mubr.bf16.gmra.mrb[0].mxu0 %v1746
      %v2590 = vpop.f32.mrb[0].mxu0
      %v2591 = vadd.f32 %v2510, %v2590
      %v2592 = vpop.f32.mrb[0].mxu0
      %v2593 = vpop.f32.mrb[0].mxu0
      %v2594 = vadd.f32 %v2513, %v2593
      %v2595 = vpop.f32.mrb[0].mxu0
      %2596 = vmatprep.mubr.bf16.mxu0 %v2017
      %2597 = vmatmul.mubr.bf16.gmra.mrb[0].mxu0 %v2000
      %v2598 = vpop.f32.mrb[0].mxu0
      %v2599 = vadd.f32 %v2518, %v2598
      %v2600 = vpop.f32.mrb[0].mxu0
      %v2601 = vpop.f32.mrb[0].mxu0
      %v2602 = vadd.f32 %v2521, %v2601
      %v2603 = vpop.f32.mrb[0].mxu0
      %2604 = vdwg.mxu0
      %2605 = vmatprep.subr.bf16.mxu0 0
      %2606 = vmatpush1.bf16.msra.mxu0 %v2379
      %2607 = vmatprep.subr.bf16.mxu0 0
      %2608 = vmatpush1.bf16.msra.mxu0 %v2380
      %2609 = vmatprep.subr.bf16.mxu0 0
      %2610 = vmatpush1.bf16.msra.mxu0 %v2381
      %2611 = vmatprep.subr.bf16.mxu0 0
      %2612 = vmatpush1.bf16.msra.mxu0 %v2382
      %2613 = vmatprep.subr.bf16.mxu0 0
      %2614 = vmatpush1.bf16.msra.mxu0 %v2383
      %2615 = vmatprep.subr.bf16.mxu0 0
      %2616 = vmatpush1.bf16.msra.mxu0 %v2384
      %2617 = vmatprep.subr.bf16.mxu0 0
      %2618 = vmatpush1.bf16.msra.mxu0 %v2385
      %2619 = vmatprep.subr.bf16.mxu0 0
      %2620 = vmatpush1.bf16.msra.mxu0 %v2386
      %2621 = vmatprep.subr.bf16.mxu0 0
      %2622 = vmatpush1.bf16.msra.mxu0 %v2387
      %2623 = vmatprep.subr.bf16.mxu0 0
      %2624 = vmatpush1.bf16.msra.mxu0 %v2388
      %2625 = vmatprep.subr.bf16.mxu0 0
      %2626 = vmatpush1.bf16.msra.mxu0 %v2389
      %2627 = vmatprep.subr.bf16.mxu0 0
      %2628 = vmatpush1.bf16.msra.mxu0 %v2390
      %2629 = vmatprep.subr.bf16.mxu0 0
      %2630 = vmatpush1.bf16.msra.mxu0 %v2391
      %2631 = vmatprep.subr.bf16.mxu0 0
      %2632 = vmatpush1.bf16.msra.mxu0 %v2392
      %2633 = vmatprep.subr.bf16.mxu0 0
      %2634 = vmatpush1.bf16.msra.mxu0 %v2393
      %2635 = vmatprep.subr.bf16.mxu0 0
      %2636 = vmatpush1.bf16.msra.mxu0 %v2394
      %2637 = vmatprep.mubr.bf16.mxu0 %v1469
      %2638 = vmatmul.mubr.bf16.gmra.mrb[0].mxu0 %v1452
      %v2639 = vpop.f32.mrb[0].mxu0
      %v2640 = vadd.f32 %v2559, %v2639
      %v2641 = vpop.f32.mrb[0].mxu0
      %v2642 = vpop.f32.mrb[0].mxu0
      %v2643 = vadd.f32 %v2562, %v2642
      %v2644 = vpop.f32.mrb[0].mxu0
      %2645 = vmatprep.mubr.bf16.mxu0 %v1551
      %2646 = vmatmul.mubr.bf16.gmra.mrb[0].mxu0 %v1534
      %v2647 = vpop.f32.mrb[0].mxu0
      %v2648 = vadd.f32 %v2567, %v2647
      %v2649 = vpop.f32.mrb[0].mxu0
      %v2650 = vpop.f32.mrb[0].mxu0
      %v2651 = vadd.f32 %v2570, %v2650
      %v2652 = vpop.f32.mrb[0].mxu0
      %2653 = vmatprep.mubr.bf16.mxu0 %v1633
      %2654 = vmatmul.mubr.bf16.gmra.mrb[0].mxu0 %v1616
      %v2655 = vpop.f32.mrb[0].mxu0
      %v2656 = vadd.f32 %v2575, %v2655
      %v2657 = vpop.f32.mrb[0].mxu0
      %v2658 = vpop.f32.mrb[0].mxu0
      %v2659 = vadd.f32 %v2578, %v2658
      %v2660 = vpop.f32.mrb[0].mxu0
      %2661 = vmatprep.mubr.bf16.mxu0 %v1715
      %2662 = vmatmul.mubr.bf16.gmra.mrb[0].mxu0 %v1698
      %v2663 = vpop.f32.mrb[0].mxu0
      %v2664 = vadd.f32 %v2583, %v2663
      %v2665 = vpop.f32.mrb[0].mxu0
      %v2666 = vpop.f32.mrb[0].mxu0
      %v2667 = vadd.f32 %v2586, %v2666
      %v2668 = vpop.f32.mrb[0].mxu0
      %2669 = vmatprep.mubr.bf16.mxu0 %v1797
      %2670 = vmatmul.mubr.bf16.gmra.mrb[0].mxu0 %v1780
      %v2671 = vpop.f32.mrb[0].mxu0
      %v2672 = vadd.f32 %v2591, %v2671
      %v2673 = vpop.f32.mrb[0].mxu0
      %v2674 = vpop.f32.mrb[0].mxu0
      %v2675 = vadd.f32 %v2594, %v2674
      %v2676 = vpop.f32.mrb[0].mxu0
      %2677 = vmatprep.mubr.bf16.mxu0 %v2051
      %2678 = vmatmul.mubr.bf16.gmra.mrb[0].mxu0 %v2034
      %v2679 = vpop.f32.mrb[0].mxu0
      %v2680 = vadd.f32 %v2599, %v2679
      %v2681 = vpop.f32.mrb[0].mxu0
      %v2682 = vpop.f32.mrb[0].mxu0
      %v2683 = vadd.f32 %v2602, %v2682
      %v2684 = vpop.f32.mrb[0].mxu0
      %2685 = vdwg.mxu0
      %v2782 = vunpack.c.l.b16 %v1834
      %v2783 = vunpack.c.l.b16 %v1835
      %v2784 = vunpack.c.l.b16 %v1836
      %v2785 = vunpack.c.l.b16 %v1837
      %v2786 = vunpack.c.l.b16 %v1838
      %v2787 = vunpack.c.l.b16 %v1839
      %v2788 = vunpack.c.l.b16 %v1840
      %v2789 = vunpack.c.l.b16 %v1841
      %v2790 = vunpack.c.l.b16 %v1842
      %v2791 = vunpack.c.l.b16 %v1843
      %v2792 = vunpack.c.l.b16 %v1844
      %v2793 = vunpack.c.l.b16 %v1845
      %v2794 = vunpack.c.l.b16 %v1846
      %v2795 = vunpack.c.l.b16 %v1847
      %v2796 = vunpack.c.l.b16 %v1848
      %v2797 = vunpack.c.l.b16 %v1849
      %v2798 = vunpack.c.l.b16 %v1850
      %v2799 = vunpack.c.l.b16 %v1851
      %v2800 = vunpack.c.l.b16 %v1852
      %v2801 = vunpack.c.l.b16 %v1853
      %v2802 = vunpack.c.l.b16 %v1854
      %v2803 = vunpack.c.l.b16 %v1855
      %v2804 = vunpack.c.l.b16 %v1856
      %v2805 = vunpack.c.l.b16 %v1857
      %v2806 = vunpack.c.l.b16 %v1858
      %v2807 = vunpack.c.l.b16 %v1859
      %v2808 = vunpack.c.l.b16 %v1860
      %v2809 = vunpack.c.l.b16 %v1861
      %v2810 = vunpack.c.l.b16 %v1862
      %v2811 = vunpack.c.l.b16 %v1863
      %v2812 = vunpack.c.l.b16 %v1864
      %v2813 = vunpack.c.l.b16 %v1865
      %v2814 = vunpack.c.l.b16 %v1866
      %v2815 = vunpack.c.l.b16 %v1867
      %v2816 = vunpack.c.l.b16 %v1868
      %v2817 = vunpack.c.l.b16 %v1869
      %v2818 = vunpack.c.l.b16 %v1870
      %v2819 = vunpack.c.l.b16 %v1871
      %v2820 = vunpack.c.l.b16 %v1872
      %v2821 = vunpack.c.l.b16 %v1873
      %v2822 = vunpack.c.l.b16 %v1874
      %v2823 = vunpack.c.l.b16 %v1875
      %v2824 = vunpack.c.l.b16 %v1876
      %v2825 = vunpack.c.l.b16 %v1877
      %v2826 = vunpack.c.l.b16 %v1878
      %v2827 = vunpack.c.l.b16 %v1879
      %v2828 = vunpack.c.l.b16 %v1880
      %v2829 = vunpack.c.l.b16 %v1881
      %v2830 = vunpack.c.l.b16 %v1882
      %v2831 = vunpack.c.l.b16 %v1883
      %v2832 = vunpack.c.l.b16 %v1884
      %v2833 = vunpack.c.l.b16 %v1885
      %v2834 = vunpack.c.l.b16 %v1886
      %v2835 = vunpack.c.l.b16 %v1887
      %v2836 = vunpack.c.l.b16 %v1888
      %v2837 = vunpack.c.l.b16 %v1889
      %v2838 = vunpack.c.l.b16 %v1890
      %v2839 = vunpack.c.l.b16 %v1891
      %v2840 = vunpack.c.l.b16 %v1892
      %v2841 = vunpack.c.l.b16 %v1893
      %v2842 = vunpack.c.l.b16 %v1894
      %v2843 = vunpack.c.l.b16 %v1895
      %v2844 = vunpack.c.l.b16 %v1896
      %v2845 = vunpack.c.l.b16 %v1897
      %v2846 = vunpack.c.l.b16 %v1898
      %v2847 = vunpack.c.l.b16 %v1899
      %v2848 = vunpack.c.l.b16 %v1900
      %v2849 = vunpack.c.l.b16 %v1901
      %v2850 = vunpack.c.l.b16 %v1902
      %v2851 = vunpack.c.l.b16 %v1903
      %v2852 = vunpack.c.l.b16 %v1904
      %v2853 = vunpack.c.l.b16 %v1905
      %v2854 = vunpack.c.l.b16 %v1906
      %v2855 = vunpack.c.l.b16 %v1907
      %v2856 = vunpack.c.l.b16 %v1908
      %v2857 = vunpack.c.l.b16 %v1909
      %v2858 = vunpack.c.l.b16 %v1910
      %v2859 = vunpack.c.l.b16 %v1911
      %v2860 = vunpack.c.l.b16 %v1912
      %v2861 = vunpack.c.l.b16 %v1913
      %v2862 = vunpack.c.l.b16 %v1914
      %v2863 = vunpack.c.l.b16 %v1915
      %v2864 = vunpack.c.l.b16 %v1916
      %v2865 = vunpack.c.l.b16 %v1917
      %v2866 = vunpack.c.l.b16 %v1918
      %v2867 = vunpack.c.l.b16 %v1919
      %v2868 = vunpack.c.l.b16 %v1920
      %v2869 = vunpack.c.l.b16 %v1921
      %v2870 = vunpack.c.l.b16 %v1922
      %v2871 = vunpack.c.l.b16 %v1923
      %v2872 = vunpack.c.l.b16 %v1924
      %v2873 = vunpack.c.l.b16 %v1925
      %v2874 = vunpack.c.l.b16 %v1926
      %v2875 = vunpack.c.l.b16 %v1927
      %v2876 = vunpack.c.l.b16 %v1928
      %v2877 = vunpack.c.l.b16 %v1929
      %v2878 = vpack.c.b16 %v2783, %v2782
      %v2879 = vpack.c.b16 %v2785, %v2784
      %v2880 = vpack.c.b16 %v2787, %v2786
      %v2881 = vpack.c.b16 %v2789, %v2788
      %v2882 = vpack.c.b16 %v2791, %v2790
      %v2883 = vpack.c.b16 %v2793, %v2792
      %v2884 = vpack.c.b16 %v2795, %v2794
      %v2885 = vpack.c.b16 %v2797, %v2796
      %v2886 = vpack.c.b16 %v2799, %v2798
      %v2887 = vpack.c.b16 %v2801, %v2800
      %v2888 = vpack.c.b16 %v2803, %v2802
      %v2889 = vpack.c.b16 %v2805, %v2804
      %v2890 = vpack.c.b16 %v2807, %v2806
      %v2891 = vpack.c.b16 %v2809, %v2808
      %v2892 = vpack.c.b16 %v2811, %v2810
      %v2893 = vpack.c.b16 %v2813, %v2812
      %v2894 = vpack.c.b16 %v2815, %v2814
      %v2895 = vpack.c.b16 %v2817, %v2816
      %v2896 = vpack.c.b16 %v2819, %v2818
      %v2897 = vpack.c.b16 %v2821, %v2820
      %v2898 = vpack.c.b16 %v2823, %v2822
      %v2899 = vpack.c.b16 %v2825, %v2824
      %v2900 = vpack.c.b16 %v2827, %v2826
      %v2901 = vpack.c.b16 %v2829, %v2828
      %v2902 = vpack.c.b16 %v2831, %v2830
      %v2903 = vpack.c.b16 %v2833, %v2832
      %v2904 = vpack.c.b16 %v2835, %v2834
      %v2905 = vpack.c.b16 %v2837, %v2836
      %v2906 = vpack.c.b16 %v2839, %v2838
      %v2907 = vpack.c.b16 %v2841, %v2840
      %v2908 = vpack.c.b16 %v2843, %v2842
      %v2909 = vpack.c.b16 %v2845, %v2844
      %v2910 = vpack.c.b16 %v2847, %v2846
      %v2911 = vpack.c.b16 %v2849, %v2848
      %v2912 = vpack.c.b16 %v2851, %v2850
      %v2913 = vpack.c.b16 %v2853, %v2852
      %v2914 = vpack.c.b16 %v2855, %v2854
      %v2915 = vpack.c.b16 %v2857, %v2856
      %v2916 = vpack.c.b16 %v2859, %v2858
      %v2917 = vpack.c.b16 %v2861, %v2860
      %v2918 = vpack.c.b16 %v2863, %v2862
      %v2919 = vpack.c.b16 %v2865, %v2864
      %v2920 = vpack.c.b16 %v2867, %v2866
      %v2921 = vpack.c.b16 %v2869, %v2868
      %v2922 = vpack.c.b16 %v2871, %v2870
      %v2923 = vpack.c.b16 %v2873, %v2872
      %v2924 = vpack.c.b16 %v2875, %v2874
      %v2925 = vpack.c.b16 %v2877, %v2876
      %2974 = vmatprep.subr.bf16.mxu0 0
      %2975 = vmatpush1.bf16.msra.mxu0 %v2878
      %2976 = vmatprep.subr.bf16.mxu0 0
      %2977 = vmatpush1.bf16.msra.mxu0 %v2879
      %2978 = vmatprep.subr.bf16.mxu0 0
      %2979 = vmatpush1.bf16.msra.mxu0 %v2880
      %2980 = vmatprep.subr.bf16.mxu0 0
      %2981 = vmatpush1.bf16.msra.mxu0 %v2881
      %2982 = vmatprep.subr.bf16.mxu0 0
      %2983 = vmatpush1.bf16.msra.mxu0 %v2882
      %2984 = vmatprep.subr.bf16.mxu0 0
      %2985 = vmatpush1.bf16.msra.mxu0 %v2883
      %2986 = vmatprep.subr.bf16.mxu0 0
      %2987 = vmatpush1.bf16.msra.mxu0 %v2884
      %2988 = vmatprep.subr.bf16.mxu0 0
      %2989 = vmatpush1.bf16.msra.mxu0 %v2885
      %2990 = vmatprep.subr.bf16.mxu0 0
      %2991 = vmatpush1.bf16.msra.mxu0 %v2886
      %2992 = vmatprep.subr.bf16.mxu0 0
      %2993 = vmatpush1.bf16.msra.mxu0 %v2887
      %2994 = vmatprep.subr.bf16.mxu0 0
      %2995 = vmatpush1.bf16.msra.mxu0 %v2888
      %2996 = vmatprep.subr.bf16.mxu0 0
      %2997 = vmatpush1.bf16.msra.mxu0 %v2889
      %2998 = vmatprep.subr.bf16.mxu0 0
      %2999 = vmatpush1.bf16.msra.mxu0 %v2890
      %3000 = vmatprep.subr.bf16.mxu0 0
      %3001 = vmatpush1.bf16.msra.mxu0 %v2891
      %3002 = vmatprep.subr.bf16.mxu0 0
      %3003 = vmatpush1.bf16.msra.mxu0 %v2892
      %3004 = vmatprep.subr.bf16.mxu0 0
      %3005 = vmatpush1.bf16.msra.mxu0 %v2893
      %3006 = vmatprep.mubr.bf16.mxu0 %v1319
      %3007 = vmatmul.mubr.bf16.gmra.mrb[0].mxu0 %v1312
      %v3008 = vpop.f32.mrb[0].mxu0
      %v3009 = vadd.f32 %v2640, %v3008
      %v3010 = vpop.f32.mrb[0].mxu0
      %v3011 = vpop.f32.mrb[0].mxu0
      %v3012 = vadd.f32 %v2643, %v3011
      %v3013 = vpop.f32.mrb[0].mxu0
      %3014 = vmatprep.mubr.bf16.mxu0 %v1401
      %3015 = vmatmul.mubr.bf16.gmra.mrb[0].mxu0 %v1394
      %v3016 = vpop.f32.mrb[0].mxu0
      %v3017 = vadd.f32 %v2648, %v3016
      %v3018 = vpop.f32.mrb[0].mxu0
      %v3019 = vpop.f32.mrb[0].mxu0
      %v3020 = vadd.f32 %v2651, %v3019
      %v3021 = vpop.f32.mrb[0].mxu0
      %3022 = vmatprep.mubr.bf16.mxu0 %v1483
      %3023 = vmatmul.mubr.bf16.gmra.mrb[0].mxu0 %v1476
      %v3024 = vpop.f32.mrb[0].mxu0
      %v3025 = vadd.f32 %v2656, %v3024
      %v3026 = vpop.f32.mrb[0].mxu0
      %v3027 = vpop.f32.mrb[0].mxu0
      %v3028 = vadd.f32 %v2659, %v3027
      %v3029 = vpop.f32.mrb[0].mxu0
      %3030 = vmatprep.mubr.bf16.mxu0 %v1565
      %3031 = vmatmul.mubr.bf16.gmra.mrb[0].mxu0 %v1558
      %v3032 = vpop.f32.mrb[0].mxu0
      %v3033 = vadd.f32 %v2664, %v3032
      %v3034 = vpop.f32.mrb[0].mxu0
      %v3035 = vpop.f32.mrb[0].mxu0
      %v3036 = vadd.f32 %v2667, %v3035
      %v3037 = vpop.f32.mrb[0].mxu0
      %3038 = vmatprep.mubr.bf16.mxu0 %v1647
      %3039 = vmatmul.mubr.bf16.gmra.mrb[0].mxu0 %v1640
      %v3040 = vpop.f32.mrb[0].mxu0
      %v3041 = vadd.f32 %v2672, %v3040
      %v3042 = vpop.f32.mrb[0].mxu0
      %v3043 = vpop.f32.mrb[0].mxu0
      %v3044 = vadd.f32 %v2675, %v3043
      %v3045 = vpop.f32.mrb[0].mxu0
      %3046 = vmatprep.mubr.bf16.mxu0 %v1729
      %3047 = vmatmul.mubr.bf16.gmra.mrb[0].mxu0 %v1722
      %v3048 = vpop.f32.mrb[0].mxu0
      %v3049 = vadd.f32 %v2680, %v3048
      %v3050 = vpop.f32.mrb[0].mxu0
      %v3051 = vpop.f32.mrb[0].mxu0
      %v3052 = vadd.f32 %v2683, %v3051
      %v3053 = vpop.f32.mrb[0].mxu0
      %3054 = vdwg.mxu0
      %3055 = vmatprep.subr.bf16.mxu0 0
      %3056 = vmatpush1.bf16.msra.mxu0 %v2894
      %3057 = vmatprep.subr.bf16.mxu0 0
      %3058 = vmatpush1.bf16.msra.mxu0 %v2895
      %3059 = vmatprep.subr.bf16.mxu0 0
      %3060 = vmatpush1.bf16.msra.mxu0 %v2896
      %3061 = vmatprep.subr.bf16.mxu0 0
      %3062 = vmatpush1.bf16.msra.mxu0 %v2897
      %3063 = vmatprep.subr.bf16.mxu0 0
      %3064 = vmatpush1.bf16.msra.mxu0 %v2898
      %3065 = vmatprep.subr.bf16.mxu0 0
      %3066 = vmatpush1.bf16.msra.mxu0 %v2899
      %3067 = vmatprep.subr.bf16.mxu0 0
      %3068 = vmatpush1.bf16.msra.mxu0 %v2900
      %3069 = vmatprep.subr.bf16.mxu0 0
      %3070 = vmatpush1.bf16.msra.mxu0 %v2901
      %3071 = vmatprep.subr.bf16.mxu0 0
      %3072 = vmatpush1.bf16.msra.mxu0 %v2902
      %3073 = vmatprep.subr.bf16.mxu0 0
      %3074 = vmatpush1.bf16.msra.mxu0 %v2903
      %3075 = vmatprep.subr.bf16.mxu0 0
      %3076 = vmatpush1.bf16.msra.mxu0 %v2904
      %3077 = vmatprep.subr.bf16.mxu0 0
      %3078 = vmatpush1.bf16.msra.mxu0 %v2905
      %3079 = vmatprep.subr.bf16.mxu0 0
      %3080 = vmatpush1.bf16.msra.mxu0 %v2906
      %3081 = vmatprep.subr.bf16.mxu0 0
      %3082 = vmatpush1.bf16.msra.mxu0 %v2907
      %3083 = vmatprep.subr.bf16.mxu0 0
      %3084 = vmatpush1.bf16.msra.mxu0 %v2908
      %3085 = vmatprep.subr.bf16.mxu0 0
      %3086 = vmatpush1.bf16.msra.mxu0 %v2909
      %3087 = vmatprep.mubr.bf16.mxu0 %v1353
      %3088 = vmatmul.mubr.bf16.gmra.mrb[0].mxu0 %v1336
      %v3089 = vpop.f32.mrb[0].mxu0
      %v3090 = vadd.f32 %v3009, %v3089
      %v3091 = vpop.f32.mrb[0].mxu0
      %v3092 = vpop.f32.mrb[0].mxu0
      %v3093 = vadd.f32 %v3012, %v3092
      %v3094 = vpop.f32.mrb[0].mxu0
      %3095 = vmatprep.mubr.bf16.mxu0 %v1435
      %3096 = vmatmul.mubr.bf16.gmra.mrb[0].mxu0 %v1418
      %v3097 = vpop.f32.mrb[0].mxu0
      %v3098 = vadd.f32 %v3017, %v3097
      %v3099 = vpop.f32.mrb[0].mxu0
      %v3100 = vpop.f32.mrb[0].mxu0
      %v3101 = vadd.f32 %v3020, %v3100
      %v3102 = vpop.f32.mrb[0].mxu0
      %3103 = vmatprep.mubr.bf16.mxu0 %v1517
      %3104 = vmatmul.mubr.bf16.gmra.mrb[0].mxu0 %v1500
      %v3105 = vpop.f32.mrb[0].mxu0
      %v3106 = vadd.f32 %v3025, %v3105
      %v3107 = vpop.f32.mrb[0].mxu0
      %v3108 = vpop.f32.mrb[0].mxu0
      %v3109 = vadd.f32 %v3028, %v3108
      %v3110 = vpop.f32.mrb[0].mxu0
      %3111 = vmatprep.mubr.bf16.mxu0 %v1599
      %3112 = vmatmul.mubr.bf16.gmra.mrb[0].mxu0 %v1582
      %v3113 = vpop.f32.mrb[0].mxu0
      %v3114 = vadd.f32 %v3033, %v3113
      %v3115 = vpop.f32.mrb[0].mxu0
      %v3116 = vpop.f32.mrb[0].mxu0
      %v3117 = vadd.f32 %v3036, %v3116
      %v3118 = vpop.f32.mrb[0].mxu0
      %3119 = vmatprep.mubr.bf16.mxu0 %v1681
      %3120 = vmatmul.mubr.bf16.gmra.mrb[0].mxu0 %v1664
      %v3121 = vpop.f32.mrb[0].mxu0
      %v3122 = vadd.f32 %v3041, %v3121
      %v3123 = vpop.f32.mrb[0].mxu0
      %v3124 = vpop.f32.mrb[0].mxu0
      %v3125 = vadd.f32 %v3044, %v3124
      %v3126 = vpop.f32.mrb[0].mxu0
      %3127 = vmatprep.mubr.bf16.mxu0 %v1763
      %3128 = vmatmul.mubr.bf16.gmra.mrb[0].mxu0 %v1746
      %v3129 = vpop.f32.mrb[0].mxu0
      %v3130 = vadd.f32 %v3049, %v3129
      %v3131 = vpop.f32.mrb[0].mxu0
      %v3132 = vpop.f32.mrb[0].mxu0
      %v3133 = vadd.f32 %v3052, %v3132
      %v3134 = vpop.f32.mrb[0].mxu0
      %3135 = vdwg.mxu0
      %3136 = vmatprep.subr.bf16.mxu0 0
      %3137 = vmatpush1.bf16.msra.mxu0 %v2910
      %3138 = vmatprep.subr.bf16.mxu0 0
      %3139 = vmatpush1.bf16.msra.mxu0 %v2911
      %3140 = vmatprep.subr.bf16.mxu0 0
      %3141 = vmatpush1.bf16.msra.mxu0 %v2912
      %3142 = vmatprep.subr.bf16.mxu0 0
      %3143 = vmatpush1.bf16.msra.mxu0 %v2913
      %3144 = vmatprep.subr.bf16.mxu0 0
      %3145 = vmatpush1.bf16.msra.mxu0 %v2914
      %3146 = vmatprep.subr.bf16.mxu0 0
      %3147 = vmatpush1.bf16.msra.mxu0 %v2915
      %3148 = vmatprep.subr.bf16.mxu0 0
      %3149 = vmatpush1.bf16.msra.mxu0 %v2916
      %3150 = vmatprep.subr.bf16.mxu0 0
      %3151 = vmatpush1.bf16.msra.mxu0 %v2917
      %3152 = vmatprep.subr.bf16.mxu0 0
      %3153 = vmatpush1.bf16.msra.mxu0 %v2918
      %3154 = vmatprep.subr.bf16.mxu0 0
      %3155 = vmatpush1.bf16.msra.mxu0 %v2919
      %3156 = vmatprep.subr.bf16.mxu0 0
      %3157 = vmatpush1.bf16.msra.mxu0 %v2920
      %3158 = vmatprep.subr.bf16.mxu0 0
      %3159 = vmatpush1.bf16.msra.mxu0 %v2921
      %3160 = vmatprep.subr.bf16.mxu0 0
      %3161 = vmatpush1.bf16.msra.mxu0 %v2922
      %3162 = vmatprep.subr.bf16.mxu0 0
      %3163 = vmatpush1.bf16.msra.mxu0 %v2923
      %3164 = vmatprep.subr.bf16.mxu0 0
      %3165 = vmatpush1.bf16.msra.mxu0 %v2924
      %3166 = vmatprep.subr.bf16.mxu0 0
      %3167 = vmatpush1.bf16.msra.mxu0 %v2925
      %3168 = vmatprep.mubr.bf16.mxu0 %v1387
      %3169 = vmatmul.mubr.bf16.gmra.mrb[0].mxu0 %v1370
      %v3170 = vpop.f32.mrb[0].mxu0
      %v3171 = vadd.f32 %v3090, %v3170
      %v3172 = vpop.f32.mrb[0].mxu0
      %v3173 = vpop.f32.mrb[0].mxu0
      %v3174 = vadd.f32 %v3093, %v3173
      %v3175 = vpop.f32.mrb[0].mxu0
      %3176 = vmatprep.mubr.bf16.mxu0 %v1469
      %3177 = vmatmul.mubr.bf16.gmra.mrb[0].mxu0 %v1452
      %v3178 = vpop.f32.mrb[0].mxu0
      %v3179 = vadd.f32 %v3098, %v3178
      %v3180 = vpop.f32.mrb[0].mxu0
      %v3181 = vpop.f32.mrb[0].mxu0
      %v3182 = vadd.f32 %v3101, %v3181
      %v3183 = vpop.f32.mrb[0].mxu0
      %3184 = vmatprep.mubr.bf16.mxu0 %v1551
      %3185 = vmatmul.mubr.bf16.gmra.mrb[0].mxu0 %v1534
      %v3186 = vpop.f32.mrb[0].mxu0
      %v3187 = vadd.f32 %v3106, %v3186
      %v3188 = vpop.f32.mrb[0].mxu0
      %v3189 = vpop.f32.mrb[0].mxu0
      %v3190 = vadd.f32 %v3109, %v3189
      %v3191 = vpop.f32.mrb[0].mxu0
      %3192 = vmatprep.mubr.bf16.mxu0 %v1633
      %3193 = vmatmul.mubr.bf16.gmra.mrb[0].mxu0 %v1616
      %v3194 = vpop.f32.mrb[0].mxu0
      %v3195 = vadd.f32 %v3114, %v3194
      %v3196 = vpop.f32.mrb[0].mxu0
      %v3197 = vpop.f32.mrb[0].mxu0
      %v3198 = vadd.f32 %v3117, %v3197
      %v3199 = vpop.f32.mrb[0].mxu0
      %3200 = vmatprep.mubr.bf16.mxu0 %v1715
      %3201 = vmatmul.mubr.bf16.gmra.mrb[0].mxu0 %v1698
      %v3202 = vpop.f32.mrb[0].mxu0
      %v3203 = vadd.f32 %v3122, %v3202
      %v3204 = vpop.f32.mrb[0].mxu0
      %v3205 = vpop.f32.mrb[0].mxu0
      %v3206 = vadd.f32 %v3125, %v3205
      %v3207 = vpop.f32.mrb[0].mxu0
      %3208 = vmatprep.mubr.bf16.mxu0 %v1797
      %3209 = vmatmul.mubr.bf16.gmra.mrb[0].mxu0 %v1780
      %v3210 = vpop.f32.mrb[0].mxu0
      %v3211 = vadd.f32 %v3130, %v3210
      %v3212 = vpop.f32.mrb[0].mxu0
      %v3213 = vpop.f32.mrb[0].mxu0
      %v3214 = vadd.f32 %v3133, %v3213
      %v3215 = vpop.f32.mrb[0].mxu0
      %3216 = vdwg.mxu0
      %v3218 = vshrl.u32 %v1060, 16
      %v3220 = vshll.u32 %v1060, 16
      %v3222 = vrot.slane %v3220, 1
      %v3223 = vor.u32 %v3218, %v3222
      %v3225 = vshll.u32 %v1062, 16
      %v3227 = vrot.slane %v3225, 1
      %v3228 = vsel %vm1064, %v3223, %v3227
      %v3230 = vshrl.u32 %v1061, 16
      %v3232 = vshll.u32 %v1061, 16
      %v3234 = vrot.slane %v3232, 1
      %v3235 = vor.u32 %v3230, %v3234
      %v3237 = vshll.u32 %v1063, 16
      %v3239 = vrot.slane %v3237, 1
      %v3240 = vsel %vm1064, %v3235, %v3239
      %v3241 = vshrl.u32 %v1062, 16
      %v3243 = vor.u32 %v3241, %v3227
      %v3244 = vshrl.u32 %v1063, 16
      %v3246 = vor.u32 %v3244, %v3239
      %v3251 = vrot.slane %v1060, 1
      %v3252 = vrot.slane %v1062, 1
      %v3253 = vsel %vm1269, %v3251, %v3252
      %v3254 = vrot.slane %v1061, 1
      %v3255 = vrot.slane %v1063, 1
      %v3256 = vsel %vm1269, %v3254, %v3255
      %v3257 = vrot.slane %v3218, 3
      %v3258 = vrot.slane %v3220, 4
      %v3259 = vor.u32 %v3257, %v3258
      %v3260 = vrot.slane %v3241, 3
      %v3261 = vrot.slane %v3225, 4
      %v3262 = vor.u32 %v3260, %v3261
      %v3263 = vsel %vm764, %v3259, %v3262
      %v3264 = vrot.slane %v3230, 3
      %v3265 = vrot.slane %v3232, 4
      %v3266 = vor.u32 %v3264, %v3265
      %v3267 = vrot.slane %v3244, 3
      %v3268 = vrot.slane %v3237, 4
      %v3269 = vor.u32 %v3267, %v3268
      %v3270 = vsel %vm764, %v3266, %v3269
      %v3272 = vshrl.u32 %v3228, 16
      %v3274 = vrot.slane %v3272, 3
      %v3275 = vshll.u32 %v3228, 16
      %v3277 = vrot.slane %v3275, 4
      %v3278 = vor.u32 %v3274, %v3277
      %v3280 = vshrl.u32 %v3243, 16
      %v3282 = vrot.slane %v3280, 3
      %v3283 = vshll.u32 %v3243, 16
      %v3285 = vrot.slane %v3283, 4
      %v3286 = vor.u32 %v3282, %v3285
      %v3287 = vsel %vm764, %v3278, %v3286
      %v3289 = vshrl.u32 %v3240, 16
      %v3291 = vrot.slane %v3289, 3
      %v3292 = vshll.u32 %v3240, 16
      %v3294 = vrot.slane %v3292, 4
      %v3295 = vor.u32 %v3291, %v3294
      %v3297 = vshrl.u32 %v3246, 16
      %v3299 = vrot.slane %v3297, 3
      %v3300 = vshll.u32 %v3246, 16
      %v3302 = vrot.slane %v3300, 4
      %v3303 = vor.u32 %v3299, %v3302
      %v3304 = vsel %vm764, %v3295, %v3303
      %v3306 = vshrl.u32 %v3253, 16
      %v3308 = vrot.slane %v3306, 3
      %v3309 = vshll.u32 %v3253, 16
      %v3311 = vrot.slane %v3309, 4
      %v3312 = vor.u32 %v3308, %v3311
      %v3314 = vshrl.u32 %v3252, 16
      %v3316 = vrot.slane %v3314, 3
      %v3317 = vshll.u32 %v3252, 16
      %v3319 = vrot.slane %v3317, 4
      %v3320 = vor.u32 %v3316, %v3319
      %v3321 = vsel %vm764, %v3312, %v3320
      %v3323 = vshrl.u32 %v3256, 16
      %v3325 = vrot.slane %v3323, 3
      %v3326 = vshll.u32 %v3256, 16
      %v3328 = vrot.slane %v3326, 4
      %v3329 = vor.u32 %v3325, %v3328
      %v3331 = vshrl.u32 %v3255, 16
      %v3333 = vrot.slane %v3331, 3
      %v3334 = vshll.u32 %v3255, 16
      %v3336 = vrot.slane %v3334, 4
      %v3337 = vor.u32 %v3333, %v3336
      %v3338 = vsel %vm764, %v3329, %v3337
      %s3345 = scalar_lea.vmem %s6, 768
      %v3346 = vld [vmem:[%s3345] sm:$0xf]
      %v3347 = vld [vmem:[%s3345 + $0x4] sm:$0xf]
      %v3348 = vld [vmem:[%s3345 + $0x8] sm:$0xf]
      %v3349 = vld [vmem:[%s3345 + $0xc] sm:$0xf]
      %v3350 = vld [vmem:[%s3345 + $0x10] sm:$0xf]
      %v3351 = vld [vmem:[%s3345 + $0x14] sm:$0xf]
      %v3352 = vld [vmem:[%s3345 + $0x18] sm:$0xf]
      %v3353 = vld [vmem:[%s3345 + $0x1c] sm:$0xf]
      %v3354 = vld [vmem:[%s3345 + $0x20] sm:$0xf]
      %v3355 = vld [vmem:[%s3345 + $0x24] sm:$0xf]
      %v3356 = vld [vmem:[%s3345 + $0x28] sm:$0xf]
      %v3357 = vld [vmem:[%s3345 + $0x2c] sm:$0xf]
      %v3358 = vld [vmem:[%s3345 + $0x30] sm:$0xf]
      %v3359 = vld [vmem:[%s3345 + $0x34] sm:$0xf]
      %v3360 = vld [vmem:[%s3345 + $0x38] sm:$0xf]
      %v3361 = vld [vmem:[%s3345 + $0x3c] sm:$0xf]
      %v3362 = vld [vmem:[%s3345 + $0x40] sm:$0xf]
      %v3363 = vld [vmem:[%s3345 + $0x44] sm:$0xf]
      %v3364 = vld [vmem:[%s3345 + $0x48] sm:$0xf]
      %v3365 = vld [vmem:[%s3345 + $0x4c] sm:$0xf]
      %v3366 = vld [vmem:[%s3345 + $0x50] sm:$0xf]
      %v3367 = vld [vmem:[%s3345 + $0x54] sm:$0xf]
      %v3368 = vld [vmem:[%s3345 + $0x58] sm:$0xf]
      %v3369 = vld [vmem:[%s3345 + $0x5c] sm:$0xf]
      %v3370 = vld [vmem:[%s3345 + $0x60] sm:$0xf]
      %v3371 = vld [vmem:[%s3345 + $0x64] sm:$0xf]
      %v3372 = vld [vmem:[%s3345 + $0x68] sm:$0xf]
      %v3373 = vld [vmem:[%s3345 + $0x6c] sm:$0xf]
      %v3374 = vld [vmem:[%s3345 + $0x70] sm:$0xf]
      %v3375 = vld [vmem:[%s3345 + $0x74] sm:$0xf]
      %v3376 = vld [vmem:[%s3345 + $0x78] sm:$0xf]
      %v3377 = vld [vmem:[%s3345 + $0x7c] sm:$0xf]
      %v3378 = vld [vmem:[%s3345 + $0x80] sm:$0xf]
      %v3379 = vld [vmem:[%s3345 + $0x84] sm:$0xf]
      %v3380 = vld [vmem:[%s3345 + $0x88] sm:$0xf]
      %v3381 = vld [vmem:[%s3345 + $0x8c] sm:$0xf]
      %v3382 = vld [vmem:[%s3345 + $0x90] sm:$0xf]
      %v3383 = vld [vmem:[%s3345 + $0x94] sm:$0xf]
      %v3384 = vld [vmem:[%s3345 + $0x98] sm:$0xf]
      %v3385 = vld [vmem:[%s3345 + $0x9c] sm:$0xf]
      %v3386 = vld [vmem:[%s3345 + $0xa0] sm:$0xf]
      %v3387 = vld [vmem:[%s3345 + $0xa4] sm:$0xf]
      %v3388 = vld [vmem:[%s3345 + $0xa8] sm:$0xf]
      %v3389 = vld [vmem:[%s3345 + $0xac] sm:$0xf]
      %v3390 = vld [vmem:[%s3345 + $0xb0] sm:$0xf]
      %v3391 = vld [vmem:[%s3345 + $0xb4] sm:$0xf]
      %v3392 = vld [vmem:[%s3345 + $0xb8] sm:$0xf]
      %v3393 = vld [vmem:[%s3345 + $0xbc] sm:$0xf]
      %v3394 = vld [vmem:[%s3345 + $0xc0] sm:$0xf]
      %v3395 = vld [vmem:[%s3345 + $0xc4] sm:$0xf]
      %v3396 = vld [vmem:[%s3345 + $0xc8] sm:$0xf]
      %v3397 = vld [vmem:[%s3345 + $0xcc] sm:$0xf]
      %v3398 = vld [vmem:[%s3345 + $0xd0] sm:$0xf]
      %v3399 = vld [vmem:[%s3345 + $0xd4] sm:$0xf]
      %v3400 = vld [vmem:[%s3345 + $0xd8] sm:$0xf]
      %v3401 = vld [vmem:[%s3345 + $0xdc] sm:$0xf]
      %v3402 = vld [vmem:[%s3345 + $0xe0] sm:$0xf]
      %v3403 = vld [vmem:[%s3345 + $0xe4] sm:$0xf]
      %v3404 = vld [vmem:[%s3345 + $0xe8] sm:$0xf]
      %v3405 = vld [vmem:[%s3345 + $0xec] sm:$0xf]
      %v3406 = vld [vmem:[%s3345 + $0xf0] sm:$0xf]
      %v3407 = vld [vmem:[%s3345 + $0xf4] sm:$0xf]
      %v3408 = vld [vmem:[%s3345 + $0xf8] sm:$0xf]
      %v3409 = vld [vmem:[%s3345 + $0xfc] sm:$0xf]
      %v3410 = vld [vmem:[%s3345 + $0x100] sm:$0xf]
      %v3411 = vld [vmem:[%s3345 + $0x104] sm:$0xf]
      %v3412 = vld [vmem:[%s3345 + $0x108] sm:$0xf]
      %v3413 = vld [vmem:[%s3345 + $0x10c] sm:$0xf]
      %v3414 = vld [vmem:[%s3345 + $0x110] sm:$0xf]
      %v3415 = vld [vmem:[%s3345 + $0x114] sm:$0xf]
      %v3416 = vld [vmem:[%s3345 + $0x118] sm:$0xf]
      %v3417 = vld [vmem:[%s3345 + $0x11c] sm:$0xf]
      %v3418 = vld [vmem:[%s3345 + $0x120] sm:$0xf]
      %v3419 = vld [vmem:[%s3345 + $0x124] sm:$0xf]
      %v3420 = vld [vmem:[%s3345 + $0x128] sm:$0xf]
      %v3421 = vld [vmem:[%s3345 + $0x12c] sm:$0xf]
      %v3422 = vld [vmem:[%s3345 + $0x130] sm:$0xf]
      %v3423 = vld [vmem:[%s3345 + $0x134] sm:$0xf]
      %v3424 = vld [vmem:[%s3345 + $0x138] sm:$0xf]
      %v3425 = vld [vmem:[%s3345 + $0x13c] sm:$0xf]
      %v3426 = vld [vmem:[%s3345 + $0x140] sm:$0xf]
      %v3427 = vld [vmem:[%s3345 + $0x144] sm:$0xf]
      %v3428 = vld [vmem:[%s3345 + $0x148] sm:$0xf]
      %v3429 = vld [vmem:[%s3345 + $0x14c] sm:$0xf]
      %v3430 = vld [vmem:[%s3345 + $0x150] sm:$0xf]
      %v3431 = vld [vmem:[%s3345 + $0x154] sm:$0xf]
      %v3432 = vld [vmem:[%s3345 + $0x158] sm:$0xf]
      %v3433 = vld [vmem:[%s3345 + $0x15c] sm:$0xf]
      %v3434 = vld [vmem:[%s3345 + $0x160] sm:$0xf]
      %v3435 = vld [vmem:[%s3345 + $0x164] sm:$0xf]
      %v3436 = vld [vmem:[%s3345 + $0x168] sm:$0xf]
      %v3437 = vld [vmem:[%s3345 + $0x16c] sm:$0xf]
      %v3438 = vld [vmem:[%s3345 + $0x170] sm:$0xf]
      %v3439 = vld [vmem:[%s3345 + $0x174] sm:$0xf]
      %v3440 = vld [vmem:[%s3345 + $0x178] sm:$0xf]
      %v3441 = vld [vmem:[%s3345 + $0x17c] sm:$0xf]
      %v3538 = vunpack.c.l.b16 %v3346
      %v3539 = vunpack.c.l.b16 %v3347
      %v3540 = vunpack.c.l.b16 %v3348
      %v3541 = vunpack.c.l.b16 %v3349
      %v3542 = vunpack.c.l.b16 %v3350
      %v3543 = vunpack.c.l.b16 %v3351
      %v3544 = vunpack.c.l.b16 %v3352
      %v3545 = vunpack.c.l.b16 %v3353
      %v3546 = vunpack.c.l.b16 %v3354
      %v3547 = vunpack.c.l.b16 %v3355
      %v3548 = vunpack.c.l.b16 %v3356
      %v3549 = vunpack.c.l.b16 %v3357
      %v3550 = vunpack.c.l.b16 %v3358
      %v3551 = vunpack.c.l.b16 %v3359
      %v3552 = vunpack.c.l.b16 %v3360
      %v3553 = vunpack.c.l.b16 %v3361
      %v3554 = vunpack.c.l.b16 %v3362
      %v3555 = vunpack.c.l.b16 %v3363
      %v3556 = vunpack.c.l.b16 %v3364
      %v3557 = vunpack.c.l.b16 %v3365
      %v3558 = vunpack.c.l.b16 %v3366
      %v3559 = vunpack.c.l.b16 %v3367
      %v3560 = vunpack.c.l.b16 %v3368
      %v3561 = vunpack.c.l.b16 %v3369
      %v3562 = vunpack.c.l.b16 %v3370
      %v3563 = vunpack.c.l.b16 %v3371
      %v3564 = vunpack.c.l.b16 %v3372
      %v3565 = vunpack.c.l.b16 %v3373
      %v3566 = vunpack.c.l.b16 %v3374
      %v3567 = vunpack.c.l.b16 %v3375
      %v3568 = vunpack.c.l.b16 %v3376
      %v3569 = vunpack.c.l.b16 %v3377
      %v3570 = vunpack.c.l.b16 %v3378
      %v3571 = vunpack.c.l.b16 %v3379
      %v3572 = vunpack.c.l.b16 %v3380
      %v3573 = vunpack.c.l.b16 %v3381
      %v3574 = vunpack.c.l.b16 %v3382
      %v3575 = vunpack.c.l.b16 %v3383
      %v3576 = vunpack.c.l.b16 %v3384
      %v3577 = vunpack.c.l.b16 %v3385
      %v3578 = vunpack.c.l.b16 %v3386
      %v3579 = vunpack.c.l.b16 %v3387
      %v3580 = vunpack.c.l.b16 %v3388
      %v3581 = vunpack.c.l.b16 %v3389
      %v3582 = vunpack.c.l.b16 %v3390
      %v3583 = vunpack.c.l.b16 %v3391
      %v3584 = vunpack.c.l.b16 %v3392
      %v3585 = vunpack.c.l.b16 %v3393
      %v3586 = vunpack.c.l.b16 %v3394
      %v3587 = vunpack.c.l.b16 %v3395
      %v3588 = vunpack.c.l.b16 %v3396
      %v3589 = vunpack.c.l.b16 %v3397
      %v3590 = vunpack.c.l.b16 %v3398
      %v3591 = vunpack.c.l.b16 %v3399
      %v3592 = vunpack.c.l.b16 %v3400
      %v3593 = vunpack.c.l.b16 %v3401
      %v3594 = vunpack.c.l.b16 %v3402
      %v3595 = vunpack.c.l.b16 %v3403
      %v3596 = vunpack.c.l.b16 %v3404
      %v3597 = vunpack.c.l.b16 %v3405
      %v3598 = vunpack.c.l.b16 %v3406
      %v3599 = vunpack.c.l.b16 %v3407
      %v3600 = vunpack.c.l.b16 %v3408
      %v3601 = vunpack.c.l.b16 %v3409
      %v3602 = vunpack.c.l.b16 %v3410
      %v3603 = vunpack.c.l.b16 %v3411
      %v3604 = vunpack.c.l.b16 %v3412
      %v3605 = vunpack.c.l.b16 %v3413
      %v3606 = vunpack.c.l.b16 %v3414
      %v3607 = vunpack.c.l.b16 %v3415
      %v3608 = vunpack.c.l.b16 %v3416
      %v3609 = vunpack.c.l.b16 %v3417
      %v3610 = vunpack.c.l.b16 %v3418
      %v3611 = vunpack.c.l.b16 %v3419
      %v3612 = vunpack.c.l.b16 %v3420
      %v3613 = vunpack.c.l.b16 %v3421
      %v3614 = vunpack.c.l.b16 %v3422
      %v3615 = vunpack.c.l.b16 %v3423
      %v3616 = vunpack.c.l.b16 %v3424
      %v3617 = vunpack.c.l.b16 %v3425
      %v3618 = vunpack.c.l.b16 %v3426
      %v3619 = vunpack.c.l.b16 %v3427
      %v3620 = vunpack.c.l.b16 %v3428
      %v3621 = vunpack.c.l.b16 %v3429
      %v3622 = vunpack.c.l.b16 %v3430
      %v3623 = vunpack.c.l.b16 %v3431
      %v3624 = vunpack.c.l.b16 %v3432
      %v3625 = vunpack.c.l.b16 %v3433
      %v3626 = vunpack.c.l.b16 %v3434
      %v3627 = vunpack.c.l.b16 %v3435
      %v3628 = vunpack.c.l.b16 %v3436
      %v3629 = vunpack.c.l.b16 %v3437
      %v3630 = vunpack.c.l.b16 %v3438
      %v3631 = vunpack.c.l.b16 %v3439
      %v3632 = vunpack.c.l.b16 %v3440
      %v3633 = vunpack.c.l.b16 %v3441
      %v3634 = vpack.c.b16 %v3539, %v3538
      %v3635 = vpack.c.b16 %v3541, %v3540
      %v3636 = vpack.c.b16 %v3543, %v3542
      %v3637 = vpack.c.b16 %v3545, %v3544
      %v3638 = vpack.c.b16 %v3547, %v3546
      %v3639 = vpack.c.b16 %v3549, %v3548
      %v3640 = vpack.c.b16 %v3551, %v3550
      %v3641 = vpack.c.b16 %v3553, %v3552
      %v3642 = vpack.c.b16 %v3555, %v3554
      %v3643 = vpack.c.b16 %v3557, %v3556
      %v3644 = vpack.c.b16 %v3559, %v3558
      %v3645 = vpack.c.b16 %v3561, %v3560
      %v3646 = vpack.c.b16 %v3563, %v3562
      %v3647 = vpack.c.b16 %v3565, %v3564
      %v3648 = vpack.c.b16 %v3567, %v3566
      %v3649 = vpack.c.b16 %v3569, %v3568
      %v3650 = vpack.c.b16 %v3571, %v3570
      %v3651 = vpack.c.b16 %v3573, %v3572
      %v3652 = vpack.c.b16 %v3575, %v3574
      %v3653 = vpack.c.b16 %v3577, %v3576
      %v3654 = vpack.c.b16 %v3579, %v3578
      %v3655 = vpack.c.b16 %v3581, %v3580
      %v3656 = vpack.c.b16 %v3583, %v3582
      %v3657 = vpack.c.b16 %v3585, %v3584
      %v3658 = vpack.c.b16 %v3587, %v3586
      %v3659 = vpack.c.b16 %v3589, %v3588
      %v3660 = vpack.c.b16 %v3591, %v3590
      %v3661 = vpack.c.b16 %v3593, %v3592
      %v3662 = vpack.c.b16 %v3595, %v3594
      %v3663 = vpack.c.b16 %v3597, %v3596
      %v3664 = vpack.c.b16 %v3599, %v3598
      %v3665 = vpack.c.b16 %v3601, %v3600
      %v3666 = vpack.c.b16 %v3603, %v3602
      %v3667 = vpack.c.b16 %v3605, %v3604
      %v3668 = vpack.c.b16 %v3607, %v3606
      %v3669 = vpack.c.b16 %v3609, %v3608
      %v3670 = vpack.c.b16 %v3611, %v3610
      %v3671 = vpack.c.b16 %v3613, %v3612
      %v3672 = vpack.c.b16 %v3615, %v3614
      %v3673 = vpack.c.b16 %v3617, %v3616
      %v3674 = vpack.c.b16 %v3619, %v3618
      %v3675 = vpack.c.b16 %v3621, %v3620
      %v3676 = vpack.c.b16 %v3623, %v3622
      %v3677 = vpack.c.b16 %v3625, %v3624
      %v3678 = vpack.c.b16 %v3627, %v3626
      %v3679 = vpack.c.b16 %v3629, %v3628
      %v3680 = vpack.c.b16 %v3631, %v3630
      %v3681 = vpack.c.b16 %v3633, %v3632
      %3730 = vmatprep.subr.bf16.mxu0 0
      %3731 = vmatpush1.bf16.msra.mxu0 %v3634
      %3732 = vmatprep.subr.bf16.mxu0 0
      %3733 = vmatpush1.bf16.msra.mxu0 %v3635
      %3734 = vmatprep.subr.bf16.mxu0 0
      %3735 = vmatpush1.bf16.msra.mxu0 %v3636
      %3736 = vmatprep.subr.bf16.mxu0 0
      %3737 = vmatpush1.bf16.msra.mxu0 %v3637
      %3738 = vmatprep.subr.bf16.mxu0 0
      %3739 = vmatpush1.bf16.msra.mxu0 %v3638
      %3740 = vmatprep.subr.bf16.mxu0 0
      %3741 = vmatpush1.bf16.msra.mxu0 %v3639
      %3742 = vmatprep.subr.bf16.mxu0 0
      %3743 = vmatpush1.bf16.msra.mxu0 %v3640
      %3744 = vmatprep.subr.bf16.mxu0 0
      %3745 = vmatpush1.bf16.msra.mxu0 %v3641
      %3746 = vmatprep.subr.bf16.mxu0 0
      %3747 = vmatpush1.bf16.msra.mxu0 %v3642
      %3748 = vmatprep.subr.bf16.mxu0 0
      %3749 = vmatpush1.bf16.msra.mxu0 %v3643
      %3750 = vmatprep.subr.bf16.mxu0 0
      %3751 = vmatpush1.bf16.msra.mxu0 %v3644
      %3752 = vmatprep.subr.bf16.mxu0 0
      %3753 = vmatpush1.bf16.msra.mxu0 %v3645
      %3754 = vmatprep.subr.bf16.mxu0 0
      %3755 = vmatpush1.bf16.msra.mxu0 %v3646
      %3756 = vmatprep.subr.bf16.mxu0 0
      %3757 = vmatpush1.bf16.msra.mxu0 %v3647
      %3758 = vmatprep.subr.bf16.mxu0 0
      %3759 = vmatpush1.bf16.msra.mxu0 %v3648
      %3760 = vmatprep.subr.bf16.mxu0 0
      %3761 = vmatpush1.bf16.msra.mxu0 %v3649
      %3762 = vmatprep.mubr.bf16.mxu0 %v1483
      %3763 = vmatmul.mubr.bf16.gmra.mrb[0].mxu0 %v1476
      %v3764 = vpop.f32.mrb[0].mxu0
      %v3765 = vadd.f32 0.0, %v3764
      %v3766 = vpop.f32.mrb[0].mxu0
      %v3767 = vpop.f32.mrb[0].mxu0
      %v3768 = vadd.f32 0.0, %v3767
      %v3769 = vpop.f32.mrb[0].mxu0
      %3770 = vmatprep.mubr.bf16.mxu0 %v1565
      %3771 = vmatmul.mubr.bf16.gmra.mrb[0].mxu0 %v1558
      %v3772 = vpop.f32.mrb[0].mxu0
      %v3773 = vadd.f32 0.0, %v3772
      %v3774 = vpop.f32.mrb[0].mxu0
      %v3775 = vpop.f32.mrb[0].mxu0
      %v3776 = vadd.f32 0.0, %v3775
      %v3777 = vpop.f32.mrb[0].mxu0
      %3778 = vmatprep.mubr.bf16.mxu0 %v1647
      %3779 = vmatmul.mubr.bf16.gmra.mrb[0].mxu0 %v1640
      %v3780 = vpop.f32.mrb[0].mxu0
      %v3781 = vadd.f32 0.0, %v3780
      %v3782 = vpop.f32.mrb[0].mxu0
      %v3783 = vpop.f32.mrb[0].mxu0
      %v3784 = vadd.f32 0.0, %v3783
      %v3785 = vpop.f32.mrb[0].mxu0
      %3786 = vmatprep.mubr.bf16.mxu0 %v1729
      %3787 = vmatmul.mubr.bf16.gmra.mrb[0].mxu0 %v1722
      %v3788 = vpop.f32.mrb[0].mxu0
      %v3789 = vadd.f32 0.0, %v3788
      %v3790 = vpop.f32.mrb[0].mxu0
      %v3791 = vpop.f32.mrb[0].mxu0
      %v3792 = vadd.f32 0.0, %v3791
      %v3793 = vpop.f32.mrb[0].mxu0
      %3794 = vmatprep.mubr.bf16.mxu0 %v1983
      %3795 = vmatmul.mubr.bf16.gmra.mrb[0].mxu0 %v1976
      %v3796 = vpop.f32.mrb[0].mxu0
      %v3797 = vadd.f32 0.0, %v3796
      %v3798 = vpop.f32.mrb[0].mxu0
      %v3799 = vpop.f32.mrb[0].mxu0
      %v3800 = vadd.f32 0.0, %v3799
      %v3801 = vpop.f32.mrb[0].mxu0
      %3802 = vmatprep.mubr.bf16.mxu0 %v3270
      %3803 = vmatmul.mubr.bf16.gmra.mrb[0].mxu0 %v3263
      %v3804 = vpop.f32.mrb[0].mxu0
      %v3805 = vadd.f32 0.0, %v3804
      %v3806 = vpop.f32.mrb[0].mxu0
      %v3807 = vpop.f32.mrb[0].mxu0
      %v3808 = vadd.f32 0.0, %v3807
      %v3809 = vpop.f32.mrb[0].mxu0
      %3810 = vdwg.mxu0
      %3811 = vmatprep.subr.bf16.mxu0 0
      %3812 = vmatpush1.bf16.msra.mxu0 %v3650
      %3813 = vmatprep.subr.bf16.mxu0 0
      %3814 = vmatpush1.bf16.msra.mxu0 %v3651
      %3815 = vmatprep.subr.bf16.mxu0 0
      %3816 = vmatpush1.bf16.msra.mxu0 %v3652
      %3817 = vmatprep.subr.bf16.mxu0 0
      %3818 = vmatpush1.bf16.msra.mxu0 %v3653
      %3819 = vmatprep.subr.bf16.mxu0 0
      %3820 = vmatpush1.bf16.msra.mxu0 %v3654
      %3821 = vmatprep.subr.bf16.mxu0 0
      %3822 = vmatpush1.bf16.msra.mxu0 %v3655
      %3823 = vmatprep.subr.bf16.mxu0 0
      %3824 = vmatpush1.bf16.msra.mxu0 %v3656
      %3825 = vmatprep.subr.bf16.mxu0 0
      %3826 = vmatpush1.bf16.msra.mxu0 %v3657
      %3827 = vmatprep.subr.bf16.mxu0 0
      %3828 = vmatpush1.bf16.msra.mxu0 %v3658
      %3829 = vmatprep.subr.bf16.mxu0 0
      %3830 = vmatpush1.bf16.msra.mxu0 %v3659
      %3831 = vmatprep.subr.bf16.mxu0 0
      %3832 = vmatpush1.bf16.msra.mxu0 %v3660
      %3833 = vmatprep.subr.bf16.mxu0 0
      %3834 = vmatpush1.bf16.msra.mxu0 %v3661
      %3835 = vmatprep.subr.bf16.mxu0 0
      %3836 = vmatpush1.bf16.msra.mxu0 %v3662
      %3837 = vmatprep.subr.bf16.mxu0 0
      %3838 = vmatpush1.bf16.msra.mxu0 %v3663
      %3839 = vmatprep.subr.bf16.mxu0 0
      %3840 = vmatpush1.bf16.msra.mxu0 %v3664
      %3841 = vmatprep.subr.bf16.mxu0 0
      %3842 = vmatpush1.bf16.msra.mxu0 %v3665
      %3843 = vmatprep.mubr.bf16.mxu0 %v1517
      %3844 = vmatmul.mubr.bf16.gmra.mrb[0].mxu0 %v1500
      %v3845 = vpop.f32.mrb[0].mxu0
      %v3846 = vadd.f32 %v3765, %v3845
      %v3847 = vpop.f32.mrb[0].mxu0
      %v3848 = vpop.f32.mrb[0].mxu0
      %v3849 = vadd.f32 %v3768, %v3848
      %v3850 = vpop.f32.mrb[0].mxu0
      %3851 = vmatprep.mubr.bf16.mxu0 %v1599
      %3852 = vmatmul.mubr.bf16.gmra.mrb[0].mxu0 %v1582
      %v3853 = vpop.f32.mrb[0].mxu0
      %v3854 = vadd.f32 %v3773, %v3853
      %v3855 = vpop.f32.mrb[0].mxu0
      %v3856 = vpop.f32.mrb[0].mxu0
      %v3857 = vadd.f32 %v3776, %v3856
      %v3858 = vpop.f32.mrb[0].mxu0
      %3859 = vmatprep.mubr.bf16.mxu0 %v1681
      %3860 = vmatmul.mubr.bf16.gmra.mrb[0].mxu0 %v1664
      %v3861 = vpop.f32.mrb[0].mxu0
      %v3862 = vadd.f32 %v3781, %v3861
      %v3863 = vpop.f32.mrb[0].mxu0
      %v3864 = vpop.f32.mrb[0].mxu0
      %v3865 = vadd.f32 %v3784, %v3864
      %v3866 = vpop.f32.mrb[0].mxu0
      %3867 = vmatprep.mubr.bf16.mxu0 %v1763
      %3868 = vmatmul.mubr.bf16.gmra.mrb[0].mxu0 %v1746
      %v3869 = vpop.f32.mrb[0].mxu0
      %v3870 = vadd.f32 %v3789, %v3869
      %v3871 = vpop.f32.mrb[0].mxu0
      %v3872 = vpop.f32.mrb[0].mxu0
      %v3873 = vadd.f32 %v3792, %v3872
      %v3874 = vpop.f32.mrb[0].mxu0
      %3875 = vmatprep.mubr.bf16.mxu0 %v2017
      %3876 = vmatmul.mubr.bf16.gmra.mrb[0].mxu0 %v2000
      %v3877 = vpop.f32.mrb[0].mxu0
      %v3878 = vadd.f32 %v3797, %v3877
      %v3879 = vpop.f32.mrb[0].mxu0
      %v3880 = vpop.f32.mrb[0].mxu0
      %v3881 = vadd.f32 %v3800, %v3880
      %v3882 = vpop.f32.mrb[0].mxu0
      %3883 = vmatprep.mubr.bf16.mxu0 %v3304
      %3884 = vmatmul.mubr.bf16.gmra.mrb[0].mxu0 %v3287
      %v3885 = vpop.f32.mrb[0].mxu0
      %v3886 = vadd.f32 %v3805, %v3885
      %v3887 = vpop.f32.mrb[0].mxu0
      %v3888 = vpop.f32.mrb[0].mxu0
      %v3889 = vadd.f32 %v3808, %v3888
      %v3890 = vpop.f32.mrb[0].mxu0
      %3891 = vdwg.mxu0
      %3892 = vmatprep.subr.bf16.mxu0 0
      %3893 = vmatpush1.bf16.msra.mxu0 %v3666
      %3894 = vmatprep.subr.bf16.mxu0 0
      %3895 = vmatpush1.bf16.msra.mxu0 %v3667
      %3896 = vmatprep.subr.bf16.mxu0 0
      %3897 = vmatpush1.bf16.msra.mxu0 %v3668
      %3898 = vmatprep.subr.bf16.mxu0 0
      %3899 = vmatpush1.bf16.msra.mxu0 %v3669
      %3900 = vmatprep.subr.bf16.mxu0 0
      %3901 = vmatpush1.bf16.msra.mxu0 %v3670
      %3902 = vmatprep.subr.bf16.mxu0 0
      %3903 = vmatpush1.bf16.msra.mxu0 %v3671
      %3904 = vmatprep.subr.bf16.mxu0 0
      %3905 = vmatpush1.bf16.msra.mxu0 %v3672
      %3906 = vmatprep.subr.bf16.mxu0 0
      %3907 = vmatpush1.bf16.msra.mxu0 %v3673
      %3908 = vmatprep.subr.bf16.mxu0 0
      %3909 = vmatpush1.bf16.msra.mxu0 %v3674
      %3910 = vmatprep.subr.bf16.mxu0 0
      %3911 = vmatpush1.bf16.msra.mxu0 %v3675
      %3912 = vmatprep.subr.bf16.mxu0 0
      %3913 = vmatpush1.bf16.msra.mxu0 %v3676
      %3914 = vmatprep.subr.bf16.mxu0 0
      %3915 = vmatpush1.bf16.msra.mxu0 %v3677
      %3916 = vmatprep.subr.bf16.mxu0 0
      %3917 = vmatpush1.bf16.msra.mxu0 %v3678
      %3918 = vmatprep.subr.bf16.mxu0 0
      %3919 = vmatpush1.bf16.msra.mxu0 %v3679
      %3920 = vmatprep.subr.bf16.mxu0 0
      %3921 = vmatpush1.bf16.msra.mxu0 %v3680
      %3922 = vmatprep.subr.bf16.mxu0 0
      %3923 = vmatpush1.bf16.msra.mxu0 %v3681
      %3924 = vmatprep.mubr.bf16.mxu0 %v1551
      %3925 = vmatmul.mubr.bf16.gmra.mrb[0].mxu0 %v1534
      %v3926 = vpop.f32.mrb[0].mxu0
      %v3927 = vadd.f32 %v3846, %v3926
      %v3928 = vpop.f32.mrb[0].mxu0
      %v3929 = vpop.f32.mrb[0].mxu0
      %v3930 = vadd.f32 %v3849, %v3929
      %v3931 = vpop.f32.mrb[0].mxu0
      %3932 = vmatprep.mubr.bf16.mxu0 %v1633
      %3933 = vmatmul.mubr.bf16.gmra.mrb[0].mxu0 %v1616
      %v3934 = vpop.f32.mrb[0].mxu0
      %v3935 = vadd.f32 %v3854, %v3934
      %v3936 = vpop.f32.mrb[0].mxu0
      %v3937 = vpop.f32.mrb[0].mxu0
      %v3938 = vadd.f32 %v3857, %v3937
      %v3939 = vpop.f32.mrb[0].mxu0
      %3940 = vmatprep.mubr.bf16.mxu0 %v1715
      %3941 = vmatmul.mubr.bf16.gmra.mrb[0].mxu0 %v1698
      %v3942 = vpop.f32.mrb[0].mxu0
      %v3943 = vadd.f32 %v3862, %v3942
      %v3944 = vpop.f32.mrb[0].mxu0
      %v3945 = vpop.f32.mrb[0].mxu0
      %v3946 = vadd.f32 %v3865, %v3945
      %v3947 = vpop.f32.mrb[0].mxu0
      %3948 = vmatprep.mubr.bf16.mxu0 %v1797
      %3949 = vmatmul.mubr.bf16.gmra.mrb[0].mxu0 %v1780
      %v3950 = vpop.f32.mrb[0].mxu0
      %v3951 = vadd.f32 %v3870, %v3950
      %v3952 = vpop.f32.mrb[0].mxu0
      %v3953 = vpop.f32.mrb[0].mxu0
      %v3954 = vadd.f32 %v3873, %v3953
      %v3955 = vpop.f32.mrb[0].mxu0
      %3956 = vmatprep.mubr.bf16.mxu0 %v2051
      %3957 = vmatmul.mubr.bf16.gmra.mrb[0].mxu0 %v2034
      %v3958 = vpop.f32.mrb[0].mxu0
      %v3959 = vadd.f32 %v3878, %v3958
      %v3960 = vpop.f32.mrb[0].mxu0
      %v3961 = vpop.f32.mrb[0].mxu0
      %v3962 = vadd.f32 %v3881, %v3961
      %v3963 = vpop.f32.mrb[0].mxu0
      %3964 = vmatprep.mubr.bf16.mxu0 %v3338
      %3965 = vmatmul.mubr.bf16.gmra.mrb[0].mxu0 %v3321
      %v3966 = vpop.f32.mrb[0].mxu0
      %v3967 = vadd.f32 %v3886, %v3966
      %v3968 = vpop.f32.mrb[0].mxu0
      %v3969 = vpop.f32.mrb[0].mxu0
      %v3970 = vadd.f32 %v3889, %v3969
      %v3971 = vpop.f32.mrb[0].mxu0
      %3972 = vdwg.mxu0
      %v3973 = vadd.f32 %v3171, %v3927
      %v3974 = vadd.f32 %v3174, %v3930
      %v3975 = vadd.f32 %v3179, %v3935
      %v3976 = vadd.f32 %v3182, %v3938
      %v3977 = vadd.f32 %v3187, %v3943
      %v3978 = vadd.f32 %v3190, %v3946
      %v3979 = vadd.f32 %v3195, %v3951
      %v3980 = vadd.f32 %v3198, %v3954
      %v3981 = vadd.f32 %v3203, %v3959
      %v3982 = vadd.f32 %v3206, %v3962
      %v3983 = vadd.f32 %v3211, %v3967
      %v3984 = vadd.f32 %v3214, %v3970
      %v3985 = vld [vmem:[%s7] sm:$0x1]
      %v3987 = vlaneseq
      %v3988 = vshrl.u32 %v3987, 7
      %v3989 = vsub.s32 0, %v3988
      %v3990 = vrot.slane %v3985, %v3989
      %v3992 = vadd.f32 %v3973, %v3990
      %v3993 = vadd.f32 %v3974, %v3990
      %v3994 = vadd.f32 %v3975, %v3990
      %v3995 = vadd.f32 %v3976, %v3990
      %v3996 = vadd.f32 %v3977, %v3990
      %v3997 = vadd.f32 %v3978, %v3990
      %v3998 = vadd.f32 %v3979, %v3990
      %v3999 = vadd.f32 %v3980, %v3990
      %v4000 = vadd.f32 %v3981, %v3990
      %v4001 = vadd.f32 %v3982, %v3990
      %v4002 = vadd.f32 %v3983, %v3990
      %v4003 = vadd.f32 %v3984, %v3990
      %v4004 = vmax.f32 %v3992, 0.0
      %v4005 = vmax.f32 %v3993, 0.0
      %v4006 = vmax.f32 %v3994, 0.0
      %v4007 = vmax.f32 %v3995, 0.0
      %v4008 = vmax.f32 %v3996, 0.0
      %v4009 = vmax.f32 %v3997, 0.0
      %v4010 = vmax.f32 %v3998, 0.0
      %v4011 = vmax.f32 %v3999, 0.0
      %v4012 = vmax.f32 %v4000, 0.0
      %v4013 = vmax.f32 %v4001, 0.0
      %v4014 = vmax.f32 %v4002, 0.0
      %v4015 = vmax.f32 %v4003, 0.0
      %v4016 = vpack.c.bf16 %v4005, %v4004
      %v4017 = vpack.c.bf16 %v4007, %v4006
      %v4018 = vpack.c.bf16 %v4009, %v4008
      %v4019 = vpack.c.bf16 %v4011, %v4010
      %v4020 = vpack.c.bf16 %v4013, %v4012
      %v4021 = vpack.c.bf16 %v4015, %v4014
      %v4028 = vrot.slane %v4016, 4
      %v4029 = vrot.slane %v4017, 4
      %v4030 = vrot.slane %v4018, 4
      %v4031 = vrot.slane %v4019, 4
      %v4032 = vrot.slane %v4020, 4
      %v4033 = vrot.slane %v4021, 4
      %4040 = vst [vmem:[#allocation3] sm:$0xf0] %v4028
      %4041 = vst [vmem:[#allocation3 + $0x8] sm:$0xf] %v4028
      %4042 = vst [vmem:[#allocation3 + $0x10] sm:$0xf0] %v4029
      %4043 = vst [vmem:[#allocation3 + $0x18] sm:$0xf] %v4029
      %4044 = vst [vmem:[#allocation3 + $0x20] sm:$0xf0] %v4030
      %4045 = vst [vmem:[#allocation3 + $0x28] sm:$0xf] %v4030
      %4046 = vst [vmem:[#allocation3 + $0x30] sm:$0xf0] %v4031
      %4047 = vst [vmem:[#allocation3 + $0x38] sm:$0xf] %v4031
      %4048 = vst [vmem:[#allocation3 + $0x40] sm:$0xf0] %v4032
      %4049 = vst [vmem:[#allocation3 + $0x48] sm:$0xf] %v4032
      %4050 = vst [vmem:[#allocation3 + $0x50] sm:$0xf0] %v4033
      %4051 = vst [vmem:[#allocation3 + $0x58] sm:$0xf] %v4033
      %v4052 = vld [vmem:[#allocation3] sm:$0x8]
      %v4053 = vsel %vm714, 0, %v4052
      %4054 = vst [vmem:[#allocation3] sm:$0x8] %v4053
      %v4055 = vld [vmem:[#allocation3 + $0x10] sm:$0x8]
      %v4056 = vsel %vm714, 0, %v4055
      %4057 = vst [vmem:[#allocation3 + $0x10] sm:$0x8] %v4056
      %v4058 = vld [vmem:[#allocation3 + $0x20] sm:$0x8]
      %v4059 = vsel %vm714, 0, %v4058
      %4060 = vst [vmem:[#allocation3 + $0x20] sm:$0x8] %v4059
      %v4061 = vld [vmem:[#allocation3 + $0x30] sm:$0x8]
      %v4062 = vsel %vm714, 0, %v4061
      %4063 = vst [vmem:[#allocation3 + $0x30] sm:$0x8] %v4062
      %v4064 = vld [vmem:[#allocation3 + $0x40] sm:$0x8]
      %v4065 = vsel %vm714, 0, %v4064
      %4066 = vst [vmem:[#allocation3 + $0x40] sm:$0x8] %v4065
      %v4067 = vld [vmem:[#allocation3 + $0x50] sm:$0x8]
      %v4068 = vsel %vm714, 0, %v4067
      %4069 = vst [vmem:[#allocation3 + $0x50] sm:$0x8] %v4068
      %v4070 = vld [vmem:[#allocation3 + $0x8] sm:$0x10]
      %v4071 = vsel %vm765, 0, %v4070
      %4072 = vst [vmem:[#allocation3 + $0x8] sm:$0x10] %v4071
      %v4073 = vld [vmem:[#allocation3 + $0x18] sm:$0x10]
      %v4074 = vsel %vm765, 0, %v4073
      %4075 = vst [vmem:[#allocation3 + $0x18] sm:$0x10] %v4074
      %v4076 = vld [vmem:[#allocation3 + $0x28] sm:$0x10]
      %v4077 = vsel %vm765, 0, %v4076
      %4078 = vst [vmem:[#allocation3 + $0x28] sm:$0x10] %v4077
      %v4079 = vld [vmem:[#allocation3 + $0x38] sm:$0x10]
      %v4080 = vsel %vm765, 0, %v4079
      %4081 = vst [vmem:[#allocation3 + $0x38] sm:$0x10] %v4080
      %v4082 = vld [vmem:[#allocation3 + $0x48] sm:$0x10]
      %v4083 = vsel %vm765, 0, %v4082
      %4084 = vst [vmem:[#allocation3 + $0x48] sm:$0x10] %v4083
      %v4085 = vld [vmem:[#allocation3 + $0x58] sm:$0x10]
      %v4086 = vsel %vm765, 0, %v4085
      %4087 = vst [vmem:[#allocation3 + $0x58] sm:$0x10] %v4086
      %p4088 = scmp.eq.s32.totalorder %s26, 0
      // Predicated region
      $region61: #{up_forward.1} parent=59 // pred_check
        %p4089 = pneg %p4088
      $region62: #{up_forward.1} parent=59 // pred_check_branch
        %4091 = sbr.rel (%p4089) target = $region64
      $region63: #{up_forward.1} parent=59 // pred_region
        %4092 = vst [vmem:[#allocation3] sm:$0xff] 0
        %4093 = vst [vmem:[#allocation3 + $0x8] sm:$0xff] 0
      $region64: #{up_forward.1} parent=59 // pred_fallthru
        _
      %p4094 = scmp.eq.s32.totalorder %s26, 3
      // Predicated region
      $region65: #{up_forward.1} parent=59 // pred_check
        %p4095 = pneg %p4094
      $region66: #{up_forward.1} parent=59 // pred_check_branch
        %4097 = sbr.rel (%p4095) target = $region68
      $region67: #{up_forward.1} parent=59 // pred_region
        %s4098 = scalar_lea.vmem [#allocation3], 80
        %4099 = vst [vmem:[%s4098] sm:$0xff] 0
        %4100 = vst [vmem:[%s4098 + $0x8] sm:$0xff] 0
      $region68: #{up_forward.1} parent=59 // pred_fallthru
        _
      %v4101 = vld [vmem:[#allocation3] sm:$0xff]
      %v4102 = vld [vmem:[#allocation3 + $0x8] sm:$0xff]
      %v4103 = vld [vmem:[#allocation3 + $0x10] sm:$0xff]
      %v4104 = vld [vmem:[#allocation3 + $0x18] sm:$0xff]
      %v4105 = vld [vmem:[#allocation3 + $0x20] sm:$0xff]
      %v4106 = vld [vmem:[#allocation3 + $0x28] sm:$0xff]
      %v4107 = vld [vmem:[#allocation3 + $0x30] sm:$0xff]
      %v4108 = vld [vmem:[#allocation3 + $0x38] sm:$0xff]
      %v4109 = vld [vmem:[#allocation3 + $0x40] sm:$0xff]
      %v4110 = vld [vmem:[#allocation3 + $0x48] sm:$0xff]
      %v4111 = vld [vmem:[#allocation3 + $0x50] sm:$0xff]
      %v4112 = vld [vmem:[#allocation3 + $0x58] sm:$0xff]
      %v4114 = vshrl.u32 %v4101, 16
      %v4116 = vshll.u32 %v4101, 16
      %v4118 = vrot.slane %v4116, 1
      %v4119 = vor.u32 %v4114, %v4118
      %v4121 = vshll.u32 %v4102, 16
      %v4123 = vrot.slane %v4121, 1
      %v4124 = vsel %vm1064, %v4119, %v4123
      %v4125 = vshrl.u32 %v4102, 16
      %v4127 = vor.u32 %v4125, %v4123
      %v4129 = vshrl.u32 %v4103, 16
      %v4131 = vshll.u32 %v4103, 16
      %v4133 = vrot.slane %v4131, 1
      %v4134 = vor.u32 %v4129, %v4133
      %v4136 = vshll.u32 %v4104, 16
      %v4138 = vrot.slane %v4136, 1
      %v4139 = vsel %vm1064, %v4134, %v4138
      %v4140 = vshrl.u32 %v4104, 16
      %v4142 = vor.u32 %v4140, %v4138
      %v4144 = vshrl.u32 %v4105, 16
      %v4146 = vshll.u32 %v4105, 16
      %v4148 = vrot.slane %v4146, 1
      %v4149 = vor.u32 %v4144, %v4148
      %v4151 = vshll.u32 %v4106, 16
      %v4153 = vrot.slane %v4151, 1
      %v4154 = vsel %vm1064, %v4149, %v4153
      %v4155 = vshrl.u32 %v4106, 16
      %v4157 = vor.u32 %v4155, %v4153
      %v4159 = vshrl.u32 %v4107, 16
      %v4161 = vshll.u32 %v4107, 16
      %v4163 = vrot.slane %v4161, 1
      %v4164 = vor.u32 %v4159, %v4163
      %v4166 = vshll.u32 %v4108, 16
      %v4168 = vrot.slane %v4166, 1
      %v4169 = vsel %vm1064, %v4164, %v4168
      %v4170 = vshrl.u32 %v4108, 16
      %v4172 = vor.u32 %v4170, %v4168
      %v4181 = vrot.slane %v4101, 1
      %v4182 = vrot.slane %v4102, 1
      %v4183 = vsel %vm1269, %v4181, %v4182
      %v4184 = vrot.slane %v4103, 1
      %v4185 = vrot.slane %v4104, 1
      %v4186 = vsel %vm1269, %v4184, %v4185
      %v4187 = vrot.slane %v4105, 1
      %v4188 = vrot.slane %v4106, 1
      %v4189 = vsel %vm1269, %v4187, %v4188
      %v4190 = vrot.slane %v4107, 1
      %v4191 = vrot.slane %v4108, 1
      %v4192 = vsel %vm1269, %v4190, %v4191
      %v4193 = vrot.slane %v4114, 3
      %v4194 = vrot.slane %v4116, 4
      %v4195 = vor.u32 %v4193, %v4194
      %v4196 = vrot.slane %v4125, 3
      %v4197 = vrot.slane %v4121, 4
      %v4198 = vor.u32 %v4196, %v4197
      %v4199 = vsel %vm764, %v4195, %v4198
      %v4201 = vshrl.u32 %v4124, 16
      %v4203 = vrot.slane %v4201, 3
      %v4204 = vshll.u32 %v4124, 16
      %v4206 = vrot.slane %v4204, 4
      %v4207 = vor.u32 %v4203, %v4206
      %v4209 = vshrl.u32 %v4127, 16
      %v4211 = vrot.slane %v4209, 3
      %v4212 = vshll.u32 %v4127, 16
      %v4214 = vrot.slane %v4212, 4
      %v4215 = vor.u32 %v4211, %v4214
      %v4216 = vsel %vm764, %v4207, %v4215
      %v4218 = vshrl.u32 %v4183, 16
      %v4220 = vrot.slane %v4218, 3
      %v4221 = vshll.u32 %v4183, 16
      %v4223 = vrot.slane %v4221, 4
      %v4224 = vor.u32 %v4220, %v4223
      %v4226 = vshrl.u32 %v4182, 16
      %v4228 = vrot.slane %v4226, 3
      %v4229 = vshll.u32 %v4182, 16
      %v4231 = vrot.slane %v4229, 4
      %v4232 = vor.u32 %v4228, %v4231
      %v4233 = vsel %vm764, %v4224, %v4232
      %v4234 = vrot.slane %v4129, 3
      %v4235 = vrot.slane %v4131, 4
      %v4236 = vor.u32 %v4234, %v4235
      %v4237 = vrot.slane %v4140, 3
      %v4238 = vrot.slane %v4136, 4
      %v4239 = vor.u32 %v4237, %v4238
      %v4240 = vsel %vm764, %v4236, %v4239
      %v4242 = vshrl.u32 %v4139, 16
      %v4244 = vrot.slane %v4242, 3
      %v4245 = vshll.u32 %v4139, 16
      %v4247 = vrot.slane %v4245, 4
      %v4248 = vor.u32 %v4244, %v4247
      %v4250 = vshrl.u32 %v4142, 16
      %v4252 = vrot.slane %v4250, 3
      %v4253 = vshll.u32 %v4142, 16
      %v4255 = vrot.slane %v4253, 4
      %v4256 = vor.u32 %v4252, %v4255
      %v4257 = vsel %vm764, %v4248, %v4256
      %v4259 = vshrl.u32 %v4186, 16
      %v4261 = vrot.slane %v4259, 3
      %v4262 = vshll.u32 %v4186, 16
      %v4264 = vrot.slane %v4262, 4
      %v4265 = vor.u32 %v4261, %v4264
      %v4267 = vshrl.u32 %v4185, 16
      %v4269 = vrot.slane %v4267, 3
      %v4270 = vshll.u32 %v4185, 16
      %v4272 = vrot.slane %v4270, 4
      %v4273 = vor.u32 %v4269, %v4272
      %v4274 = vsel %vm764, %v4265, %v4273
      %v4275 = vrot.slane %v4144, 3
      %v4276 = vrot.slane %v4146, 4
      %v4277 = vor.u32 %v4275, %v4276
      %v4278 = vrot.slane %v4155, 3
      %v4279 = vrot.slane %v4151, 4
      %v4280 = vor.u32 %v4278, %v4279
      %v4281 = vsel %vm764, %v4277, %v4280
      %v4283 = vshrl.u32 %v4154, 16
      %v4285 = vrot.slane %v4283, 3
      %v4286 = vshll.u32 %v4154, 16
      %v4288 = vrot.slane %v4286, 4
      %v4289 = vor.u32 %v4285, %v4288
      %v4291 = vshrl.u32 %v4157, 16
      %v4293 = vrot.slane %v4291, 3
      %v4294 = vshll.u32 %v4157, 16
      %v4296 = vrot.slane %v4294, 4
      %v4297 = vor.u32 %v4293, %v4296
      %v4298 = vsel %vm764, %v4289, %v4297
      %v4300 = vshrl.u32 %v4189, 16
      %v4302 = vrot.slane %v4300, 3
      %v4303 = vshll.u32 %v4189, 16
      %v4305 = vrot.slane %v4303, 4
      %v4306 = vor.u32 %v4302, %v4305
      %v4308 = vshrl.u32 %v4188, 16
      %v4310 = vrot.slane %v4308, 3
      %v4311 = vshll.u32 %v4188, 16
      %v4313 = vrot.slane %v4311, 4
      %v4314 = vor.u32 %v4310, %v4313
      %v4315 = vsel %vm764, %v4306, %v4314
      %v4316 = vrot.slane %v4159, 3
      %v4317 = vrot.slane %v4161, 4
      %v4318 = vor.u32 %v4316, %v4317
      %v4319 = vrot.slane %v4170, 3
      %v4320 = vrot.slane %v4166, 4
      %v4321 = vor.u32 %v4319, %v4320
      %v4322 = vsel %vm764, %v4318, %v4321
      %v4324 = vshrl.u32 %v4169, 16
      %v4326 = vrot.slane %v4324, 3
      %v4327 = vshll.u32 %v4169, 16
      %v4329 = vrot.slane %v4327, 4
      %v4330 = vor.u32 %v4326, %v4329
      %v4332 = vshrl.u32 %v4172, 16
      %v4334 = vrot.slane %v4332, 3
      %v4335 = vshll.u32 %v4172, 16
      %v4337 = vrot.slane %v4335, 4
      %v4338 = vor.u32 %v4334, %v4337
      %v4339 = vsel %vm764, %v4330, %v4338
      %v4341 = vshrl.u32 %v4192, 16
      %v4343 = vrot.slane %v4341, 3
      %v4344 = vshll.u32 %v4192, 16
      %v4346 = vrot.slane %v4344, 4
      %v4347 = vor.u32 %v4343, %v4346
      %v4349 = vshrl.u32 %v4191, 16
      %v4351 = vrot.slane %v4349, 3
      %v4352 = vshll.u32 %v4191, 16
      %v4354 = vrot.slane %v4352, 4
      %v4355 = vor.u32 %v4351, %v4354
      %v4356 = vsel %vm764, %v4347, %v4355
      %v4369 = vld [vmem:[%s8] sm:$0xf]
      %v4370 = vld [vmem:[%s8 + $0x4] sm:$0xf]
      %v4371 = vld [vmem:[%s8 + $0x8] sm:$0xf]
      %v4372 = vld [vmem:[%s8 + $0xc] sm:$0xf]
      %v4373 = vld [vmem:[%s8 + $0x10] sm:$0xf]
      %v4374 = vld [vmem:[%s8 + $0x14] sm:$0xf]
      %v4375 = vld [vmem:[%s8 + $0x18] sm:$0xf]
      %v4376 = vld [vmem:[%s8 + $0x1c] sm:$0xf]
      %v4377 = vld [vmem:[%s8 + $0x20] sm:$0xf]
      %v4378 = vld [vmem:[%s8 + $0x24] sm:$0xf]
      %v4379 = vld [vmem:[%s8 + $0x28] sm:$0xf]
      %v4380 = vld [vmem:[%s8 + $0x2c] sm:$0xf]
      %v4381 = vld [vmem:[%s8 + $0x30] sm:$0xf]
      %v4382 = vld [vmem:[%s8 + $0x34] sm:$0xf]
      %v4383 = vld [vmem:[%s8 + $0x38] sm:$0xf]
      %v4384 = vld [vmem:[%s8 + $0x3c] sm:$0xf]
      %v4385 = vld [vmem:[%s8 + $0x40] sm:$0xf]
      %v4386 = vld [vmem:[%s8 + $0x44] sm:$0xf]
      %v4387 = vld [vmem:[%s8 + $0x48] sm:$0xf]
      %v4388 = vld [vmem:[%s8 + $0x4c] sm:$0xf]
      %v4389 = vld [vmem:[%s8 + $0x50] sm:$0xf]
      %v4390 = vld [vmem:[%s8 + $0x54] sm:$0xf]
      %v4391 = vld [vmem:[%s8 + $0x58] sm:$0xf]
      %v4392 = vld [vmem:[%s8 + $0x5c] sm:$0xf]
      %v4393 = vld [vmem:[%s8 + $0x60] sm:$0xf]
      %v4394 = vld [vmem:[%s8 + $0x64] sm:$0xf]
      %v4395 = vld [vmem:[%s8 + $0x68] sm:$0xf]
      %v4396 = vld [vmem:[%s8 + $0x6c] sm:$0xf]
      %v4397 = vld [vmem:[%s8 + $0x70] sm:$0xf]
      %v4398 = vld [vmem:[%s8 + $0x74] sm:$0xf]
      %v4399 = vld [vmem:[%s8 + $0x78] sm:$0xf]
      %v4400 = vld [vmem:[%s8 + $0x7c] sm:$0xf]
      %v4401 = vld [vmem:[%s8 + $0x80] sm:$0xf]
      %v4402 = vld [vmem:[%s8 + $0x84] sm:$0xf]
      %v4403 = vld [vmem:[%s8 + $0x88] sm:$0xf]
      %v4404 = vld [vmem:[%s8 + $0x8c] sm:$0xf]
      %v4405 = vld [vmem:[%s8 + $0x90] sm:$0xf]
      %v4406 = vld [vmem:[%s8 + $0x94] sm:$0xf]
      %v4407 = vld [vmem:[%s8 + $0x98] sm:$0xf]
      %v4408 = vld [vmem:[%s8 + $0x9c] sm:$0xf]
      %v4409 = vld [vmem:[%s8 + $0xa0] sm:$0xf]
      %v4410 = vld [vmem:[%s8 + $0xa4] sm:$0xf]
      %v4411 = vld [vmem:[%s8 + $0xa8] sm:$0xf]
      %v4412 = vld [vmem:[%s8 + $0xac] sm:$0xf]
      %v4413 = vld [vmem:[%s8 + $0xb0] sm:$0xf]
      %v4414 = vld [vmem:[%s8 + $0xb4] sm:$0xf]
      %v4415 = vld [vmem:[%s8 + $0xb8] sm:$0xf]
      %v4416 = vld [vmem:[%s8 + $0xbc] sm:$0xf]
      %v4418 = vshrl.u32 %v4109, 16
      %v4420 = vshll.u32 %v4109, 16
      %v4422 = vrot.slane %v4420, 1
      %v4423 = vor.u32 %v4418, %v4422
      %v4425 = vshll.u32 %v4110, 16
      %v4427 = vrot.slane %v4425, 1
      %v4428 = vsel %vm1064, %v4423, %v4427
      %v4429 = vshrl.u32 %v4110, 16
      %v4431 = vor.u32 %v4429, %v4427
      %v4434 = vrot.slane %v4109, 1
      %v4435 = vrot.slane %v4110, 1
      %v4436 = vsel %vm1269, %v4434, %v4435
      %v4437 = vrot.slane %v4418, 3
      %v4438 = vrot.slane %v4420, 4
      %v4439 = vor.u32 %v4437, %v4438
      %v4440 = vrot.slane %v4429, 3
      %v4441 = vrot.slane %v4425, 4
      %v4442 = vor.u32 %v4440, %v4441
      %v4443 = vsel %vm764, %v4439, %v4442
      %v4445 = vshrl.u32 %v4428, 16
      %v4447 = vrot.slane %v4445, 3
      %v4448 = vshll.u32 %v4428, 16
      %v4450 = vrot.slane %v4448, 4
      %v4451 = vor.u32 %v4447, %v4450
      %v4453 = vshrl.u32 %v4431, 16
      %v4455 = vrot.slane %v4453, 3
      %v4456 = vshll.u32 %v4431, 16
      %v4458 = vrot.slane %v4456, 4
      %v4459 = vor.u32 %v4455, %v4458
      %v4460 = vsel %vm764, %v4451, %v4459
      %v4462 = vshrl.u32 %v4436, 16
      %v4464 = vrot.slane %v4462, 3
      %v4465 = vshll.u32 %v4436, 16
      %v4467 = vrot.slane %v4465, 4
      %v4468 = vor.u32 %v4464, %v4467
      %v4470 = vshrl.u32 %v4435, 16
      %v4472 = vrot.slane %v4470, 3
      %v4473 = vshll.u32 %v4435, 16
      %v4475 = vrot.slane %v4473, 4
      %v4476 = vor.u32 %v4472, %v4475
      %v4477 = vsel %vm764, %v4468, %v4476
      %s4481 = scalar_lea.vmem %s8, 192
      %v4482 = vld [vmem:[%s4481] sm:$0xf]
      %v4483 = vld [vmem:[%s4481 + $0x4] sm:$0xf]
      %v4484 = vld [vmem:[%s4481 + $0x8] sm:$0xf]
      %v4485 = vld [vmem:[%s4481 + $0xc] sm:$0xf]
      %v4486 = vld [vmem:[%s4481 + $0x10] sm:$0xf]
      %v4487 = vld [vmem:[%s4481 + $0x14] sm:$0xf]
      %v4488 = vld [vmem:[%s4481 + $0x18] sm:$0xf]
      %v4489 = vld [vmem:[%s4481 + $0x1c] sm:$0xf]
      %v4490 = vld [vmem:[%s4481 + $0x20] sm:$0xf]
      %v4491 = vld [vmem:[%s4481 + $0x24] sm:$0xf]
      %v4492 = vld [vmem:[%s4481 + $0x28] sm:$0xf]
      %v4493 = vld [vmem:[%s4481 + $0x2c] sm:$0xf]
      %v4494 = vld [vmem:[%s4481 + $0x30] sm:$0xf]
      %v4495 = vld [vmem:[%s4481 + $0x34] sm:$0xf]
      %v4496 = vld [vmem:[%s4481 + $0x38] sm:$0xf]
      %v4497 = vld [vmem:[%s4481 + $0x3c] sm:$0xf]
      %v4498 = vld [vmem:[%s4481 + $0x40] sm:$0xf]
      %v4499 = vld [vmem:[%s4481 + $0x44] sm:$0xf]
      %v4500 = vld [vmem:[%s4481 + $0x48] sm:$0xf]
      %v4501 = vld [vmem:[%s4481 + $0x4c] sm:$0xf]
      %v4502 = vld [vmem:[%s4481 + $0x50] sm:$0xf]
      %v4503 = vld [vmem:[%s4481 + $0x54] sm:$0xf]
      %v4504 = vld [vmem:[%s4481 + $0x58] sm:$0xf]
      %v4505 = vld [vmem:[%s4481 + $0x5c] sm:$0xf]
      %v4506 = vld [vmem:[%s4481 + $0x60] sm:$0xf]
      %v4507 = vld [vmem:[%s4481 + $0x64] sm:$0xf]
      %v4508 = vld [vmem:[%s4481 + $0x68] sm:$0xf]
      %v4509 = vld [vmem:[%s4481 + $0x6c] sm:$0xf]
      %v4510 = vld [vmem:[%s4481 + $0x70] sm:$0xf]
      %v4511 = vld [vmem:[%s4481 + $0x74] sm:$0xf]
      %v4512 = vld [vmem:[%s4481 + $0x78] sm:$0xf]
      %v4513 = vld [vmem:[%s4481 + $0x7c] sm:$0xf]
      %v4514 = vld [vmem:[%s4481 + $0x80] sm:$0xf]
      %v4515 = vld [vmem:[%s4481 + $0x84] sm:$0xf]
      %v4516 = vld [vmem:[%s4481 + $0x88] sm:$0xf]
      %v4517 = vld [vmem:[%s4481 + $0x8c] sm:$0xf]
      %v4518 = vld [vmem:[%s4481 + $0x90] sm:$0xf]
      %v4519 = vld [vmem:[%s4481 + $0x94] sm:$0xf]
      %v4520 = vld [vmem:[%s4481 + $0x98] sm:$0xf]
      %v4521 = vld [vmem:[%s4481 + $0x9c] sm:$0xf]
      %v4522 = vld [vmem:[%s4481 + $0xa0] sm:$0xf]
      %v4523 = vld [vmem:[%s4481 + $0xa4] sm:$0xf]
      %v4524 = vld [vmem:[%s4481 + $0xa8] sm:$0xf]
      %v4525 = vld [vmem:[%s4481 + $0xac] sm:$0xf]
      %v4526 = vld [vmem:[%s4481 + $0xb0] sm:$0xf]
      %v4527 = vld [vmem:[%s4481 + $0xb4] sm:$0xf]
      %v4528 = vld [vmem:[%s4481 + $0xb8] sm:$0xf]
      %v4529 = vld [vmem:[%s4481 + $0xbc] sm:$0xf]
      %v4578 = vunpack.c.l.b16 %v4482
      %v4579 = vunpack.c.l.b16 %v4483
      %v4580 = vunpack.c.l.b16 %v4484
      %v4581 = vunpack.c.l.b16 %v4485
      %v4582 = vunpack.c.l.b16 %v4486
      %v4583 = vunpack.c.l.b16 %v4487
      %v4584 = vunpack.c.l.b16 %v4488
      %v4585 = vunpack.c.l.b16 %v4489
      %v4586 = vunpack.c.l.b16 %v4490
      %v4587 = vunpack.c.l.b16 %v4491
      %v4588 = vunpack.c.l.b16 %v4492
      %v4589 = vunpack.c.l.b16 %v4493
      %v4590 = vunpack.c.l.b16 %v4494
      %v4591 = vunpack.c.l.b16 %v4495
      %v4592 = vunpack.c.l.b16 %v4496
      %v4593 = vunpack.c.l.b16 %v4497
      %v4594 = vunpack.c.l.b16 %v4498
      %v4595 = vunpack.c.l.b16 %v4499
      %v4596 = vunpack.c.l.b16 %v4500
      %v4597 = vunpack.c.l.b16 %v4501
      %v4598 = vunpack.c.l.b16 %v4502
      %v4599 = vunpack.c.l.b16 %v4503
      %v4600 = vunpack.c.l.b16 %v4504
      %v4601 = vunpack.c.l.b16 %v4505
      %v4602 = vunpack.c.l.b16 %v4506
      %v4603 = vunpack.c.l.b16 %v4507
      %v4604 = vunpack.c.l.b16 %v4508
      %v4605 = vunpack.c.l.b16 %v4509
      %v4606 = vunpack.c.l.b16 %v4510
      %v4607 = vunpack.c.l.b16 %v4511
      %v4608 = vunpack.c.l.b16 %v4512
      %v4609 = vunpack.c.l.b16 %v4513
      %v4610 = vunpack.c.l.b16 %v4514
      %v4611 = vunpack.c.l.b16 %v4515
      %v4612 = vunpack.c.l.b16 %v4516
      %v4613 = vunpack.c.l.b16 %v4517
      %v4614 = vunpack.c.l.b16 %v4518
      %v4615 = vunpack.c.l.b16 %v4519
      %v4616 = vunpack.c.l.b16 %v4520
      %v4617 = vunpack.c.l.b16 %v4521
      %v4618 = vunpack.c.l.b16 %v4522
      %v4619 = vunpack.c.l.b16 %v4523
      %v4620 = vunpack.c.l.b16 %v4524
      %v4621 = vunpack.c.l.b16 %v4525
      %v4622 = vunpack.c.l.b16 %v4526
      %v4623 = vunpack.c.l.b16 %v4527
      %v4624 = vunpack.c.l.b16 %v4528
      %v4625 = vunpack.c.l.b16 %v4529
      %v4626 = vpack.c.b16 %v4579, %v4578
      %v4627 = vpack.c.b16 %v4581, %v4580
      %v4628 = vpack.c.b16 %v4583, %v4582
      %v4629 = vpack.c.b16 %v4585, %v4584
      %v4630 = vpack.c.b16 %v4587, %v4586
      %v4631 = vpack.c.b16 %v4589, %v4588
      %v4632 = vpack.c.b16 %v4591, %v4590
      %v4633 = vpack.c.b16 %v4593, %v4592
      %v4634 = vpack.c.b16 %v4595, %v4594
      %v4635 = vpack.c.b16 %v4597, %v4596
      %v4636 = vpack.c.b16 %v4599, %v4598
      %v4637 = vpack.c.b16 %v4601, %v4600
      %v4638 = vpack.c.b16 %v4603, %v4602
      %v4639 = vpack.c.b16 %v4605, %v4604
      %v4640 = vpack.c.b16 %v4607, %v4606
      %v4641 = vpack.c.b16 %v4609, %v4608
      %v4642 = vpack.c.b16 %v4611, %v4610
      %v4643 = vpack.c.b16 %v4613, %v4612
      %v4644 = vpack.c.b16 %v4615, %v4614
      %v4645 = vpack.c.b16 %v4617, %v4616
      %v4646 = vpack.c.b16 %v4619, %v4618
      %v4647 = vpack.c.b16 %v4621, %v4620
      %v4648 = vpack.c.b16 %v4623, %v4622
      %v4649 = vpack.c.b16 %v4625, %v4624
      %4674 = vmatprep.subr.bf16.mxu0 0
      %4675 = vmatpush1.bf16.msra.mxu0 %v4626
      %4676 = vmatprep.subr.bf16.mxu0 0
      %4677 = vmatpush1.bf16.msra.mxu0 %v4627
      %4678 = vmatprep.subr.bf16.mxu0 0
      %4679 = vmatpush1.bf16.msra.mxu0 %v4628
      %4680 = vmatprep.subr.bf16.mxu0 0
      %4681 = vmatpush1.bf16.msra.mxu0 %v4629
      %4682 = vmatprep.subr.bf16.mxu0 0
      %4683 = vmatpush1.bf16.msra.mxu0 %v4630
      %4684 = vmatprep.subr.bf16.mxu0 0
      %4685 = vmatpush1.bf16.msra.mxu0 %v4631
      %4686 = vmatprep.subr.bf16.mxu0 0
      %4687 = vmatpush1.bf16.msra.mxu0 %v4632
      %4688 = vmatprep.subr.bf16.mxu0 0
      %4689 = vmatpush1.bf16.msra.mxu0 %v4633
      %4690 = vmatprep.subr.bf16.mxu0 0
      %4691 = vmatpush1.bf16.msra.mxu0 %v4634
      %4692 = vmatprep.subr.bf16.mxu0 0
      %4693 = vmatpush1.bf16.msra.mxu0 %v4635
      %4694 = vmatprep.subr.bf16.mxu0 0
      %4695 = vmatpush1.bf16.msra.mxu0 %v4636
      %4696 = vmatprep.subr.bf16.mxu0 0
      %4697 = vmatpush1.bf16.msra.mxu0 %v4637
      %4698 = vmatprep.subr.bf16.mxu0 0
      %4699 = vmatpush1.bf16.msra.mxu0 %v4638
      %4700 = vmatprep.subr.bf16.mxu0 0
      %4701 = vmatpush1.bf16.msra.mxu0 %v4639
      %4702 = vmatprep.subr.bf16.mxu0 0
      %4703 = vmatpush1.bf16.msra.mxu0 %v4640
      %4704 = vmatprep.subr.bf16.mxu0 0
      %4705 = vmatpush1.bf16.msra.mxu0 %v4641
      %4706 = vmatprep.mubr.bf16.mxu0 %v4257
      %4707 = vmatmul.mubr.bf16.gmra.mrb[0].mxu0 %v4240
      %v4708 = vpop.f32.mrb[0].mxu0
      %v4709 = vadd.f32 0.0, %v4708
      %v4710 = vpop.f32.mrb[0].mxu0
      %v4711 = vpop.f32.mrb[0].mxu0
      %v4712 = vadd.f32 0.0, %v4711
      %v4713 = vpop.f32.mrb[0].mxu0
      %4714 = vmatprep.mubr.bf16.mxu0 %v4298
      %4715 = vmatmul.mubr.bf16.gmra.mrb[0].mxu0 %v4281
      %v4716 = vpop.f32.mrb[0].mxu0
      %v4717 = vadd.f32 0.0, %v4716
      %v4718 = vpop.f32.mrb[0].mxu0
      %v4719 = vpop.f32.mrb[0].mxu0
      %v4720 = vadd.f32 0.0, %v4719
      %v4721 = vpop.f32.mrb[0].mxu0
      %4722 = vmatprep.mubr.bf16.mxu0 %v4339
      %4723 = vmatmul.mubr.bf16.gmra.mrb[0].mxu0 %v4322
      %v4724 = vpop.f32.mrb[0].mxu0
      %v4725 = vadd.f32 0.0, %v4724
      %v4726 = vpop.f32.mrb[0].mxu0
      %v4727 = vpop.f32.mrb[0].mxu0
      %v4728 = vadd.f32 0.0, %v4727
      %v4729 = vpop.f32.mrb[0].mxu0
      %4730 = vmatprep.mubr.bf16.mxu0 %v4460
      %4731 = vmatmul.mubr.bf16.gmra.mrb[0].mxu0 %v4443
      %v4732 = vpop.f32.mrb[0].mxu0
      %v4733 = vadd.f32 0.0, %v4732
      %v4734 = vpop.f32.mrb[0].mxu0
      %v4735 = vpop.f32.mrb[0].mxu0
      %v4736 = vadd.f32 0.0, %v4735
      %v4737 = vpop.f32.mrb[0].mxu0
      %4738 = vdwg.mxu0
      %4739 = vmatprep.subr.bf16.mxu0 0
      %4740 = vmatpush1.bf16.msra.mxu0 %v4642
      %4741 = vmatprep.subr.bf16.mxu0 0
      %4742 = vmatpush1.bf16.msra.mxu0 %v4643
      %4743 = vmatprep.subr.bf16.mxu0 0
      %4744 = vmatpush1.bf16.msra.mxu0 %v4644
      %4745 = vmatprep.subr.bf16.mxu0 0
      %4746 = vmatpush1.bf16.msra.mxu0 %v4645
      %4747 = vmatprep.subr.bf16.mxu0 0
      %4748 = vmatpush1.bf16.msra.mxu0 %v4646
      %4749 = vmatprep.subr.bf16.mxu0 0
      %4750 = vmatpush1.bf16.msra.mxu0 %v4647
      %4751 = vmatprep.subr.bf16.mxu0 0
      %4752 = vmatpush1.bf16.msra.mxu0 %v4648
      %4753 = vmatprep.subr.bf16.mxu0 0
      %4754 = vmatpush1.bf16.msra.mxu0 %v4649
      %4755 = vmatprep.subr.bf16.mxu0 0
      %4756 = vmatpush1.bf16.msra.mxu0 0
      %4757 = vmatprep.subr.bf16.mxu0 0
      %4758 = vmatpush1.bf16.msra.mxu0 0
      %4759 = vmatprep.subr.bf16.mxu0 0
      %4760 = vmatpush1.bf16.msra.mxu0 0
      %4761 = vmatprep.subr.bf16.mxu0 0
      %4762 = vmatpush1.bf16.msra.mxu0 0
      %4763 = vmatprep.subr.bf16.mxu0 0
      %4764 = vmatpush1.bf16.msra.mxu0 0
      %4765 = vmatprep.subr.bf16.mxu0 0
      %4766 = vmatpush1.bf16.msra.mxu0 0
      %4767 = vmatprep.subr.bf16.mxu0 0
      %4768 = vmatpush1.bf16.msra.mxu0 0
      %4769 = vmatprep.subr.bf16.mxu0 0
      %4770 = vmatpush1.bf16.msra.mxu0 0
      %4771 = vmatprep.mubr.bf16.mxu0 0
      %4772 = vmatmul.mubr.bf16.gmra.mrb[0].mxu0 %v4274
      %v4773 = vpop.f32.mrb[0].mxu0
      %v4774 = vadd.f32 %v4709, %v4773
      %v4775 = vpop.f32.mrb[0].mxu0
      %v4776 = vpop.f32.mrb[0].mxu0
      %v4777 = vadd.f32 %v4712, %v4776
      %v4778 = vpop.f32.mrb[0].mxu0
      %4779 = vmatprep.mubr.bf16.mxu0 0
      %4780 = vmatmul.mubr.bf16.gmra.mrb[0].mxu0 %v4315
      %v4781 = vpop.f32.mrb[0].mxu0
      %v4782 = vadd.f32 %v4717, %v4781
      %v4783 = vpop.f32.mrb[0].mxu0
      %v4784 = vpop.f32.mrb[0].mxu0
      %v4785 = vadd.f32 %v4720, %v4784
      %v4786 = vpop.f32.mrb[0].mxu0
      %4787 = vmatprep.mubr.bf16.mxu0 0
      %4788 = vmatmul.mubr.bf16.gmra.mrb[0].mxu0 %v4356
      %v4789 = vpop.f32.mrb[0].mxu0
      %v4790 = vadd.f32 %v4725, %v4789
      %v4791 = vpop.f32.mrb[0].mxu0
      %v4792 = vpop.f32.mrb[0].mxu0
      %v4793 = vadd.f32 %v4728, %v4792
      %v4794 = vpop.f32.mrb[0].mxu0
      %4795 = vmatprep.mubr.bf16.mxu0 0
      %4796 = vmatmul.mubr.bf16.gmra.mrb[0].mxu0 %v4477
      %v4797 = vpop.f32.mrb[0].mxu0
      %v4798 = vadd.f32 %v4733, %v4797
      %v4799 = vpop.f32.mrb[0].mxu0
      %v4800 = vpop.f32.mrb[0].mxu0
      %v4801 = vadd.f32 %v4736, %v4800
      %v4802 = vpop.f32.mrb[0].mxu0
      %4803 = vdwg.mxu0
      %v4852 = vunpack.c.l.b16 %v4369
      %v4853 = vunpack.c.l.b16 %v4370
      %v4854 = vunpack.c.l.b16 %v4371
      %v4855 = vunpack.c.l.b16 %v4372
      %v4856 = vunpack.c.l.b16 %v4373
      %v4857 = vunpack.c.l.b16 %v4374
      %v4858 = vunpack.c.l.b16 %v4375
      %v4859 = vunpack.c.l.b16 %v4376
      %v4860 = vunpack.c.l.b16 %v4377
      %v4861 = vunpack.c.l.b16 %v4378
      %v4862 = vunpack.c.l.b16 %v4379
      %v4863 = vunpack.c.l.b16 %v4380
      %v4864 = vunpack.c.l.b16 %v4381
      %v4865 = vunpack.c.l.b16 %v4382
      %v4866 = vunpack.c.l.b16 %v4383
      %v4867 = vunpack.c.l.b16 %v4384
      %v4868 = vunpack.c.l.b16 %v4385
      %v4869 = vunpack.c.l.b16 %v4386
      %v4870 = vunpack.c.l.b16 %v4387
      %v4871 = vunpack.c.l.b16 %v4388
      %v4872 = vunpack.c.l.b16 %v4389
      %v4873 = vunpack.c.l.b16 %v4390
      %v4874 = vunpack.c.l.b16 %v4391
      %v4875 = vunpack.c.l.b16 %v4392
      %v4876 = vunpack.c.l.b16 %v4393
      %v4877 = vunpack.c.l.b16 %v4394
      %v4878 = vunpack.c.l.b16 %v4395
      %v4879 = vunpack.c.l.b16 %v4396
      %v4880 = vunpack.c.l.b16 %v4397
      %v4881 = vunpack.c.l.b16 %v4398
      %v4882 = vunpack.c.l.b16 %v4399
      %v4883 = vunpack.c.l.b16 %v4400
      %v4884 = vunpack.c.l.b16 %v4401
      %v4885 = vunpack.c.l.b16 %v4402
      %v4886 = vunpack.c.l.b16 %v4403
      %v4887 = vunpack.c.l.b16 %v4404
      %v4888 = vunpack.c.l.b16 %v4405
      %v4889 = vunpack.c.l.b16 %v4406
      %v4890 = vunpack.c.l.b16 %v4407
      %v4891 = vunpack.c.l.b16 %v4408
      %v4892 = vunpack.c.l.b16 %v4409
      %v4893 = vunpack.c.l.b16 %v4410
      %v4894 = vunpack.c.l.b16 %v4411
      %v4895 = vunpack.c.l.b16 %v4412
      %v4896 = vunpack.c.l.b16 %v4413
      %v4897 = vunpack.c.l.b16 %v4414
      %v4898 = vunpack.c.l.b16 %v4415
      %v4899 = vunpack.c.l.b16 %v4416
      %v4900 = vpack.c.b16 %v4853, %v4852
      %v4901 = vpack.c.b16 %v4855, %v4854
      %v4902 = vpack.c.b16 %v4857, %v4856
      %v4903 = vpack.c.b16 %v4859, %v4858
      %v4904 = vpack.c.b16 %v4861, %v4860
      %v4905 = vpack.c.b16 %v4863, %v4862
      %v4906 = vpack.c.b16 %v4865, %v4864
      %v4907 = vpack.c.b16 %v4867, %v4866
      %v4908 = vpack.c.b16 %v4869, %v4868
      %v4909 = vpack.c.b16 %v4871, %v4870
      %v4910 = vpack.c.b16 %v4873, %v4872
      %v4911 = vpack.c.b16 %v4875, %v4874
      %v4912 = vpack.c.b16 %v4877, %v4876
      %v4913 = vpack.c.b16 %v4879, %v4878
      %v4914 = vpack.c.b16 %v4881, %v4880
      %v4915 = vpack.c.b16 %v4883, %v4882
      %v4916 = vpack.c.b16 %v4885, %v4884
      %v4917 = vpack.c.b16 %v4887, %v4886
      %v4918 = vpack.c.b16 %v4889, %v4888
      %v4919 = vpack.c.b16 %v4891, %v4890
      %v4920 = vpack.c.b16 %v4893, %v4892
      %v4921 = vpack.c.b16 %v4895, %v4894
      %v4922 = vpack.c.b16 %v4897, %v4896
      %v4923 = vpack.c.b16 %v4899, %v4898
      %4948 = vmatprep.subr.bf16.mxu0 0
      %4949 = vmatpush1.bf16.msra.mxu0 %v4900
      %4950 = vmatprep.subr.bf16.mxu0 0
      %4951 = vmatpush1.bf16.msra.mxu0 %v4901
      %4952 = vmatprep.subr.bf16.mxu0 0
      %4953 = vmatpush1.bf16.msra.mxu0 %v4902
      %4954 = vmatprep.subr.bf16.mxu0 0
      %4955 = vmatpush1.bf16.msra.mxu0 %v4903
      %4956 = vmatprep.subr.bf16.mxu0 0
      %4957 = vmatpush1.bf16.msra.mxu0 %v4904
      %4958 = vmatprep.subr.bf16.mxu0 0
      %4959 = vmatpush1.bf16.msra.mxu0 %v4905
      %4960 = vmatprep.subr.bf16.mxu0 0
      %4961 = vmatpush1.bf16.msra.mxu0 %v4906
      %4962 = vmatprep.subr.bf16.mxu0 0
      %4963 = vmatpush1.bf16.msra.mxu0 %v4907
      %4964 = vmatprep.subr.bf16.mxu0 0
      %4965 = vmatpush1.bf16.msra.mxu0 %v4908
      %4966 = vmatprep.subr.bf16.mxu0 0
      %4967 = vmatpush1.bf16.msra.mxu0 %v4909
      %4968 = vmatprep.subr.bf16.mxu0 0
      %4969 = vmatpush1.bf16.msra.mxu0 %v4910
      %4970 = vmatprep.subr.bf16.mxu0 0
      %4971 = vmatpush1.bf16.msra.mxu0 %v4911
      %4972 = vmatprep.subr.bf16.mxu0 0
      %4973 = vmatpush1.bf16.msra.mxu0 %v4912
      %4974 = vmatprep.subr.bf16.mxu0 0
      %4975 = vmatpush1.bf16.msra.mxu0 %v4913
      %4976 = vmatprep.subr.bf16.mxu0 0
      %4977 = vmatpush1.bf16.msra.mxu0 %v4914
      %4978 = vmatprep.subr.bf16.mxu0 0
      %4979 = vmatpush1.bf16.msra.mxu0 %v4915
      %4980 = vmatprep.mubr.bf16.mxu0 %v4216
      %4981 = vmatmul.mubr.bf16.gmra.mrb[0].mxu0 %v4199
      %v4982 = vpop.f32.mrb[0].mxu0
      %v4983 = vadd.f32 %v4774, %v4982
      %v4984 = vpop.f32.mrb[0].mxu0
      %v4985 = vpop.f32.mrb[0].mxu0
      %v4986 = vadd.f32 %v4777, %v4985
      %v4987 = vpop.f32.mrb[0].mxu0
      %4988 = vmatprep.mubr.bf16.mxu0 %v4257
      %4989 = vmatmul.mubr.bf16.gmra.mrb[0].mxu0 %v4240
      %v4990 = vpop.f32.mrb[0].mxu0
      %v4991 = vadd.f32 %v4782, %v4990
      %v4992 = vpop.f32.mrb[0].mxu0
      %v4993 = vpop.f32.mrb[0].mxu0
      %v4994 = vadd.f32 %v4785, %v4993
      %v4995 = vpop.f32.mrb[0].mxu0
      %4996 = vmatprep.mubr.bf16.mxu0 %v4298
      %4997 = vmatmul.mubr.bf16.gmra.mrb[0].mxu0 %v4281
      %v4998 = vpop.f32.mrb[0].mxu0
      %v4999 = vadd.f32 %v4790, %v4998
      %v5000 = vpop.f32.mrb[0].mxu0
      %v5001 = vpop.f32.mrb[0].mxu0
      %v5002 = vadd.f32 %v4793, %v5001
      %v5003 = vpop.f32.mrb[0].mxu0
      %5004 = vmatprep.mubr.bf16.mxu0 %v4339
      %5005 = vmatmul.mubr.bf16.gmra.mrb[0].mxu0 %v4322
      %v5006 = vpop.f32.mrb[0].mxu0
      %v5007 = vadd.f32 %v4798, %v5006
      %v5008 = vpop.f32.mrb[0].mxu0
      %v5009 = vpop.f32.mrb[0].mxu0
      %v5010 = vadd.f32 %v4801, %v5009
      %v5011 = vpop.f32.mrb[0].mxu0
      %5012 = vdwg.mxu0
      %5013 = vmatprep.subr.bf16.mxu0 0
      %5014 = vmatpush1.bf16.msra.mxu0 %v4916
      %5015 = vmatprep.subr.bf16.mxu0 0
      %5016 = vmatpush1.bf16.msra.mxu0 %v4917
      %5017 = vmatprep.subr.bf16.mxu0 0
      %5018 = vmatpush1.bf16.msra.mxu0 %v4918
      %5019 = vmatprep.subr.bf16.mxu0 0
      %5020 = vmatpush1.bf16.msra.mxu0 %v4919
      %5021 = vmatprep.subr.bf16.mxu0 0
      %5022 = vmatpush1.bf16.msra.mxu0 %v4920
      %5023 = vmatprep.subr.bf16.mxu0 0
      %5024 = vmatpush1.bf16.msra.mxu0 %v4921
      %5025 = vmatprep.subr.bf16.mxu0 0
      %5026 = vmatpush1.bf16.msra.mxu0 %v4922
      %5027 = vmatprep.subr.bf16.mxu0 0
      %5028 = vmatpush1.bf16.msra.mxu0 %v4923
      %5029 = vmatprep.subr.bf16.mxu0 0
      %5030 = vmatpush1.bf16.msra.mxu0 0
      %5031 = vmatprep.subr.bf16.mxu0 0
      %5032 = vmatpush1.bf16.msra.mxu0 0
      %5033 = vmatprep.subr.bf16.mxu0 0
      %5034 = vmatpush1.bf16.msra.mxu0 0
      %5035 = vmatprep.subr.bf16.mxu0 0
      %5036 = vmatpush1.bf16.msra.mxu0 0
      %5037 = vmatprep.subr.bf16.mxu0 0
      %5038 = vmatpush1.bf16.msra.mxu0 0
      %5039 = vmatprep.subr.bf16.mxu0 0
      %5040 = vmatpush1.bf16.msra.mxu0 0
      %5041 = vmatprep.subr.bf16.mxu0 0
      %5042 = vmatpush1.bf16.msra.mxu0 0
      %5043 = vmatprep.subr.bf16.mxu0 0
      %5044 = vmatpush1.bf16.msra.mxu0 0
      %5045 = vmatprep.mubr.bf16.mxu0 0
      %5046 = vmatmul.mubr.bf16.gmra.mrb[0].mxu0 %v4233
      %v5047 = vpop.f32.mrb[0].mxu0
      %v5048 = vadd.f32 %v4983, %v5047
      %v5049 = vpop.f32.mrb[0].mxu0
      %v5050 = vpop.f32.mrb[0].mxu0
      %v5051 = vadd.f32 %v4986, %v5050
      %v5052 = vpop.f32.mrb[0].mxu0
      %5053 = vmatprep.mubr.bf16.mxu0 0
      %5054 = vmatmul.mubr.bf16.gmra.mrb[0].mxu0 %v4274
      %v5055 = vpop.f32.mrb[0].mxu0
      %v5056 = vadd.f32 %v4991, %v5055
      %v5057 = vpop.f32.mrb[0].mxu0
      %v5058 = vpop.f32.mrb[0].mxu0
      %v5059 = vadd.f32 %v4994, %v5058
      %v5060 = vpop.f32.mrb[0].mxu0
      %5061 = vmatprep.mubr.bf16.mxu0 0
      %5062 = vmatmul.mubr.bf16.gmra.mrb[0].mxu0 %v4315
      %v5063 = vpop.f32.mrb[0].mxu0
      %v5064 = vadd.f32 %v4999, %v5063
      %v5065 = vpop.f32.mrb[0].mxu0
      %v5066 = vpop.f32.mrb[0].mxu0
      %v5067 = vadd.f32 %v5002, %v5066
      %v5068 = vpop.f32.mrb[0].mxu0
      %5069 = vmatprep.mubr.bf16.mxu0 0
      %5070 = vmatmul.mubr.bf16.gmra.mrb[0].mxu0 %v4356
      %v5071 = vpop.f32.mrb[0].mxu0
      %v5072 = vadd.f32 %v5007, %v5071
      %v5073 = vpop.f32.mrb[0].mxu0
      %v5074 = vpop.f32.mrb[0].mxu0
      %v5075 = vadd.f32 %v5010, %v5074
      %v5076 = vpop.f32.mrb[0].mxu0
      %5077 = vdwg.mxu0
      %v5079 = vshrl.u32 %v4111, 16
      %v5081 = vshll.u32 %v4111, 16
      %v5083 = vrot.slane %v5081, 1
      %v5084 = vor.u32 %v5079, %v5083
      %v5086 = vshll.u32 %v4112, 16
      %v5088 = vrot.slane %v5086, 1
      %v5089 = vsel %vm1064, %v5084, %v5088
      %v5090 = vshrl.u32 %v4112, 16
      %v5092 = vor.u32 %v5090, %v5088
      %v5095 = vrot.slane %v4111, 1
      %v5096 = vrot.slane %v4112, 1
      %v5097 = vsel %vm1269, %v5095, %v5096
      %v5098 = vrot.slane %v5079, 3
      %v5099 = vrot.slane %v5081, 4
      %v5100 = vor.u32 %v5098, %v5099
      %v5101 = vrot.slane %v5090, 3
      %v5102 = vrot.slane %v5086, 4
      %v5103 = vor.u32 %v5101, %v5102
      %v5104 = vsel %vm764, %v5100, %v5103
      %v5106 = vshrl.u32 %v5089, 16
      %v5108 = vrot.slane %v5106, 3
      %v5109 = vshll.u32 %v5089, 16
      %v5111 = vrot.slane %v5109, 4
      %v5112 = vor.u32 %v5108, %v5111
      %v5114 = vshrl.u32 %v5092, 16
      %v5116 = vrot.slane %v5114, 3
      %v5117 = vshll.u32 %v5092, 16
      %v5119 = vrot.slane %v5117, 4
      %v5120 = vor.u32 %v5116, %v5119
      %v5121 = vsel %vm764, %v5112, %v5120
      %v5123 = vshrl.u32 %v5097, 16
      %v5125 = vrot.slane %v5123, 3
      %v5126 = vshll.u32 %v5097, 16
      %v5128 = vrot.slane %v5126, 4
      %v5129 = vor.u32 %v5125, %v5128
      %v5131 = vshrl.u32 %v5096, 16
      %v5133 = vrot.slane %v5131, 3
      %v5134 = vshll.u32 %v5096, 16
      %v5136 = vrot.slane %v5134, 4
      %v5137 = vor.u32 %v5133, %v5136
      %v5138 = vsel %vm764, %v5129, %v5137
      %s5142 = scalar_lea.vmem %s8, 384
      %v5143 = vld [vmem:[%s5142] sm:$0xf]
      %v5144 = vld [vmem:[%s5142 + $0x4] sm:$0xf]
      %v5145 = vld [vmem:[%s5142 + $0x8] sm:$0xf]
      %v5146 = vld [vmem:[%s5142 + $0xc] sm:$0xf]
      %v5147 = vld [vmem:[%s5142 + $0x10] sm:$0xf]
      %v5148 = vld [vmem:[%s5142 + $0x14] sm:$0xf]
      %v5149 = vld [vmem:[%s5142 + $0x18] sm:$0xf]
      %v5150 = vld [vmem:[%s5142 + $0x1c] sm:$0xf]
      %v5151 = vld [vmem:[%s5142 + $0x20] sm:$0xf]
      %v5152 = vld [vmem:[%s5142 + $0x24] sm:$0xf]
      %v5153 = vld [vmem:[%s5142 + $0x28] sm:$0xf]
      %v5154 = vld [vmem:[%s5142 + $0x2c] sm:$0xf]
      %v5155 = vld [vmem:[%s5142 + $0x30] sm:$0xf]
      %v5156 = vld [vmem:[%s5142 + $0x34] sm:$0xf]
      %v5157 = vld [vmem:[%s5142 + $0x38] sm:$0xf]
      %v5158 = vld [vmem:[%s5142 + $0x3c] sm:$0xf]
      %v5159 = vld [vmem:[%s5142 + $0x40] sm:$0xf]
      %v5160 = vld [vmem:[%s5142 + $0x44] sm:$0xf]
      %v5161 = vld [vmem:[%s5142 + $0x48] sm:$0xf]
      %v5162 = vld [vmem:[%s5142 + $0x4c] sm:$0xf]
      %v5163 = vld [vmem:[%s5142 + $0x50] sm:$0xf]
      %v5164 = vld [vmem:[%s5142 + $0x54] sm:$0xf]
      %v5165 = vld [vmem:[%s5142 + $0x58] sm:$0xf]
      %v5166 = vld [vmem:[%s5142 + $0x5c] sm:$0xf]
      %v5167 = vld [vmem:[%s5142 + $0x60] sm:$0xf]
      %v5168 = vld [vmem:[%s5142 + $0x64] sm:$0xf]
      %v5169 = vld [vmem:[%s5142 + $0x68] sm:$0xf]
      %v5170 = vld [vmem:[%s5142 + $0x6c] sm:$0xf]
      %v5171 = vld [vmem:[%s5142 + $0x70] sm:$0xf]
      %v5172 = vld [vmem:[%s5142 + $0x74] sm:$0xf]
      %v5173 = vld [vmem:[%s5142 + $0x78] sm:$0xf]
      %v5174 = vld [vmem:[%s5142 + $0x7c] sm:$0xf]
      %v5175 = vld [vmem:[%s5142 + $0x80] sm:$0xf]
      %v5176 = vld [vmem:[%s5142 + $0x84] sm:$0xf]
      %v5177 = vld [vmem:[%s5142 + $0x88] sm:$0xf]
      %v5178 = vld [vmem:[%s5142 + $0x8c] sm:$0xf]
      %v5179 = vld [vmem:[%s5142 + $0x90] sm:$0xf]
      %v5180 = vld [vmem:[%s5142 + $0x94] sm:$0xf]
      %v5181 = vld [vmem:[%s5142 + $0x98] sm:$0xf]
      %v5182 = vld [vmem:[%s5142 + $0x9c] sm:$0xf]
      %v5183 = vld [vmem:[%s5142 + $0xa0] sm:$0xf]
      %v5184 = vld [vmem:[%s5142 + $0xa4] sm:$0xf]
      %v5185 = vld [vmem:[%s5142 + $0xa8] sm:$0xf]
      %v5186 = vld [vmem:[%s5142 + $0xac] sm:$0xf]
      %v5187 = vld [vmem:[%s5142 + $0xb0] sm:$0xf]
      %v5188 = vld [vmem:[%s5142 + $0xb4] sm:$0xf]
      %v5189 = vld [vmem:[%s5142 + $0xb8] sm:$0xf]
      %v5190 = vld [vmem:[%s5142 + $0xbc] sm:$0xf]
      %v5239 = vunpack.c.l.b16 %v5143
      %v5240 = vunpack.c.l.b16 %v5144
      %v5241 = vunpack.c.l.b16 %v5145
      %v5242 = vunpack.c.l.b16 %v5146
      %v5243 = vunpack.c.l.b16 %v5147
      %v5244 = vunpack.c.l.b16 %v5148
      %v5245 = vunpack.c.l.b16 %v5149
      %v5246 = vunpack.c.l.b16 %v5150
      %v5247 = vunpack.c.l.b16 %v5151
      %v5248 = vunpack.c.l.b16 %v5152
      %v5249 = vunpack.c.l.b16 %v5153
      %v5250 = vunpack.c.l.b16 %v5154
      %v5251 = vunpack.c.l.b16 %v5155
      %v5252 = vunpack.c.l.b16 %v5156
      %v5253 = vunpack.c.l.b16 %v5157
      %v5254 = vunpack.c.l.b16 %v5158
      %v5255 = vunpack.c.l.b16 %v5159
      %v5256 = vunpack.c.l.b16 %v5160
      %v5257 = vunpack.c.l.b16 %v5161
      %v5258 = vunpack.c.l.b16 %v5162
      %v5259 = vunpack.c.l.b16 %v5163
      %v5260 = vunpack.c.l.b16 %v5164
      %v5261 = vunpack.c.l.b16 %v5165
      %v5262 = vunpack.c.l.b16 %v5166
      %v5263 = vunpack.c.l.b16 %v5167
      %v5264 = vunpack.c.l.b16 %v5168
      %v5265 = vunpack.c.l.b16 %v5169
      %v5266 = vunpack.c.l.b16 %v5170
      %v5267 = vunpack.c.l.b16 %v5171
      %v5268 = vunpack.c.l.b16 %v5172
      %v5269 = vunpack.c.l.b16 %v5173
      %v5270 = vunpack.c.l.b16 %v5174
      %v5271 = vunpack.c.l.b16 %v5175
      %v5272 = vunpack.c.l.b16 %v5176
      %v5273 = vunpack.c.l.b16 %v5177
      %v5274 = vunpack.c.l.b16 %v5178
      %v5275 = vunpack.c.l.b16 %v5179
      %v5276 = vunpack.c.l.b16 %v5180
      %v5277 = vunpack.c.l.b16 %v5181
      %v5278 = vunpack.c.l.b16 %v5182
      %v5279 = vunpack.c.l.b16 %v5183
      %v5280 = vunpack.c.l.b16 %v5184
      %v5281 = vunpack.c.l.b16 %v5185
      %v5282 = vunpack.c.l.b16 %v5186
      %v5283 = vunpack.c.l.b16 %v5187
      %v5284 = vunpack.c.l.b16 %v5188
      %v5285 = vunpack.c.l.b16 %v5189
      %v5286 = vunpack.c.l.b16 %v5190
      %v5287 = vpack.c.b16 %v5240, %v5239
      %v5288 = vpack.c.b16 %v5242, %v5241
      %v5289 = vpack.c.b16 %v5244, %v5243
      %v5290 = vpack.c.b16 %v5246, %v5245
      %v5291 = vpack.c.b16 %v5248, %v5247
      %v5292 = vpack.c.b16 %v5250, %v5249
      %v5293 = vpack.c.b16 %v5252, %v5251
      %v5294 = vpack.c.b16 %v5254, %v5253
      %v5295 = vpack.c.b16 %v5256, %v5255
      %v5296 = vpack.c.b16 %v5258, %v5257
      %v5297 = vpack.c.b16 %v5260, %v5259
      %v5298 = vpack.c.b16 %v5262, %v5261
      %v5299 = vpack.c.b16 %v5264, %v5263
      %v5300 = vpack.c.b16 %v5266, %v5265
      %v5301 = vpack.c.b16 %v5268, %v5267
      %v5302 = vpack.c.b16 %v5270, %v5269
      %v5303 = vpack.c.b16 %v5272, %v5271
      %v5304 = vpack.c.b16 %v5274, %v5273
      %v5305 = vpack.c.b16 %v5276, %v5275
      %v5306 = vpack.c.b16 %v5278, %v5277
      %v5307 = vpack.c.b16 %v5280, %v5279
      %v5308 = vpack.c.b16 %v5282, %v5281
      %v5309 = vpack.c.b16 %v5284, %v5283
      %v5310 = vpack.c.b16 %v5286, %v5285
      %5335 = vmatprep.subr.bf16.mxu0 0
      %5336 = vmatpush1.bf16.msra.mxu0 %v5287
      %5337 = vmatprep.subr.bf16.mxu0 0
      %5338 = vmatpush1.bf16.msra.mxu0 %v5288
      %5339 = vmatprep.subr.bf16.mxu0 0
      %5340 = vmatpush1.bf16.msra.mxu0 %v5289
      %5341 = vmatprep.subr.bf16.mxu0 0
      %5342 = vmatpush1.bf16.msra.mxu0 %v5290
      %5343 = vmatprep.subr.bf16.mxu0 0
      %5344 = vmatpush1.bf16.msra.mxu0 %v5291
      %5345 = vmatprep.subr.bf16.mxu0 0
      %5346 = vmatpush1.bf16.msra.mxu0 %v5292
      %5347 = vmatprep.subr.bf16.mxu0 0
      %5348 = vmatpush1.bf16.msra.mxu0 %v5293
      %5349 = vmatprep.subr.bf16.mxu0 0
      %5350 = vmatpush1.bf16.msra.mxu0 %v5294
      %5351 = vmatprep.subr.bf16.mxu0 0
      %5352 = vmatpush1.bf16.msra.mxu0 %v5295
      %5353 = vmatprep.subr.bf16.mxu0 0
      %5354 = vmatpush1.bf16.msra.mxu0 %v5296
      %5355 = vmatprep.subr.bf16.mxu0 0
      %5356 = vmatpush1.bf16.msra.mxu0 %v5297
      %5357 = vmatprep.subr.bf16.mxu0 0
      %5358 = vmatpush1.bf16.msra.mxu0 %v5298
      %5359 = vmatprep.subr.bf16.mxu0 0
      %5360 = vmatpush1.bf16.msra.mxu0 %v5299
      %5361 = vmatprep.subr.bf16.mxu0 0
      %5362 = vmatpush1.bf16.msra.mxu0 %v5300
      %5363 = vmatprep.subr.bf16.mxu0 0
      %5364 = vmatpush1.bf16.msra.mxu0 %v5301
      %5365 = vmatprep.subr.bf16.mxu0 0
      %5366 = vmatpush1.bf16.msra.mxu0 %v5302
      %5367 = vmatprep.mubr.bf16.mxu0 %v4298
      %5368 = vmatmul.mubr.bf16.gmra.mrb[0].mxu0 %v4281
      %v5369 = vpop.f32.mrb[0].mxu0
      %v5370 = vadd.f32 0.0, %v5369
      %v5371 = vpop.f32.mrb[0].mxu0
      %v5372 = vpop.f32.mrb[0].mxu0
      %v5373 = vadd.f32 0.0, %v5372
      %v5374 = vpop.f32.mrb[0].mxu0
      %5375 = vmatprep.mubr.bf16.mxu0 %v4339
      %5376 = vmatmul.mubr.bf16.gmra.mrb[0].mxu0 %v4322
      %v5377 = vpop.f32.mrb[0].mxu0
      %v5378 = vadd.f32 0.0, %v5377
      %v5379 = vpop.f32.mrb[0].mxu0
      %v5380 = vpop.f32.mrb[0].mxu0
      %v5381 = vadd.f32 0.0, %v5380
      %v5382 = vpop.f32.mrb[0].mxu0
      %5383 = vmatprep.mubr.bf16.mxu0 %v4460
      %5384 = vmatmul.mubr.bf16.gmra.mrb[0].mxu0 %v4443
      %v5385 = vpop.f32.mrb[0].mxu0
      %v5386 = vadd.f32 0.0, %v5385
      %v5387 = vpop.f32.mrb[0].mxu0
      %v5388 = vpop.f32.mrb[0].mxu0
      %v5389 = vadd.f32 0.0, %v5388
      %v5390 = vpop.f32.mrb[0].mxu0
      %5391 = vmatprep.mubr.bf16.mxu0 %v5121
      %5392 = vmatmul.mubr.bf16.gmra.mrb[0].mxu0 %v5104
      %v5393 = vpop.f32.mrb[0].mxu0
      %v5394 = vadd.f32 0.0, %v5393
      %v5395 = vpop.f32.mrb[0].mxu0
      %v5396 = vpop.f32.mrb[0].mxu0
      %v5397 = vadd.f32 0.0, %v5396
      %v5398 = vpop.f32.mrb[0].mxu0
      %5399 = vdwg.mxu0
      %5400 = vmatprep.subr.bf16.mxu0 0
      %5401 = vmatpush1.bf16.msra.mxu0 %v5303
      %5402 = vmatprep.subr.bf16.mxu0 0
      %5403 = vmatpush1.bf16.msra.mxu0 %v5304
      %5404 = vmatprep.subr.bf16.mxu0 0
      %5405 = vmatpush1.bf16.msra.mxu0 %v5305
      %5406 = vmatprep.subr.bf16.mxu0 0
      %5407 = vmatpush1.bf16.msra.mxu0 %v5306
      %5408 = vmatprep.subr.bf16.mxu0 0
      %5409 = vmatpush1.bf16.msra.mxu0 %v5307
      %5410 = vmatprep.subr.bf16.mxu0 0
      %5411 = vmatpush1.bf16.msra.mxu0 %v5308
      %5412 = vmatprep.subr.bf16.mxu0 0
      %5413 = vmatpush1.bf16.msra.mxu0 %v5309
      %5414 = vmatprep.subr.bf16.mxu0 0
      %5415 = vmatpush1.bf16.msra.mxu0 %v5310
      %5416 = vmatprep.subr.bf16.mxu0 0
      %5417 = vmatpush1.bf16.msra.mxu0 0
      %5418 = vmatprep.subr.bf16.mxu0 0
      %5419 = vmatpush1.bf16.msra.mxu0 0
      %5420 = vmatprep.subr.bf16.mxu0 0
      %5421 = vmatpush1.bf16.msra.mxu0 0
      %5422 = vmatprep.subr.bf16.mxu0 0
      %5423 = vmatpush1.bf16.msra.mxu0 0
      %5424 = vmatprep.subr.bf16.mxu0 0
      %5425 = vmatpush1.bf16.msra.mxu0 0
      %5426 = vmatprep.subr.bf16.mxu0 0
      %5427 = vmatpush1.bf16.msra.mxu0 0
      %5428 = vmatprep.subr.bf16.mxu0 0
      %5429 = vmatpush1.bf16.msra.mxu0 0
      %5430 = vmatprep.subr.bf16.mxu0 0
      %5431 = vmatpush1.bf16.msra.mxu0 0
      %5432 = vmatprep.mubr.bf16.mxu0 0
      %5433 = vmatmul.mubr.bf16.gmra.mrb[0].mxu0 %v4315
      %v5434 = vpop.f32.mrb[0].mxu0
      %v5435 = vadd.f32 %v5370, %v5434
      %v5436 = vpop.f32.mrb[0].mxu0
      %v5437 = vpop.f32.mrb[0].mxu0
      %v5438 = vadd.f32 %v5373, %v5437
      %v5439 = vpop.f32.mrb[0].mxu0
      %5440 = vmatprep.mubr.bf16.mxu0 0
      %5441 = vmatmul.mubr.bf16.gmra.mrb[0].mxu0 %v4356
      %v5442 = vpop.f32.mrb[0].mxu0
      %v5443 = vadd.f32 %v5378, %v5442
      %v5444 = vpop.f32.mrb[0].mxu0
      %v5445 = vpop.f32.mrb[0].mxu0
      %v5446 = vadd.f32 %v5381, %v5445
      %v5447 = vpop.f32.mrb[0].mxu0
      %5448 = vmatprep.mubr.bf16.mxu0 0
      %5449 = vmatmul.mubr.bf16.gmra.mrb[0].mxu0 %v4477
      %v5450 = vpop.f32.mrb[0].mxu0
      %v5451 = vadd.f32 %v5386, %v5450
      %v5452 = vpop.f32.mrb[0].mxu0
      %v5453 = vpop.f32.mrb[0].mxu0
      %v5454 = vadd.f32 %v5389, %v5453
      %v5455 = vpop.f32.mrb[0].mxu0
      %5456 = vmatprep.mubr.bf16.mxu0 0
      %5457 = vmatmul.mubr.bf16.gmra.mrb[0].mxu0 %v5138
      %v5458 = vpop.f32.mrb[0].mxu0
      %v5459 = vadd.f32 %v5394, %v5458
      %v5460 = vpop.f32.mrb[0].mxu0
      %v5461 = vpop.f32.mrb[0].mxu0
      %v5462 = vadd.f32 %v5397, %v5461
      %v5463 = vpop.f32.mrb[0].mxu0
      %5464 = vdwg.mxu0
      %v5465 = vadd.f32 %v5048, %v5435
      %v5466 = vadd.f32 %v5051, %v5438
      %v5467 = vadd.f32 %v5056, %v5443
      %v5468 = vadd.f32 %v5059, %v5446
      %v5469 = vadd.f32 %v5064, %v5451
      %v5470 = vadd.f32 %v5067, %v5454
      %v5471 = vadd.f32 %v5072, %v5459
      %v5472 = vadd.f32 %v5075, %v5462
      %v5473 = vld [vmem:[%s9] sm:$0x1]
      %v5475 = vlaneseq
      %v5476 = vshrl.u32 %v5475, 7
      %v5477 = vsub.s32 0, %v5476
      %v5478 = vrot.slane %v5473, %v5477
      %v5480 = vadd.f32 %v5465, %v5478
      %v5481 = vadd.f32 %v5466, %v5478
      %v5482 = vadd.f32 %v5467, %v5478
      %v5483 = vadd.f32 %v5468, %v5478
      %v5484 = vadd.f32 %v5469, %v5478
      %v5485 = vadd.f32 %v5470, %v5478
      %v5486 = vadd.f32 %v5471, %v5478
      %v5487 = vadd.f32 %v5472, %v5478
      %v5488 = vmax.f32 %v5480, 0.0
      %v5489 = vmax.f32 %v5481, 0.0
      %v5490 = vmax.f32 %v5482, 0.0
      %v5491 = vmax.f32 %v5483, 0.0
      %v5492 = vmax.f32 %v5484, 0.0
      %v5493 = vmax.f32 %v5485, 0.0
      %v5494 = vmax.f32 %v5486, 0.0
      %v5495 = vmax.f32 %v5487, 0.0
      %v5496 = vpack.c.bf16 %v5489, %v5488
      %v5497 = vpack.c.bf16 %v5491, %v5490
      %v5498 = vpack.c.bf16 %v5493, %v5492
      %v5499 = vpack.c.bf16 %v5495, %v5494
      %v5504 = vunpack.c.l.b16 %v5496
      %v5505 = vunpack.c.h.b16 %v5496
      %v5506 = vunpack.c.l.b16 %v5497
      %v5507 = vunpack.c.h.b16 %v5497
      %v5508 = vunpack.c.l.b16 %v5498
      %v5509 = vunpack.c.h.b16 %v5498
      %v5510 = vunpack.c.l.b16 %v5499
      %v5511 = vunpack.c.h.b16 %v5499
      %v5512 = vpack.c.b16 %v5504, %v5504
      %v5513 = vpack.c.b16 %v5505, %v5505
      %v5514 = vpack.c.b16 %v5506, %v5506
      %v5515 = vpack.c.b16 %v5507, %v5507
      %v5516 = vpack.c.b16 %v5508, %v5508
      %v5517 = vpack.c.b16 %v5509, %v5509
      %v5518 = vpack.c.b16 %v5510, %v5510
      %v5519 = vpack.c.b16 %v5511, %v5511
      %5528 = vst [vmem:[%s709] sm:$0xf] %v5512
      %5529 = vst [vmem:[%s709 + $0x4] sm:$0xf] %v5513
      %5530 = vst [vmem:[%s709 + $0x8] sm:$0xf] %v5514
      %5531 = vst [vmem:[%s709 + $0xc] sm:$0xf] %v5515
      %5532 = vst [vmem:[%s709 + $0x10] sm:$0xf] %v5516
      %5533 = vst [vmem:[%s709 + $0x14] sm:$0xf] %v5517
      %5534 = vst [vmem:[%s709 + $0x18] sm:$0xf] %v5518
      %5535 = vst [vmem:[%s709 + $0x1c] sm:$0xf] %v5519
      %s5536 = smul.u32 4, %s26
      %p5537 = scmp.lt.s32.totalorder %s25, 1
      %s5538 = scalar_select %p5537, %s25, 1
      %p5539 = scmp.lt.s32.totalorder %s5536, 15
      %s5540 = scalar_select %p5539, %s5536, 15
      %s5541 = smul.addr %s5540, 2
      %s5542 = smul.addr %s5538, 32
      %s5543 = sadd.s32 %s5541, %s5542
      %s5544 = smul.addr %s5543, 4
      %s5545 = scalar_lea.vmem %s10, %s5544
      // Predicated region
      $region69: #{up_forward.1} parent=59 // pred_check
        %p5546 = pneg %p337
      $region70: #{up_forward.1} parent=59 // pred_check_branch
        %5548 = sbr.rel (%p5546) target = $region72
      $region71: #{up_forward.1} parent=59 // pred_region
        %s5549 = smul.u32 4, %s26
      $region72: #{up_forward.1} parent=59 // pred_fallthru
        _
    $region60: #{up_forward.1} parent=5 // pred_fallthru
      _
    %p5550 = scmp.le.s32.totalorder 2, %s16
    // Predicated region
    $region73: #{up_forward.1} parent=5 // pred_check
      %p5551 = pneg %p5550
    $region74: #{up_forward.1} parent=5 // pred_check_branch
      %5553 = sbr.rel (%p5551) target = $region76
    $region75: #{up_forward.1} parent=5 // pred_region
      %s5554 = ssub.s32 %s16, 2
      // Predicated region
      $region77: #{up_forward.1} parent=75 // pred_check
        %p5555 = pneg %p343
      $region78: #{up_forward.1} parent=75 // pred_check_branch
        %5557 = sbr.rel (%p5555) target = $region80
      $region79: #{up_forward.1} parent=75 // pred_region
        %s5558 = smul.u32 4, %s28
        %p5559 = scmp.lt.s32.totalorder %s27, 1
        %s5560 = scalar_select %p5559, %s27, 1
        %p5561 = scmp.lt.s32.totalorder %s5558, 15
        %s5562 = scalar_select %p5561, %s5558, 15
        %s5563 = smul.addr %s5562, 2
        %s5564 = smul.addr %s5560, 32
        %s5565 = sadd.s32 %s5563, %s5564
        %s5566 = smul.addr %s5565, 4
        %s5567 = scalar_lea.vmem %s10, %s5566
      $region80: #{up_forward.1} parent=75 // pred_fallthru
        _
    $region76: #{up_forward.1} parent=5 // pred_fallthru
      _
  $region6: #{up_forward.1} parent=0 // loop_footer
    %s20 = sadd.s32 1, %s16
  $region7: #{up_forward.1} parent=0 // loop_footer_branch
    %15 = sbr.rel target = $region3
  $region8: #{up_forward.1} parent=0 // loop_exit
    _

</llo_original>
